<compile_context>
chip_gen: v7x
topology: tpu7x:2x2x1
jax: 0.10.0
libtpu: 0.0.40
codegen_flags: <defaults>
</compile_context>

<pallas_src>
import functools

import jax
import jax.numpy as jnp
from jax import lax
from jax.experimental import pallas as pl
from jax.experimental.pallas import tpu as pltpu


def _swish(x):
    return x * jax.nn.sigmoid(x)


def _round_up(v, m):
    return ((v + m - 1) // m) * m


def ensure_divisible(v, divisor=8, min_value=None):
    # Standard EfficientNet "make divisible by 8" rounding (not defined in the spec).
    if min_value is None:
        min_value = divisor
    new_v = max(min_value, int(v + divisor / 2) // divisor * divisor)
    if new_v < 0.9 * v:
        new_v += divisor
    return int(new_v)


def _vmem_budgets():
    """Per-generation budgets: ~48 MiB limit / 4 MiB tiles when 64 MiB VMEM (v7x),
    ~96 MiB / 10 MiB tiles on 128 MiB parts (v5e/v6e)."""
    try:
        cap = int(pltpu.get_tpu_info().vmem_capacity_bytes)
    except Exception:
        cap = 64 * 1024 * 1024                       # conservative (v7x-safe) fallback
    limit = min(cap * 3 // 4, 96 * 1024 * 1024)
    tile_cap = 4 * 1024 * 1024 if cap <= 64 * 1024 * 1024 else 10 * 1024 * 1024
    return limit, tile_cap


# ---------------------------------------------------------------------------
# Kernel 1: fused KxK expansion conv (stride s) + folded BN + Swish via a single
#           im2col MXU matmul, emitting per-H-tile SE pool partial sums.
# ---------------------------------------------------------------------------
def _fused_expand_kernel(x_ref, w_ref, b_ref, o_ref, pool_ref, cols_ref, *,
                         K, stride, tile_h, W_out, H_out, Cin):
    j = pl.program_id(1)
    E = o_ref.shape[-1]
    rows = tile_h * W_out
    r0 = pl.multiple_of(j * (tile_h * stride), tile_h * stride)

    # im2col gather into a VMEM scratch; column order (dh, dw, cin) matches the
    # (K*K*Cin, E) weight produced by reshaping the HWIO kernel in the wrapper.
    for dh in range(K):
        for dw in range(K):
            if stride == 1:
                tap = x_ref[0, pl.ds(r0 + dh, tile_h), pl.ds(dw, W_out), :]
            else:
                # Strided loads: only the strided output rows/cols are read.
                tap = x_ref[0, pl.ds(r0 + dh, tile_h, stride=stride),
                            pl.ds(dw, W_out, stride=stride), :]
            c0 = (dh * K + dw) * Cin
            cols_ref[:, c0:c0 + Cin] = tap.reshape(rows, Cin)

    # ONE MXU matmul over the full K*K*Cin contraction (instead of K*K tiny dots).
    y = jnp.dot(cols_ref[...], w_ref[...], preferred_element_type=jnp.float32)
    y = _swish(y + b_ref[...])                       # folded-BN bias + Swish
    o_ref[...] = y.reshape(o_ref.shape)

    # SE global-average-pool partial sum for this H tile (finished in the pointwise
    # kernel) so both grid axes stay "parallel".
    if H_out % tile_h == 0:
        part = jnp.sum(y, axis=0, keepdims=True)                         # (1, E)
    else:
        row_id = lax.broadcasted_iota(jnp.int32, (rows, 1), 0) // W_out
        valid = (j * tile_h + row_id) < H_out
        part = jnp.sum(jnp.where(valid, y, 0.0), axis=0, keepdims=True)
    # Store into an (8, E) slab (row 0 = partial sum, rows 1..7 zero) so the pool
    # output block keeps (8, 128)-aligned last dims.
    row0 = lax.broadcasted_iota(jnp.int32, (8, 1), 0) == 0
    pool_ref[...] = jnp.where(row0, part, 0.0).reshape(1, 1, 8, E)


def _pick_tile_h(H_out, W_out, E, Cin, KK, fixed_bytes, limit_bytes, tile_cap_bytes):
    avail = max(limit_bytes - fixed_bytes, 2 * 1024 * 1024)
    best = 1   # NOTE: W is never tiled, so a single row may still exceed the budget.
    for t in range(1, H_out + 1):
        out_tile = t * W_out * E * 4
        cols = t * W_out * KK * Cin * 4
        need = 3 * out_tile + cols       # 2x double-buffered store + live value + im2col
        if out_tile <= tile_cap_bytes and need <= avail:
            best = t
    return best


def fused_expand_conv(x_nhwc, w2d, bias_row, K, stride):
    N, H, W, Cin = x_nhwc.shape
    E_pad = w2d.shape[-1]
    p = (K - 1) // 2
    Hp, Wp = H + 2 * p, W + 2 * p
    H_out = (Hp - K) // stride + 1
    W_out = (Wp - K) // stride + 1

    limit, tile_cap = _vmem_budgets()
    fixed = 2 * Hp * Wp * Cin * 4 + 2 * w2d.size * 4 + (1 << 20)
    tile_h = _pick_tile_h(H_out, W_out, E_pad, Cin, K * K, fixed, limit, tile_cap)
    n_h = pl.cdiv(H_out, tile_h)

    # SAME pad + extra bottom rows so a partial last H tile keeps its reads in-bounds.
    extra = max(0, (n_h * tile_h - 1) * stride + K - Hp)
    x_pad = jnp.pad(x_nhwc, ((0, 0), (p, p + extra), (p, p), (0, 0)))
    Hp2 = Hp + extra

    kern = functools.partial(_fused_expand_kernel, K=K, stride=stride,
                             tile_h=tile_h, W_out=W_out, H_out=H_out, Cin=Cin)
    y, pool = pl.pallas_call(
        kern,
        out_shape=(jax.ShapeDtypeStruct((N, H_out, W_out, E_pad), jnp.float32),
                   jax.ShapeDtypeStruct((N, n_h, 8, E_pad), jnp.float32)),
        grid=(N, n_h),
        in_specs=[
            pl.BlockSpec((1, Hp2, Wp, Cin), lambda n, j: (n, 0, 0, 0)),   # resident per image
            pl.BlockSpec((w2d.shape[0], E_pad), lambda n, j: (0, 0)),
            pl.BlockSpec((1, E_pad), lambda n, j: (0, 0)),
        ],
        out_specs=(
            pl.BlockSpec((1, tile_h, W_out, E_pad), lambda n, j: (n, j, 0, 0)),
            pl.BlockSpec((1, 1, 8, E_pad), lambda n, j: (n, j, 0, 0)),
        ),
        scratch_shapes=[pltpu.VMEM((tile_h * W_out, w2d.shape[0]), jnp.float32)],
        compiler_params=pltpu.CompilerParams(
            dimension_semantics=("parallel", "parallel"),
            vmem_limit_bytes=limit),
    )(x_pad, w2d, bias_row)
    return y, pool, H_out, W_out


# ---------------------------------------------------------------------------
# Kernel 2: row-tiled pointwise 1x1 conv + folded BN with the SE gate (pool finish +
#           two tiny FCs + sigmoid) and the residual add fused in.  grid = (N, row tiles).
# ---------------------------------------------------------------------------
def _pointwise_kernel(*refs, use_gate, use_res, inv_hw):
    it = iter(refs)
    x_ref = next(it)
    if use_gate:
        pool_ref = next(it); w1_ref = next(it); b1_ref = next(it)
        w2_ref = next(it); b2_ref = next(it)
    w_ref = next(it)
    b_ref = next(it)
    res_ref = next(it) if use_res else None
    o_ref = next(it)

    x = x_ref[...]                                        # (TILE_M, E_pad)
    if use_gate:
        # SE gate recomputed per tile (two tiny matmuls) so both grid axes stay
        # "parallel" and no cross-tile scratch dependency exists.
        pooled = jnp.sum(pool_ref[...], axis=(0, 1), keepdims=True)
        pooled = pooled.reshape(1, x.shape[-1]) * inv_hw
        s1 = jnp.dot(pooled, w1_ref[...], preferred_element_type=jnp.float32) + b1_ref[...]
        s1 = _swish(s1)
        s2 = jnp.dot(s1, w2_ref[...], preferred_element_type=jnp.float32) + b2_ref[...]
        x = x * jax.nn.sigmoid(s2)                        # per-channel gate (1, E_pad)
    y = jnp.dot(x, w_ref[...], preferred_element_type=jnp.float32) + b_ref[...]
    if use_res:
        y = y + res_ref[...]
    o_ref[...] = y


def pointwise_bn(y, pool, se_w1, se_b1, se_w2, se_b2, pw_w, pw_b,
                 residual, H_out, W_out, use_gate):
    N = y.shape[0]
    E_pad = y.shape[-1]
    Cout = pw_w.shape[-1]
    HW = H_out * W_out
    x3 = y.reshape(N, HW, E_pad)
    TILE_M = min(1024, HW)
    n_m = pl.cdiv(HW, TILE_M)
    use_res = residual is not None
    limit, _ = _vmem_budgets()

    in_specs = [pl.BlockSpec((None, TILE_M, E_pad), lambda n, m: (n, m, 0))]
    args = [x3]
    if use_gate:
        n_h = pool.shape[1]
        mid = se_w1.shape[-1]
        in_specs += [
            pl.BlockSpec((None, n_h, 8, E_pad), lambda n, m: (n, 0, 0, 0)),
            pl.BlockSpec((E_pad, mid), lambda n, m: (0, 0)),
            pl.BlockSpec((1, mid), lambda n, m: (0, 0)),
            pl.BlockSpec((mid, E_pad), lambda n, m: (0, 0)),
            pl.BlockSpec((1, E_pad), lambda n, m: (0, 0)),
        ]
        args += [pool, se_w1, se_b1, se_w2, se_b2]
    in_specs += [pl.BlockSpec((E_pad, Cout), lambda n, m: (0, 0)),
                 pl.BlockSpec((1, Cout), lambda n, m: (0, 0))]
    args += [pw_w, pw_b]
    if use_res:
        Cin = residual.shape[-1]
        in_specs.append(pl.BlockSpec((None, TILE_M, Cin), lambda n, m: (n, m, 0)))
        args.append(residual.reshape(N, HW, Cin))

    kern = functools.partial(_pointwise_kernel, use_gate=use_gate, use_res=use_res,
                             inv_hw=1.0 / float(HW))
    y3 = pl.pallas_call(
        kern,
        out_shape=jax.ShapeDtypeStruct((N, HW, Cout), jnp.float32),
        grid=(N, n_m),
        in_specs=in_specs,
        out_specs=pl.BlockSpec((None, TILE_M, Cout), lambda n, m: (n, m, 0)),
        compiler_params=pltpu.CompilerParams(
            dimension_semantics=("parallel", "parallel"),
            vmem_limit_bytes=limit),
    )(*args)
    return y3.reshape(N, H_out, W_out, Cout)


# ---------------------------------------------------------------------------
# Full FusedMBConv forward (NCHW in / NCHW out, matching the PyTorch interface)
# ---------------------------------------------------------------------------
def fused_mbconv_forward(x_nchw, params, cfg):
    # TODO(synk): keep NHWC end-to-end in a full model; these boundary transposes only
    #             exist to match the PyTorch NCHW interface.
    x = jnp.transpose(x_nchw, (0, 2, 3, 1))
    K, stride = cfg["kernel_size"], cfg["stride"]
    Cin = x.shape[-1]
    E = params["exp_w"].shape[-1]
    # Pad the expanded channel dim to a lane-dense multiple of 128; padded channels are
    # exact zeros through conv/BN/Swish/SE/pointwise, so results are unchanged.
    E_pad = _round_up(E, 128)
    pe = E_pad - E

    w2d = jnp.pad(params["exp_w"].reshape(K * K * Cin, E), ((0, 0), (0, pe)))
    b_exp = jnp.pad(params["exp_b"], (0, pe)).reshape(1, E_pad)

    y, pool, H_out, W_out = fused_expand_conv(x, w2d, b_exp, K, stride)

    if cfg["use_se"]:
        se_w1 = jnp.pad(params["se_w1"], ((0, pe), (0, 0)))
        se_b1 = params["se_b1"].reshape(1, -1)
        se_w2 = jnp.pad(params["se_w2"], ((0, 0), (0, pe)))
        se_b2 = jnp.pad(params["se_b2"], (0, pe)).reshape(1, E_pad)
    else:
        se_w1 = se_b1 = se_w2 = se_b2 = None

    pw_w = jnp.pad(params["pw_w"], ((0, pe), (0, 0)))
    pw_b = params["pw_b"].reshape(1, -1)

    out = pointwise_bn(y, pool, se_w1, se_b1, se_w2, se_b2, pw_w, pw_b,
                       residual=(x if cfg["use_residual"] else None),
                       H_out=H_out, W_out=W_out, use_gate=cfg["use_se"])
    return jnp.transpose(out, (0, 3, 1, 2))


# ---------------------------------------------------------------------------
# Deterministic parameters (BN running stats folded into conv weights / biases)
# ---------------------------------------------------------------------------
def make_params(key, Cin, Cout, expand_ratio, K, mid, eps):
    E = int(Cin * expand_ratio)
    ks = jax.random.split(key, 8)

    def bn_fold(k, C):
        k1, k2, k3, k4 = jax.random.split(k, 4)
        gamma = 1.0 + 0.1 * jax.random.normal(k1, (C,), jnp.float32)
        beta = 0.1 * jax.random.normal(k2, (C,), jnp.float32)
        mean = 0.1 * jax.random.normal(k3, (C,), jnp.float32)
        var = jax.random.uniform(k4, (C,), jnp.float32, 0.5, 1.5)
        scale = gamma / jnp.sqrt(var + eps)
        bias = beta - mean * scale
        return scale, bias

    params = {}
    w_exp = 0.1 * jax.random.normal(ks[0], (K, K, Cin, E), jnp.float32)   # HWIO
    s, b = bn_fold(ks[1], E)
    params["exp_w"] = w_exp * s
    params["exp_b"] = b
    params["se_w1"] = 0.1 * jax.random.normal(ks[2], (E, mid), jnp.float32)
    params["se_b1"] = 0.1 * jax.random.normal(ks[3], (mid,), jnp.float32)
    params["se_w2"] = 0.1 * jax.random.normal(ks[4], (mid, E), jnp.float32)
    params["se_b2"] = 0.1 * jax.random.normal(ks[5], (E,), jnp.float32)
    w_pw = 0.1 * jax.random.normal(ks[6], (E, Cout), jnp.float32)
    s, b = bn_fold(ks[7], Cout)
    params["pw_w"] = w_pw * s[None, :]
    params["pw_b"] = b
    return params, E


# ---------------------------------------------------------------------------
# Pure-JAX reference (same folded parameters) for the correctness check
# ---------------------------------------------------------------------------
def reference(x_nchw, params, cfg):
    hp = lax.Precision.HIGHEST
    x = jnp.transpose(x_nchw, (0, 2, 3, 1))
    out = x
    K, s = cfg["kernel_size"], cfg["stride"]
    p = (K - 1) // 2
    y = lax.conv_general_dilated(x, params["exp_w"], (s, s), ((p, p), (p, p)),
                                 dimension_numbers=("NHWC", "HWIO", "NHWC"),
                                 precision=hp)
    y = y + params["exp_b"]
    x = y * jax.nn.sigmoid(y)
    if cfg["use_se"]:
        pooled = jnp.mean(x, axis=(1, 2))
        t = jnp.dot(pooled, params["se_w1"], precision=hp) + params["se_b1"]
        t = t * jax.nn.sigmoid(t)
        t = jnp.dot(t, params["se_w2"], precision=hp) + params["se_b2"]
        x = x * jax.nn.sigmoid(t)[:, None, None, :]
    y = jnp.einsum("nhwc,cd->nhwd", x, params["pw_w"], precision=hp) + params["pw_b"]
    if cfg["use_residual"]:
        y = y + out
    return jnp.transpose(y, (0, 3, 1, 2))


if __name__ == "__main__":
    cfg = dict(in_channels=4, out_channels=4, expand_ratio=4, kernel_size=3,
               stride=1, reduction_ratio=4, BN_eps=1e-3)
    cfg["use_residual"] = (cfg["stride"] == 1 and
                           cfg["in_channels"] == cfg["out_channels"])
    cfg["use_se"] = (cfg["reduction_ratio"] is not None and
                     cfg["reduction_ratio"] > 1)
    mid = max(1, ensure_divisible(cfg["in_channels"] // cfg["reduction_ratio"]))

    key = jax.random.PRNGKey(0)
    kx, kp = jax.random.split(key)
    x = jax.random.normal(kx, (2, cfg["in_channels"], 16, 16), jnp.float32)   # NCHW

    params, _ = make_params(kp, cfg["in_channels"], cfg["out_channels"],
                            cfg["expand_ratio"], cfg["kernel_size"], mid,
                            cfg["BN_eps"])

    fwd = jax.jit(functools.partial(fused_mbconv_forward, cfg=cfg))
    y = jax.block_until_ready(fwd(x, params))

    y_ref = reference(x, params, cfg)
    assert y.shape == (2, cfg["out_channels"], 16, 16)
    assert jnp.allclose(y, y_ref, atol=2e-4, rtol=2e-4), "Pallas output mismatch vs reference"

    print("KERNEL_OK")
</pallas_src>

<mosaic_0001>
module attributes {stable_mosaic.version = 11 : i64} {
  func.func @_fused_expand_kernel(%arg0: i32, %arg1: i32, %arg2: memref<1x18x18x4xf32, #tpu.memory_space<vmem>>, %arg3: memref<36x128xf32, #tpu.memory_space<vmem>>, %arg4: memref<1x128xf32, #tpu.memory_space<vmem>>, %arg5: memref<1x16x16x128xf32, #tpu.memory_space<vmem>>, %arg6: memref<1x1x8x128xf32, #tpu.memory_space<vmem>>, %arg7: memref<256x36xf32, #tpu.memory_space<vmem>>) attributes {dimension_semantics = [#tpu.dimension_semantics<parallel>, #tpu.dimension_semantics<parallel>], iteration_bounds = array<i64: 2, 1>, scalar_prefetch = 0 : i64, scratch_operands = 1 : i64, tpu.core_type = #tpu.core_type<tc>, window_params = [{transform_indices = @transform_0, window_bounds = array<i64: 1, 18, 18, 4>}, {pipeline_mode = #tpu.pipeline_mode<synchronous>, transform_indices = @transform_1, window_bounds = array<i64: 36, 128>}, {pipeline_mode = #tpu.pipeline_mode<synchronous>, transform_indices = @transform_2, window_bounds = array<i64: 1, 128>}, {transform_indices = @transform_3, window_bounds = array<i64: 1, 16, 16, 128>}, {transform_indices = @transform_4, window_bounds = array<i64: 1, 1, 8, 128>}]} {
    %c16_i32 = arith.constant 16 : i32
    %0 = arith.muli %arg1, %c16_i32 : i32
    %1 = tpu.assume_multiple %0, 16 : i32
    %c0_i32 = arith.constant 0 : i32
    %2 = arith.addi %1, %c0_i32 : i32
    %c0 = arith.constant 0 : index
    %3 = arith.index_cast %2 : i32 to index
    %c0_0 = arith.constant 0 : index
    %c0_1 = arith.constant 0 : index
    %4 = vector.load %arg2[%c0, %3, %c0_0, %c0_1] : memref<1x18x18x4xf32, #tpu.memory_space<vmem>>, vector<1x16x16x4xf32>
    %5 = vector.shape_cast %4 : vector<1x16x16x4xf32> to vector<16x16x4xf32>
    %6 = vector.shape_cast %5 : vector<16x16x4xf32> to vector<256x4xf32>
    %c0_2 = arith.constant 0 : index
    %c0_3 = arith.constant 0 : index
    %7 = vector.load %arg7[%c0_2, %c0_3] : memref<256x36xf32, #tpu.memory_space<vmem>>, vector<256x4xf32>
    tpu.vector_store %arg7[%c0_2, %c0_3], %6 {strides = array<i32>} : memref<256x36xf32, #tpu.memory_space<vmem>>, vector<256x4xf32>,
    %c0_i32_4 = arith.constant 0 : i32
    %8 = arith.addi %1, %c0_i32_4 : i32
    %c0_5 = arith.constant 0 : index
    %9 = arith.index_cast %8 : i32 to index
    %c1 = arith.constant 1 : index
    %c0_6 = arith.constant 0 : index
    %10 = vector.load %arg2[%c0_5, %9, %c1, %c0_6] : memref<1x18x18x4xf32, #tpu.memory_space<vmem>>, vector<1x16x16x4xf32>
    %11 = vector.shape_cast %10 : vector<1x16x16x4xf32> to vector<16x16x4xf32>
    %12 = vector.shape_cast %11 : vector<16x16x4xf32> to vector<256x4xf32>
    %c0_7 = arith.constant 0 : index
    %c4 = arith.constant 4 : index
    %13 = vector.load %arg7[%c0_7, %c4] : memref<256x36xf32, #tpu.memory_space<vmem>>, vector<256x4xf32>
    tpu.vector_store %arg7[%c0_7, %c4], %12 {strides = array<i32>} : memref<256x36xf32, #tpu.memory_space<vmem>>, vector<256x4xf32>,
    %c0_i32_8 = arith.constant 0 : i32
    %14 = arith.addi %1, %c0_i32_8 : i32
    %c0_9 = arith.constant 0 : index
    %15 = arith.index_cast %14 : i32 to index
    %c2 = arith.constant 2 : index
    %c0_10 = arith.constant 0 : index
    %16 = vector.load %arg2[%c0_9, %15, %c2, %c0_10] : memref<1x18x18x4xf32, #tpu.memory_space<vmem>>, vector<1x16x16x4xf32>
    %17 = vector.shape_cast %16 : vector<1x16x16x4xf32> to vector<16x16x4xf32>
    %18 = vector.shape_cast %17 : vector<16x16x4xf32> to vector<256x4xf32>
    %c0_11 = arith.constant 0 : index
    %c8 = arith.constant 8 : index
    %19 = vector.load %arg7[%c0_11, %c8] : memref<256x36xf32, #tpu.memory_space<vmem>>, vector<256x4xf32>
    tpu.vector_store %arg7[%c0_11, %c8], %18 {strides = array<i32>} : memref<256x36xf32, #tpu.memory_space<vmem>>, vector<256x4xf32>,
    %c1_i32 = arith.constant 1 : i32
    %20 = arith.addi %1, %c1_i32 : i32
    %c0_12 = arith.constant 0 : index
    %21 = arith.index_cast %20 : i32 to index
    %c0_13 = arith.constant 0 : index
    %c0_14 = arith.constant 0 : index
    %22 = vector.load %arg2[%c0_12, %21, %c0_13, %c0_14] : memref<1x18x18x4xf32, #tpu.memory_space<vmem>>, vector<1x16x16x4xf32>
    %23 = vector.shape_cast %22 : vector<1x16x16x4xf32> to vector<16x16x4xf32>
    %24 = vector.shape_cast %23 : vector<16x16x4xf32> to vector<256x4xf32>
    %c0_15 = arith.constant 0 : index
    %c12 = arith.constant 12 : index
    %25 = vector.load %arg7[%c0_15, %c12] : memref<256x36xf32, #tpu.memory_space<vmem>>, vector<256x4xf32>
    tpu.vector_store %arg7[%c0_15, %c12], %24 {strides = array<i32>} : memref<256x36xf32, #tpu.memory_space<vmem>>, vector<256x4xf32>,
    %c1_i32_16 = arith.constant 1 : i32
    %26 = arith.addi %1, %c1_i32_16 : i32
    %c0_17 = arith.constant 0 : index
    %27 = arith.index_cast %26 : i32 to index
    %c1_18 = arith.constant 1 : index
    %c0_19 = arith.constant 0 : index
    %28 = vector.load %arg2[%c0_17, %27, %c1_18, %c0_19] : memref<1x18x18x4xf32, #tpu.memory_space<vmem>>, vector<1x16x16x4xf32>
    %29 = vector.shape_cast %28 : vector<1x16x16x4xf32> to vector<16x16x4xf32>
    %30 = vector.shape_cast %29 : vector<16x16x4xf32> to vector<256x4xf32>
    %c0_20 = arith.constant 0 : index
    %c16 = arith.constant 16 : index
    %31 = vector.load %arg7[%c0_20, %c16] : memref<256x36xf32, #tpu.memory_space<vmem>>, vector<256x4xf32>
    tpu.vector_store %arg7[%c0_20, %c16], %30 {strides = array<i32>} : memref<256x36xf32, #tpu.memory_space<vmem>>, vector<256x4xf32>,
    %c1_i32_21 = arith.constant 1 : i32
    %32 = arith.addi %1, %c1_i32_21 : i32
    %c0_22 = arith.constant 0 : index
    %33 = arith.index_cast %32 : i32 to index
    %c2_23 = arith.constant 2 : index
    %c0_24 = arith.constant 0 : index
    %34 = vector.load %arg2[%c0_22, %33, %c2_23, %c0_24] : memref<1x18x18x4xf32, #tpu.memory_space<vmem>>, vector<1x16x16x4xf32>
    %35 = vector.shape_cast %34 : vector<1x16x16x4xf32> to vector<16x16x4xf32>
    %36 = vector.shape_cast %35 : vector<16x16x4xf32> to vector<256x4xf32>
    %c0_25 = arith.constant 0 : index
    %c20 = arith.constant 20 : index
    %37 = vector.load %arg7[%c0_25, %c20] : memref<256x36xf32, #tpu.memory_space<vmem>>, vector<256x4xf32>
    tpu.vector_store %arg7[%c0_25, %c20], %36 {strides = array<i32>} : memref<256x36xf32, #tpu.memory_space<vmem>>, vector<256x4xf32>,
    %c2_i32 = arith.constant 2 : i32
    %38 = arith.addi %1, %c2_i32 : i32
    %c0_26 = arith.constant 0 : index
    %39 = arith.index_cast %38 : i32 to index
    %c0_27 = arith.constant 0 : index
    %c0_28 = arith.constant 0 : index
    %40 = vector.load %arg2[%c0_26, %39, %c0_27, %c0_28] : memref<1x18x18x4xf32, #tpu.memory_space<vmem>>, vector<1x16x16x4xf32>
    %41 = vector.shape_cast %40 : vector<1x16x16x4xf32> to vector<16x16x4xf32>
    %42 = vector.shape_cast %41 : vector<16x16x4xf32> to vector<256x4xf32>
    %c0_29 = arith.constant 0 : index
    %c24 = arith.constant 24 : index
    %43 = vector.load %arg7[%c0_29, %c24] : memref<256x36xf32, #tpu.memory_space<vmem>>, vector<256x4xf32>
    tpu.vector_store %arg7[%c0_29, %c24], %42 {strides = array<i32>} : memref<256x36xf32, #tpu.memory_space<vmem>>, vector<256x4xf32>,
    %c2_i32_30 = arith.constant 2 : i32
    %44 = arith.addi %1, %c2_i32_30 : i32
    %c0_31 = arith.constant 0 : index
    %45 = arith.index_cast %44 : i32 to index
    %c1_32 = arith.constant 1 : index
    %c0_33 = arith.constant 0 : index
    %46 = vector.load %arg2[%c0_31, %45, %c1_32, %c0_33] : memref<1x18x18x4xf32, #tpu.memory_space<vmem>>, vector<1x16x16x4xf32>
    %47 = vector.shape_cast %46 : vector<1x16x16x4xf32> to vector<16x16x4xf32>
    %48 = vector.shape_cast %47 : vector<16x16x4xf32> to vector<256x4xf32>
    %c0_34 = arith.constant 0 : index
    %c28 = arith.constant 28 : index
    %49 = vector.load %arg7[%c0_34, %c28] : memref<256x36xf32, #tpu.memory_space<vmem>>, vector<256x4xf32>
    tpu.vector_store %arg7[%c0_34, %c28], %48 {strides = array<i32>} : memref<256x36xf32, #tpu.memory_space<vmem>>, vector<256x4xf32>,
    %c2_i32_35 = arith.constant 2 : i32
    %50 = arith.addi %1, %c2_i32_35 : i32
    %c0_36 = arith.constant 0 : index
    %51 = arith.index_cast %50 : i32 to index
    %c2_37 = arith.constant 2 : index
    %c0_38 = arith.constant 0 : index
    %52 = vector.load %arg2[%c0_36, %51, %c2_37, %c0_38] : memref<1x18x18x4xf32, #tpu.memory_space<vmem>>, vector<1x16x16x4xf32>
    %53 = vector.shape_cast %52 : vector<1x16x16x4xf32> to vector<16x16x4xf32>
    %54 = vector.shape_cast %53 : vector<16x16x4xf32> to vector<256x4xf32>
    %c0_39 = arith.constant 0 : index
    %c32 = arith.constant 32 : index
    %55 = vector.load %arg7[%c0_39, %c32] : memref<256x36xf32, #tpu.memory_space<vmem>>, vector<256x4xf32>
    tpu.vector_store %arg7[%c0_39, %c32], %54 {strides = array<i32>} : memref<256x36xf32, #tpu.memory_space<vmem>>, vector<256x4xf32>,
    %c0_40 = arith.constant 0 : index
    %c0_41 = arith.constant 0 : index
    %56 = vector.load %arg7[%c0_40, %c0_41] : memref<256x36xf32, #tpu.memory_space<vmem>>, vector<256x36xf32>
    %c0_42 = arith.constant 0 : index
    %c0_43 = arith.constant 0 : index
    %57 = vector.load %arg3[%c0_42, %c0_43] : memref<36x128xf32, #tpu.memory_space<vmem>>, vector<36x128xf32>
    %cst = arith.constant dense<0.000000e+00> : vector<256x128xf32>
    %58 = tpu.matmul %56, %57, %cst {dimension_numbers = #tpu.dot_dimension_numbers<[1], [0], [0], [1], [0, 0, 1, 1], [], []>} : vector<256x36xf32>, vector<36x128xf32>, vector<256x128xf32> -> vector<256x128xf32>
    %c0_44 = arith.constant 0 : index
    %c0_45 = arith.constant 0 : index
    %59 = vector.load %arg4[%c0_44, %c0_45] : memref<1x128xf32, #tpu.memory_space<vmem>>, vector<1x128xf32>
    %60 = vector.broadcast %59 : vector<1x128xf32> to vector<256x128xf32>
    %61 = arith.addf %58, %60 : vector<256x128xf32>
    %62 = arith.negf %61 : vector<256x128xf32>
    %63 = math.exp %62 : vector<256x128xf32>
    %cst_46 = arith.constant 1.000000e+00 : f32
    %64 = vector.broadcast %cst_46 : f32 to vector<256x128xf32>
    %65 = arith.addf %64, %63 : vector<256x128xf32>
    %66 = arith.divf %64, %65 : vector<256x128xf32>
    %67 = arith.mulf %61, %66 : vector<256x128xf32>
    %68 = vector.shape_cast %67 : vector<256x128xf32> to vector<1x16x16x128xf32>
    %c0_47 = arith.constant 0 : index
    %c0_48 = arith.constant 0 : index
    %c0_49 = arith.constant 0 : index
    %c0_50 = arith.constant 0 : index
    %69 = vector.load %arg5[%c0_47, %c0_48, %c0_49, %c0_50] : memref<1x16x16x128xf32, #tpu.memory_space<vmem>>, vector<1x16x16x128xf32>
    tpu.vector_store %arg5[%c0_47, %c0_48, %c0_49, %c0_50], %68 {strides = array<i32>} : memref<1x16x16x128xf32, #tpu.memory_space<vmem>>, vector<1x16x16x128xf32>,
    %cst_51 = arith.constant dense<0.000000e+00> : vector<128xf32>
    %70 = vector.multi_reduction <add>, %67, %cst_51 [0] : vector<256x128xf32> to vector<128xf32>
    %71 = vector.shape_cast %70 : vector<128xf32> to vector<1x128xf32>
    %72 = tpu.iota {dimensions = array<i32: 0>} : vector<8x1xi32>
    %c0_i32_52 = arith.constant 0 : i32
    %73 = vector.broadcast %c0_i32_52 : i32 to vector<8x1xi32>
    %74 = arith.cmpi eq, %72, %73 : vector<8x1xi32>
    %cst_53 = arith.constant 0.000000e+00 : f32
    %75 = vector.shape_cast %74 : vector<8x1xi1> to vector<8x1xi1>
    %76 = vector.broadcast %75 : vector<8x1xi1> to vector<8x128xi1>
    %77 = vector.shape_cast %71 : vector<1x128xf32> to vector<1x128xf32>
    %78 = vector.broadcast %77 : vector<1x128xf32> to vector<8x128xf32>
    %79 = vector.broadcast %cst_53 : f32 to vector<8x128xf32>
    %80 = arith.select %76, %78, %79 : vector<8x128xi1>, vector<8x128xf32>
    %81 = vector.shape_cast %80 : vector<8x128xf32> to vector<1x1x8x128xf32>
    %c0_54 = arith.constant 0 : index
    %c0_55 = arith.constant 0 : index
    %c0_56 = arith.constant 0 : index
    %c0_57 = arith.constant 0 : index
    %82 = vector.load %arg6[%c0_54, %c0_55, %c0_56, %c0_57] : memref<1x1x8x128xf32, #tpu.memory_space<vmem>>, vector<1x1x8x128xf32>
    tpu.vector_store %arg6[%c0_54, %c0_55, %c0_56, %c0_57], %81 {strides = array<i32>} : memref<1x1x8x128xf32, #tpu.memory_space<vmem>>, vector<1x1x8x128xf32>,
    return
  }
  func.func @transform_0(%arg0: i32, %arg1: i32) -> (i32, i32, i32, i32) {
    %c0_i32 = arith.constant 0 : i32
    %c0_i32_0 = arith.constant 0 : i32
    %c0_i32_1 = arith.constant 0 : i32
    %c0_i32_2 = arith.constant 0 : i32
    return %arg0, %c0_i32, %c0_i32_0, %c0_i32_1 : i32, i32, i32, i32
  }
  func.func @transform_1(%arg0: i32, %arg1: i32) -> (i32, i32) {
    %c0_i32 = arith.constant 0 : i32
    %c0_i32_0 = arith.constant 0 : i32
    %c0_i32_1 = arith.constant 0 : i32
    return %c0_i32, %c0_i32_0 : i32, i32
  }
  func.func @transform_2(%arg0: i32, %arg1: i32) -> (i32, i32) {
    %c0_i32 = arith.constant 0 : i32
    %c0_i32_0 = arith.constant 0 : i32
    %c0_i32_1 = arith.constant 0 : i32
    return %c0_i32, %c0_i32_0 : i32, i32
  }
  func.func @transform_3(%arg0: i32, %arg1: i32) -> (i32, i32, i32, i32) {
    %c0_i32 = arith.constant 0 : i32
    %c0_i32_0 = arith.constant 0 : i32
    %c0_i32_1 = arith.constant 0 : i32
    return %arg0, %arg1, %c0_i32, %c0_i32_0 : i32, i32, i32, i32
  }
  func.func @transform_4(%arg0: i32, %arg1: i32) -> (i32, i32, i32, i32) {
    %c0_i32 = arith.constant 0 : i32
    %c0_i32_0 = arith.constant 0 : i32
    %c0_i32_1 = arith.constant 0 : i32
    return %arg0, %arg1, %c0_i32, %c0_i32_0 : i32, i32, i32, i32
  }
}

module attributes {stable_mosaic.version = 11 : i64} {
  func.func @_pointwise_kernel(%arg0: i32, %arg1: i32, %arg2: memref<1x256x128xf32, #tpu.memory_space<vmem>>, %arg3: memref<1x1x8x128xf32, #tpu.memory_space<vmem>>, %arg4: memref<128x8xf32, #tpu.memory_space<vmem>>, %arg5: memref<1x8xf32, #tpu.memory_space<vmem>>, %arg6: memref<8x128xf32, #tpu.memory_space<vmem>>, %arg7: memref<1x128xf32, #tpu.memory_space<vmem>>, %arg8: memref<128x4xf32, #tpu.memory_space<vmem>>, %arg9: memref<1x4xf32, #tpu.memory_space<vmem>>, %arg10: memref<1x256x4xf32, #tpu.memory_space<vmem>>, %arg11: memref<1x256x4xf32, #tpu.memory_space<vmem>>) attributes {dimension_semantics = [#tpu.dimension_semantics<parallel>, #tpu.dimension_semantics<parallel>], iteration_bounds = array<i64: 2, 1>, scalar_prefetch = 0 : i64, scratch_operands = 0 : i64, tpu.core_type = #tpu.core_type<tc>, window_params = [{transform_indices = @transform_0, window_bounds = array<i64: 1, 256, 128>}, {transform_indices = @transform_1, window_bounds = array<i64: 1, 1, 8, 128>}, {pipeline_mode = #tpu.pipeline_mode<synchronous>, transform_indices = @transform_2, window_bounds = array<i64: 128, 8>}, {pipeline_mode = #tpu.pipeline_mode<synchronous>, transform_indices = @transform_3, window_bounds = array<i64: 1, 8>}, {pipeline_mode = #tpu.pipeline_mode<synchronous>, transform_indices = @transform_4, window_bounds = array<i64: 8, 128>}, {pipeline_mode = #tpu.pipeline_mode<synchronous>, transform_indices = @transform_5, window_bounds = array<i64: 1, 128>}, {pipeline_mode = #tpu.pipeline_mode<synchronous>, transform_indices = @transform_6, window_bounds = array<i64: 128, 4>}, {pipeline_mode = #tpu.pipeline_mode<synchronous>, transform_indices = @transform_7, window_bounds = array<i64: 1, 4>}, {transform_indices = @transform_8, window_bounds = array<i64: 1, 256, 4>}, {transform_indices = @transform_9, window_bounds = array<i64: 1, 256, 4>}]} {
    %c0 = arith.constant 0 : index
    %c0_0 = arith.constant 0 : index
    %c0_1 = arith.constant 0 : index
    %0 = vector.load %arg2[%c0, %c0_0, %c0_1] : memref<1x256x128xf32, #tpu.memory_space<vmem>>, vector<1x256x128xf32>
    %1 = vector.shape_cast %0 : vector<1x256x128xf32> to vector<256x128xf32>
    %c0_2 = arith.constant 0 : index
    %c0_3 = arith.constant 0 : index
    %c0_4 = arith.constant 0 : index
    %c0_5 = arith.constant 0 : index
    %2 = vector.load %arg3[%c0_2, %c0_3, %c0_4, %c0_5] : memref<1x1x8x128xf32, #tpu.memory_space<vmem>>, vector<1x1x8x128xf32>
    %3 = vector.shape_cast %2 : vector<1x1x8x128xf32> to vector<1x8x128xf32>
    %cst = arith.constant dense<0.000000e+00> : vector<128xf32>
    %4 = vector.multi_reduction <add>, %3, %cst [0, 1] : vector<1x8x128xf32> to vector<128xf32>
    %5 = vector.shape_cast %4 : vector<128xf32> to vector<1x1x128xf32>
    %6 = vector.shape_cast %5 : vector<1x1x128xf32> to vector<1x128xf32>
    %cst_6 = arith.constant 3.906250e-03 : f32
    %7 = vector.broadcast %cst_6 : f32 to vector<1x128xf32>
    %8 = arith.mulf %6, %7 : vector<1x128xf32>
    %c0_7 = arith.constant 0 : index
    %c0_8 = arith.constant 0 : index
    %9 = vector.load %arg4[%c0_7, %c0_8] : memref<128x8xf32, #tpu.memory_space<vmem>>, vector<128x8xf32>
    %cst_9 = arith.constant dense<0.000000e+00> : vector<1x8xf32>
    %10 = tpu.matmul %8, %9, %cst_9 {dimension_numbers = #tpu.dot_dimension_numbers<[1], [0], [0], [1], [0, 0, 1, 1], [], []>} : vector<1x128xf32>, vector<128x8xf32>, vector<1x8xf32> -> vector<1x8xf32>
    %c0_10 = arith.constant 0 : index
    %c0_11 = arith.constant 0 : index
    %11 = vector.load %arg5[%c0_10, %c0_11] : memref<1x8xf32, #tpu.memory_space<vmem>>, vector<1x8xf32>
    %12 = arith.addf %10, %11 : vector<1x8xf32>
    %13 = arith.negf %12 : vector<1x8xf32>
    %14 = math.exp %13 : vector<1x8xf32>
    %cst_12 = arith.constant 1.000000e+00 : f32
    %15 = vector.broadcast %cst_12 : f32 to vector<1x8xf32>
    %16 = arith.addf %15, %14 : vector<1x8xf32>
    %17 = arith.divf %15, %16 : vector<1x8xf32>
    %18 = arith.mulf %12, %17 : vector<1x8xf32>
    %c0_13 = arith.constant 0 : index
    %c0_14 = arith.constant 0 : index
    %19 = vector.load %arg6[%c0_13, %c0_14] : memref<8x128xf32, #tpu.memory_space<vmem>>, vector<8x128xf32>
    %cst_15 = arith.constant dense<0.000000e+00> : vector<1x128xf32>
    %20 = tpu.matmul %18, %19, %cst_15 {dimension_numbers = #tpu.dot_dimension_numbers<[1], [0], [0], [1], [0, 0, 1, 1], [], []>} : vector<1x8xf32>, vector<8x128xf32>, vector<1x128xf32> -> vector<1x128xf32>
    %c0_16 = arith.constant 0 : index
    %c0_17 = arith.constant 0 : index
    %21 = vector.load %arg7[%c0_16, %c0_17] : memref<1x128xf32, #tpu.memory_space<vmem>>, vector<1x128xf32>
    %22 = arith.addf %20, %21 : vector<1x128xf32>
    %23 = arith.negf %22 : vector<1x128xf32>
    %24 = math.exp %23 : vector<1x128xf32>
    %cst_18 = arith.constant 1.000000e+00 : f32
    %25 = vector.broadcast %cst_18 : f32 to vector<1x128xf32>
    %26 = arith.addf %25, %24 : vector<1x128xf32>
    %27 = arith.divf %25, %26 : vector<1x128xf32>
    %28 = vector.broadcast %27 : vector<1x128xf32> to vector<256x128xf32>
    %29 = arith.mulf %1, %28 : vector<256x128xf32>
    %c0_19 = arith.constant 0 : index
    %c0_20 = arith.constant 0 : index
    %30 = vector.load %arg8[%c0_19, %c0_20] : memref<128x4xf32, #tpu.memory_space<vmem>>, vector<128x4xf32>
    %cst_21 = arith.constant dense<0.000000e+00> : vector<256x4xf32>
    %31 = tpu.matmul %29, %30, %cst_21 {dimension_numbers = #tpu.dot_dimension_numbers<[1], [0], [0], [1], [0, 0, 1, 1], [], []>} : vector<256x128xf32>, vector<128x4xf32>, vector<256x4xf32> -> vector<256x4xf32>
    %c0_22 = arith.constant 0 : index
    %c0_23 = arith.constant 0 : index
    %32 = vector.load %arg9[%c0_22, %c0_23] : memref<1x4xf32, #tpu.memory_space<vmem>>, vector<1x4xf32>
    %33 = vector.broadcast %32 : vector<1x4xf32> to vector<256x4xf32>
    %34 = arith.addf %31, %33 : vector<256x4xf32>
    %c0_24 = arith.constant 0 : index
    %c0_25 = arith.constant 0 : index
    %c0_26 = arith.constant 0 : index
    %35 = vector.load %arg10[%c0_24, %c0_25, %c0_26] : memref<1x256x4xf32, #tpu.memory_space<vmem>>, vector<1x256x4xf32>
    %36 = vector.shape_cast %35 : vector<1x256x4xf32> to vector<256x4xf32>
    %37 = arith.addf %34, %36 : vector<256x4xf32>
    %c0_27 = arith.constant 0 : index
    %c0_28 = arith.constant 0 : index
    %c0_29 = arith.constant 0 : index
    %38 = vector.load %arg11[%c0_27, %c0_28, %c0_29] : memref<1x256x4xf32, #tpu.memory_space<vmem>>, vector<1x256x4xf32>
    %39 = vector.shape_cast %38 : vector<1x256x4xf32> to vector<256x4xf32>
    %40 = vector.shape_cast %37 : vector<256x4xf32> to vector<1x256x4xf32>
    tpu.vector_store %arg11[%c0_27, %c0_28, %c0_29], %40 {strides = array<i32>} : memref<1x256x4xf32, #tpu.memory_space<vmem>>, vector<1x256x4xf32>,
    return
  }
  func.func @transform_0(%arg0: i32, %arg1: i32) -> (i32, i32, i32) {
    %c0_i32 = arith.constant 0 : i32
    %c0_i32_0 = arith.constant 0 : i32
    return %arg0, %arg1, %c0_i32 : i32, i32, i32
  }
  func.func @transform_1(%arg0: i32, %arg1: i32) -> (i32, i32, i32, i32) {
    %c0_i32 = arith.constant 0 : i32
    %c0_i32_0 = arith.constant 0 : i32
    %c0_i32_1 = arith.constant 0 : i32
    %c0_i32_2 = arith.constant 0 : i32
    return %arg0, %c0_i32, %c0_i32_0, %c0_i32_1 : i32, i32, i32, i32
  }
  func.func @transform_2(%arg0: i32, %arg1: i32) -> (i32, i32) {
    %c0_i32 = arith.constant 0 : i32
    %c0_i32_0 = arith.constant 0 : i32
    %c0_i32_1 = arith.constant 0 : i32
    return %c0_i32, %c0_i32_0 : i32, i32
  }
  func.func @transform_3(%arg0: i32, %arg1: i32) -> (i32, i32) {
    %c0_i32 = arith.constant 0 : i32
    %c0_i32_0 = arith.constant 0 : i32
    %c0_i32_1 = arith.constant 0 : i32
    return %c0_i32, %c0_i32_0 : i32, i32
  }
  func.func @transform_4(%arg0: i32, %arg1: i32) -> (i32, i32) {
    %c0_i32 = arith.constant 0 : i32
    %c0_i32_0 = arith.constant 0 : i32
    %c0_i32_1 = arith.constant 0 : i32
    return %c0_i32, %c0_i32_0 : i32, i32
  }
  func.func @transform_5(%arg0: i32, %arg1: i32) -> (i32, i32) {
    %c0_i32 = arith.constant 0 : i32
    %c0_i32_0 = arith.constant 0 : i32
    %c0_i32_1 = arith.constant 0 : i32
    return %c0_i32, %c0_i32_0 : i32, i32
  }
  func.func @transform_6(%arg0: i32, %arg1: i32) -> (i32, i32) {
    %c0_i32 = arith.constant 0 : i32
    %c0_i32_0 = arith.constant 0 : i32
    %c0_i32_1 = arith.constant 0 : i32
    return %c0_i32, %c0_i32_0 : i32, i32
  }
  func.func @transform_7(%arg0: i32, %arg1: i32) -> (i32, i32) {
    %c0_i32 = arith.constant 0 : i32
    %c0_i32_0 = arith.constant 0 : i32
    %c0_i32_1 = arith.constant 0 : i32
    return %c0_i32, %c0_i32_0 : i32, i32
  }
  func.func @transform_8(%arg0: i32, %arg1: i32) -> (i32, i32, i32) {
    %c0_i32 = arith.constant 0 : i32
    %c0_i32_0 = arith.constant 0 : i32
    return %arg0, %arg1, %c0_i32 : i32, i32, i32
  }
  func.func @transform_9(%arg0: i32, %arg1: i32) -> (i32, i32, i32) {
    %c0_i32 = arith.constant 0 : i32
    %c0_i32_0 = arith.constant 0 : i32
    return %arg0, %arg1, %c0_i32 : i32, i32, i32
  }
}

</mosaic_0001>

<llo_original>
// kernel: fused_mbconv_forward.3
$region0: #{fused_mbconv_forward.3}
  #allocation0 [shape = 'u32[]', space=smem, size = 0x4, offset = 0x4, fixed_abs, tag = 'smem constant byte address 0x4 - core index']
  #allocation1 [shape = 'u32[144,128]{1,0:T(1,128)}', space=vmem, size = 0x12000, scoped, tag = 'internal scratch']
  %s0 = inlined_call_operand.vmem [shape: f32[2,256,128], index: 0, kind: input, shape index: {}]
  %s1 = inlined_call_operand.vmem [shape: f32[2,1,8,128], index: 1, kind: input, shape index: {}]
  %s2 = inlined_call_operand.vmem [shape: f32[128,8], index: 2, kind: input, shape index: {}]
  %s3 = inlined_call_operand.vmem [shape: f32[1,8], index: 3, kind: input, shape index: {}]
  %s4 = inlined_call_operand.vmem [shape: f32[8,128], index: 4, kind: input, shape index: {}]
  %s5 = inlined_call_operand.vmem [shape: f32[1,128], index: 5, kind: input, shape index: {}]
  %s6 = inlined_call_operand.vmem [shape: f32[128,4], index: 6, kind: input, shape index: {}]
  %s7 = inlined_call_operand.vmem [shape: f32[1,4], index: 7, kind: input, shape index: {}]
  %s8 = inlined_call_operand.vmem [shape: f32[2,256,4], index: 8, kind: input, shape index: {}]
  %s9 = inlined_call_operand.vmem [shape: f32[2,256,4], index: 9, kind: output, shape index: {}]
  %s10 = sld [smem:[#allocation0]]
  $region69: #{fused_mbconv_forward.3} parent=0
    _
  %s12 = ssub.s32 1, %s10
  %s13 = scalar_select 0, %s12, %s10
  loop: start=0, step=1, limit=4
  $region2: #{fused_mbconv_forward.3} parent=0 // loop_pre_header
    _
  $region3: #{fused_mbconv_forward.3} parent=0 // loop_header
    %s15 = sphi 0, %s19
    %p16 = scmp.ge.s32.totalorder %s15, 4
    %s22 = sphi 0, %s34
    %s23 = sphi 0, %s30
    %s24 = sphi 0, %s22
    %s25 = sphi 0, %s23
    %s26 = sphi 0, %s24
    %s27 = sphi 0, %s25
    %s39 = sphi 0, %s41
    %s42 = sphi 0, %s39
    %s43 = sphi 0, %s42
    %s59 = sphi 0, %s43
    %s65 = sphi 0, %s67
    %s68 = sphi 0, %s65
    %s69 = sphi 0, %s68
    %s85 = sphi 0, %s69
    %s89 = sphi 0, %s89
    %s91 = sphi 0, %s89
    %s92 = sphi 0, %s91
    %s106 = sphi 0, %s92
    %s110 = sphi 0, %s110
    %s112 = sphi 0, %s110
    %s113 = sphi 0, %s112
    %s127 = sphi 0, %s113
    %s131 = sphi 0, %s131
    %s133 = sphi 0, %s131
    %s134 = sphi 0, %s133
    %s148 = sphi 0, %s134
    %s152 = sphi 0, %s152
    %s154 = sphi 0, %s152
    %s155 = sphi 0, %s154
    %s169 = sphi 0, %s155
    %s173 = sphi 0, %s173
    %s175 = sphi 0, %s173
    %s176 = sphi 0, %s175
    %s190 = sphi 0, %s176
    %s194 = sphi 0, %s194
    %s196 = sphi 0, %s194
    %s197 = sphi 0, %s196
    %s211 = sphi 0, %s197
    %s219 = sphi 0, %s221
    %s222 = sphi 0, %s219
    %s223 = sphi 0, %s222
    %s239 = sphi 0, %s223
    %s247 = sphi 0, %s249
    %s250 = sphi 0, %s247
    %s251 = sphi 0, %s250
    %s267 = sphi 0, %s251
  $region4: #{fused_mbconv_forward.3} parent=0 // loop_header_branch
    %18 = sbr.rel (%p16) target = $region8
  $region5: #{fused_mbconv_forward.3} parent=0 // loop_body
    %s20 = ssub.s32 %s15, 1
    %s21 = ssub.s32 %s15, 2
    %s28 = sadd.s32 1, %s23
    %p29 = scmp.ge.s32.totalorder %s28, 1
    %s30 = scalar_select %p29, 0, %s28
    %s31 = sadd.s32 1, %s22
    %s32 = scalar_select %p29, %s31, %s22
    %p33 = scmp.ge.s32.totalorder %s32, 2
    %s34 = scalar_select %p33, 0, %s32
    %s35 = ssub.s32 %s22, %s34
    %s36 = ssub.s32 %s23, %s30
    %s37 = sor.u32 %s35, %s36
    %p38 = scmp.eq.s32.totalorder %s37, 0
    %s40 = sadd.s32 %s39, 1
    %s41 = scalar_select %p38, %s39, %s40
    %p44 = pneg %p38
    %p45 = scmp.eq.s32.totalorder %s15, 1
    %p46 = por %p44, %p45
    %p47 = scmp.ne.s32.totalorder %s39, %s42
    %p48 = scmp.eq.s32.totalorder %s15, 0
    %p49 = por %p47, %p48
    %p50 = scmp.ne.s32.totalorder %s39, %s42
    %p51 = scmp.eq.s32.totalorder %s20, 1
    %p52 = por %p50, %p51
    %p53 = scmp.ne.s32.totalorder %s42, %s43
    %p54 = scmp.eq.s32.totalorder %s20, 0
    %p55 = por %p53, %p54
    %p56 = scmp.ne.s32.totalorder %s42, %s43
    %p57 = scmp.eq.s32.totalorder %s21, 1
    %p58 = por %p56, %p57
    %p60 = scmp.ne.s32.totalorder %s43, %s59
    %p61 = scmp.eq.s32.totalorder %s21, 0
    %p62 = por %p60, %p61
    %s63 = ssub.s32 %s22, %s34
    %p64 = scmp.eq.s32.totalorder %s63, 0
    %s66 = sadd.s32 %s65, 1
    %s67 = scalar_select %p64, %s65, %s66
    %p70 = pneg %p64
    %p71 = scmp.eq.s32.totalorder %s15, 1
    %p72 = por %p70, %p71
    %p73 = scmp.ne.s32.totalorder %s65, %s68
    %p74 = scmp.eq.s32.totalorder %s15, 0
    %p75 = por %p73, %p74
    %p76 = scmp.ne.s32.totalorder %s65, %s68
    %p77 = scmp.eq.s32.totalorder %s20, 1
    %p78 = por %p76, %p77
    %p79 = scmp.ne.s32.totalorder %s68, %s69
    %p80 = scmp.eq.s32.totalorder %s20, 0
    %p81 = por %p79, %p80
    %p82 = scmp.ne.s32.totalorder %s68, %s69
    %p83 = scmp.eq.s32.totalorder %s21, 1
    %p84 = por %p82, %p83
    %p86 = scmp.ne.s32.totalorder %s69, %s85
    %p87 = scmp.eq.s32.totalorder %s21, 0
    %p88 = por %p86, %p87
    %s90 = sadd.s32 %s89, 1
    %p93 = scmp.eq.s32.totalorder %s15, 1
    %p94 = scmp.ne.s32.totalorder %s89, %s91
    %p95 = scmp.eq.s32.totalorder %s15, 0
    %p96 = por %p94, %p95
    %p97 = scmp.ne.s32.totalorder %s89, %s91
    %p98 = scmp.eq.s32.totalorder %s20, 1
    %p99 = por %p97, %p98
    %p100 = scmp.ne.s32.totalorder %s91, %s92
    %p101 = scmp.eq.s32.totalorder %s20, 0
    %p102 = por %p100, %p101
    %p103 = scmp.ne.s32.totalorder %s91, %s92
    %p104 = scmp.eq.s32.totalorder %s21, 1
    %p105 = por %p103, %p104
    %p107 = scmp.ne.s32.totalorder %s92, %s106
    %p108 = scmp.eq.s32.totalorder %s21, 0
    %p109 = por %p107, %p108
    %s111 = sadd.s32 %s110, 1
    %p114 = scmp.eq.s32.totalorder %s15, 1
    %p115 = scmp.ne.s32.totalorder %s110, %s112
    %p116 = scmp.eq.s32.totalorder %s15, 0
    %p117 = por %p115, %p116
    %p118 = scmp.ne.s32.totalorder %s110, %s112
    %p119 = scmp.eq.s32.totalorder %s20, 1
    %p120 = por %p118, %p119
    %p121 = scmp.ne.s32.totalorder %s112, %s113
    %p122 = scmp.eq.s32.totalorder %s20, 0
    %p123 = por %p121, %p122
    %p124 = scmp.ne.s32.totalorder %s112, %s113
    %p125 = scmp.eq.s32.totalorder %s21, 1
    %p126 = por %p124, %p125
    %p128 = scmp.ne.s32.totalorder %s113, %s127
    %p129 = scmp.eq.s32.totalorder %s21, 0
    %p130 = por %p128, %p129
    %s132 = sadd.s32 %s131, 1
    %p135 = scmp.eq.s32.totalorder %s15, 1
    %p136 = scmp.ne.s32.totalorder %s131, %s133
    %p137 = scmp.eq.s32.totalorder %s15, 0
    %p138 = por %p136, %p137
    %p139 = scmp.ne.s32.totalorder %s131, %s133
    %p140 = scmp.eq.s32.totalorder %s20, 1
    %p141 = por %p139, %p140
    %p142 = scmp.ne.s32.totalorder %s133, %s134
    %p143 = scmp.eq.s32.totalorder %s20, 0
    %p144 = por %p142, %p143
    %p145 = scmp.ne.s32.totalorder %s133, %s134
    %p146 = scmp.eq.s32.totalorder %s21, 1
    %p147 = por %p145, %p146
    %p149 = scmp.ne.s32.totalorder %s134, %s148
    %p150 = scmp.eq.s32.totalorder %s21, 0
    %p151 = por %p149, %p150
    %s153 = sadd.s32 %s152, 1
    %p156 = scmp.eq.s32.totalorder %s15, 1
    %p157 = scmp.ne.s32.totalorder %s152, %s154
    %p158 = scmp.eq.s32.totalorder %s15, 0
    %p159 = por %p157, %p158
    %p160 = scmp.ne.s32.totalorder %s152, %s154
    %p161 = scmp.eq.s32.totalorder %s20, 1
    %p162 = por %p160, %p161
    %p163 = scmp.ne.s32.totalorder %s154, %s155
    %p164 = scmp.eq.s32.totalorder %s20, 0
    %p165 = por %p163, %p164
    %p166 = scmp.ne.s32.totalorder %s154, %s155
    %p167 = scmp.eq.s32.totalorder %s21, 1
    %p168 = por %p166, %p167
    %p170 = scmp.ne.s32.totalorder %s155, %s169
    %p171 = scmp.eq.s32.totalorder %s21, 0
    %p172 = por %p170, %p171
    %s174 = sadd.s32 %s173, 1
    %p177 = scmp.eq.s32.totalorder %s15, 1
    %p178 = scmp.ne.s32.totalorder %s173, %s175
    %p179 = scmp.eq.s32.totalorder %s15, 0
    %p180 = por %p178, %p179
    %p181 = scmp.ne.s32.totalorder %s173, %s175
    %p182 = scmp.eq.s32.totalorder %s20, 1
    %p183 = por %p181, %p182
    %p184 = scmp.ne.s32.totalorder %s175, %s176
    %p185 = scmp.eq.s32.totalorder %s20, 0
    %p186 = por %p184, %p185
    %p187 = scmp.ne.s32.totalorder %s175, %s176
    %p188 = scmp.eq.s32.totalorder %s21, 1
    %p189 = por %p187, %p188
    %p191 = scmp.ne.s32.totalorder %s176, %s190
    %p192 = scmp.eq.s32.totalorder %s21, 0
    %p193 = por %p191, %p192
    %s195 = sadd.s32 %s194, 1
    %p198 = scmp.eq.s32.totalorder %s15, 1
    %p199 = scmp.ne.s32.totalorder %s194, %s196
    %p200 = scmp.eq.s32.totalorder %s15, 0
    %p201 = por %p199, %p200
    %p202 = scmp.ne.s32.totalorder %s194, %s196
    %p203 = scmp.eq.s32.totalorder %s20, 1
    %p204 = por %p202, %p203
    %p205 = scmp.ne.s32.totalorder %s196, %s197
    %p206 = scmp.eq.s32.totalorder %s20, 0
    %p207 = por %p205, %p206
    %p208 = scmp.ne.s32.totalorder %s196, %s197
    %p209 = scmp.eq.s32.totalorder %s21, 1
    %p210 = por %p208, %p209
    %p212 = scmp.ne.s32.totalorder %s197, %s211
    %p213 = scmp.eq.s32.totalorder %s21, 0
    %p214 = por %p212, %p213
    %s215 = ssub.s32 %s22, %s34
    %s216 = ssub.s32 %s23, %s30
    %s217 = sor.u32 %s215, %s216
    %p218 = scmp.eq.s32.totalorder %s217, 0
    %s220 = sadd.s32 %s219, 1
    %s221 = scalar_select %p218, %s219, %s220
    %p224 = pneg %p218
    %p225 = scmp.eq.s32.totalorder %s15, 1
    %p226 = por %p224, %p225
    %p227 = scmp.ne.s32.totalorder %s219, %s222
    %p228 = scmp.eq.s32.totalorder %s15, 0
    %p229 = por %p227, %p228
    %p230 = scmp.ne.s32.totalorder %s219, %s222
    %p231 = scmp.eq.s32.totalorder %s20, 1
    %p232 = por %p230, %p231
    %p233 = scmp.ne.s32.totalorder %s222, %s223
    %p234 = scmp.eq.s32.totalorder %s20, 0
    %p235 = por %p233, %p234
    %p236 = scmp.ne.s32.totalorder %s222, %s223
    %p237 = scmp.eq.s32.totalorder %s21, 1
    %p238 = por %p236, %p237
    %p240 = scmp.ne.s32.totalorder %s223, %s239
    %p241 = scmp.eq.s32.totalorder %s21, 0
    %p242 = por %p240, %p241
    %s243 = ssub.s32 %s22, %s34
    %s244 = ssub.s32 %s23, %s30
    %s245 = sor.u32 %s243, %s244
    %p246 = scmp.eq.s32.totalorder %s245, 0
    %s248 = sadd.s32 %s247, 1
    %s249 = scalar_select %p246, %s247, %s248
    %p252 = pneg %p246
    %p253 = scmp.eq.s32.totalorder %s15, 1
    %p254 = por %p252, %p253
    %p255 = scmp.ne.s32.totalorder %s247, %s250
    %p256 = scmp.eq.s32.totalorder %s15, 0
    %p257 = por %p255, %p256
    %p258 = scmp.ne.s32.totalorder %s247, %s250
    %p259 = scmp.eq.s32.totalorder %s20, 1
    %p260 = por %p258, %p259
    %p261 = scmp.ne.s32.totalorder %s250, %s251
    %p262 = scmp.eq.s32.totalorder %s20, 0
    %p263 = por %p261, %p262
    %p264 = scmp.ne.s32.totalorder %s250, %s251
    %p265 = scmp.eq.s32.totalorder %s21, 1
    %p266 = por %p264, %p265
    %p268 = scmp.ne.s32.totalorder %s251, %s267
    %p269 = scmp.eq.s32.totalorder %s21, 0
    %p270 = por %p268, %p269
    %p271 = scmp.le.s32.totalorder 1, %s15
    %p272 = scmp.lt.s32.totalorder %s15, 3
    %p273 = pnand %p271, %p272
    %p274 = pneg %p273
    // Predicated region
    $region9: #{fused_mbconv_forward.3} parent=5 // pred_check
      _
    $region10: #{fused_mbconv_forward.3} parent=5 // pred_check_branch
      %276 = sbr.rel (%p273) target = $region12
    $region11: #{fused_mbconv_forward.3} parent=5 // pred_region
      %s277 = ssub.s32 %s15, 1
      // Predicated region
      $region13: #{fused_mbconv_forward.3} parent=11 // pred_check
        %p278 = pneg %p102
      $region14: #{fused_mbconv_forward.3} parent=11 // pred_check_branch
        %280 = sbr.rel (%p278) target = $region16
      $region15: #{fused_mbconv_forward.3} parent=11 // pred_region
        _
      $region16: #{fused_mbconv_forward.3} parent=11 // pred_fallthru
        _
      // Predicated region
      $region17: #{fused_mbconv_forward.3} parent=11 // pred_check
        %p281 = pneg %p123
      $region18: #{fused_mbconv_forward.3} parent=11 // pred_check_branch
        %283 = sbr.rel (%p281) target = $region20
      $region19: #{fused_mbconv_forward.3} parent=11 // pred_region
        _
      $region20: #{fused_mbconv_forward.3} parent=11 // pred_fallthru
        _
      // Predicated region
      $region21: #{fused_mbconv_forward.3} parent=11 // pred_check
        %p284 = pneg %p144
      $region22: #{fused_mbconv_forward.3} parent=11 // pred_check_branch
        %286 = sbr.rel (%p284) target = $region24
      $region23: #{fused_mbconv_forward.3} parent=11 // pred_region
        _
      $region24: #{fused_mbconv_forward.3} parent=11 // pred_fallthru
        _
      // Predicated region
      $region25: #{fused_mbconv_forward.3} parent=11 // pred_check
        %p287 = pneg %p165
      $region26: #{fused_mbconv_forward.3} parent=11 // pred_check_branch
        %289 = sbr.rel (%p287) target = $region28
      $region27: #{fused_mbconv_forward.3} parent=11 // pred_region
        _
      $region28: #{fused_mbconv_forward.3} parent=11 // pred_fallthru
        _
      // Predicated region
      $region29: #{fused_mbconv_forward.3} parent=11 // pred_check
        %p290 = pneg %p186
      $region30: #{fused_mbconv_forward.3} parent=11 // pred_check_branch
        %292 = sbr.rel (%p290) target = $region32
      $region31: #{fused_mbconv_forward.3} parent=11 // pred_region
        _
      $region32: #{fused_mbconv_forward.3} parent=11 // pred_fallthru
        _
      // Predicated region
      $region33: #{fused_mbconv_forward.3} parent=11 // pred_check
        %p293 = pneg %p207
      $region34: #{fused_mbconv_forward.3} parent=11 // pred_check_branch
        %295 = sbr.rel (%p293) target = $region36
      $region35: #{fused_mbconv_forward.3} parent=11 // pred_region
        _
      $region36: #{fused_mbconv_forward.3} parent=11 // pred_fallthru
        _
    $region12: #{fused_mbconv_forward.3} parent=5 // pred_fallthru
      _
    %p296 = scmp.lt.s32.totalorder %s15, 2
    // Predicated region
    $region37: #{fused_mbconv_forward.3} parent=5 // pred_check
      %p297 = pneg %p296
    $region38: #{fused_mbconv_forward.3} parent=5 // pred_check_branch
      %299 = sbr.rel (%p297) target = $region40
    $region39: #{fused_mbconv_forward.3} parent=5 // pred_region
      // Predicated region
      $region41: #{fused_mbconv_forward.3} parent=39 // pred_check
        %p300 = pneg %p49
      $region42: #{fused_mbconv_forward.3} parent=39 // pred_check_branch
        %302 = sbr.rel (%p300) target = $region44
      $region43: #{fused_mbconv_forward.3} parent=39 // pred_region
        %s303 = smul.u32 32, %s23
        %p304 = scmp.lt.s32.totalorder %s22, 1
        %s305 = scalar_select %p304, %s22, 1
        %p306 = scmp.lt.s32.totalorder %s303, 31
        %s307 = scalar_select %p306, %s303, 31
        %s308 = smul.addr %s305, 32
        %s309 = sadd.s32 %s307, %s308
        %s310 = smul.addr %s309, 8
        %s311 = scalar_lea.vmem %s0, %s310
        %s312 = smul.u32 32, %s23
      $region44: #{fused_mbconv_forward.3} parent=39 // pred_fallthru
        _
      // Predicated region
      $region45: #{fused_mbconv_forward.3} parent=39 // pred_check
        %p313 = pneg %p75
      $region46: #{fused_mbconv_forward.3} parent=39 // pred_check_branch
        %315 = sbr.rel (%p313) target = $region48
      $region47: #{fused_mbconv_forward.3} parent=39 // pred_region
        %p316 = scmp.lt.s32.totalorder %s22, 1
        %s317 = scalar_select %p316, %s22, 1
        %s318 = smul.addr %s317, 8
        %s319 = scalar_lea.vmem %s1, %s318
      $region48: #{fused_mbconv_forward.3} parent=39 // pred_fallthru
        _
      // Predicated region
      $region49: #{fused_mbconv_forward.3} parent=39 // pred_check
        %p320 = pneg %p229
      $region50: #{fused_mbconv_forward.3} parent=39 // pred_check_branch
        %322 = sbr.rel (%p320) target = $region52
      $region51: #{fused_mbconv_forward.3} parent=39 // pred_region
        %s323 = smul.u32 32, %s23
        %p324 = scmp.lt.s32.totalorder %s22, 1
        %s325 = scalar_select %p324, %s22, 1
        %p326 = scmp.lt.s32.totalorder %s323, 31
        %s327 = scalar_select %p326, %s323, 31
        %s328 = smul.addr %s325, 32
        %s329 = sadd.s32 %s327, %s328
        %s330 = smul.addr %s329, 8
        %s331 = scalar_lea.vmem %s8, %s330
        %s332 = smul.u32 32, %s23
      $region52: #{fused_mbconv_forward.3} parent=39 // pred_fallthru
        _
    $region40: #{fused_mbconv_forward.3} parent=5 // pred_fallthru
      _
    %p333 = scmp.le.s32.totalorder 1, %s15
    %p334 = scmp.lt.s32.totalorder %s15, 3
    %p335 = pnand %p333, %p334
    %p336 = pneg %p335
    // Predicated region
    $region53: #{fused_mbconv_forward.3} parent=5 // pred_check
      _
    $region54: #{fused_mbconv_forward.3} parent=5 // pred_check_branch
      %338 = sbr.rel (%p335) target = $region56
    $region55: #{fused_mbconv_forward.3} parent=5 // pred_region
      %s339 = ssub.s32 %s15, 1
      %s340 = smul.u32 32, %s25
      %p341 = scmp.lt.s32.totalorder %s24, 1
      %s342 = scalar_select %p341, %s24, 1
      %p343 = scmp.lt.s32.totalorder %s340, 31
      %s344 = scalar_select %p343, %s340, 31
      %s345 = smul.addr %s342, 32
      %s346 = sadd.s32 %s344, %s345
      %s347 = smul.addr %s346, 8
      %s348 = scalar_lea.vmem %s0, %s347
      %p349 = pneg %p55
      %p350 = pneg %p52
      %p351 = scmp.lt.s32.totalorder %s24, 1
      %s352 = scalar_select %p351, %s24, 1
      %s353 = smul.addr %s352, 8
      %s354 = scalar_lea.vmem %s1, %s353
      %p355 = pneg %p81
      %p356 = pneg %p78
      %p357 = pneg %p102
      %p358 = pneg %p99
      %p359 = pneg %p123
      %p360 = pneg %p120
      %p361 = pneg %p144
      %p362 = pneg %p141
      %p363 = pneg %p165
      %p364 = pneg %p162
      %p365 = pneg %p186
      %p366 = pneg %p183
      %p367 = pneg %p207
      %p368 = pneg %p204
      %s369 = smul.u32 32, %s25
      %p370 = scmp.lt.s32.totalorder %s24, 1
      %s371 = scalar_select %p370, %s24, 1
      %p372 = scmp.lt.s32.totalorder %s369, 31
      %s373 = scalar_select %p372, %s369, 31
      %s374 = smul.addr %s371, 32
      %s375 = sadd.s32 %s373, %s374
      %s376 = smul.addr %s375, 8
      %s377 = scalar_lea.vmem %s8, %s376
      %p378 = pneg %p235
      %p379 = pneg %p232
      %p380 = pneg %p263
      %p381 = pneg %p260
      %s382 = smul.u32 32, %s25
      %p383 = scmp.lt.s32.totalorder %s24, 1
      %s384 = scalar_select %p383, %s24, 1
      %p385 = scmp.lt.s32.totalorder %s382, 31
      %s386 = scalar_select %p385, %s382, 31
      %s387 = smul.addr %s384, 32
      %s388 = sadd.s32 %s386, %s387
      %s389 = smul.addr %s388, 8
      %s390 = scalar_lea.vmem %s9, %s389
      %s391 = smul.u32 32, %s25
      %p392 = scmp.lt.s32.totalorder %s24, 1
      %s393 = scalar_select %p392, %s24, 1
      %p394 = scmp.lt.s32.totalorder %s391, 31
      %s395 = scalar_select %p394, %s391, 31
      %s396 = smul.addr %s393, 32
      %s397 = sadd.s32 %s395, %s396
      %s398 = smul.addr %s397, 8
      %s399 = scalar_lea.vmem %s0, %s398
      %s400 = smul.u32 32, %s25
      %p401 = scmp.lt.s32.totalorder %s24, 1
      %s402 = scalar_select %p401, %s24, 1
      %s403 = smul.addr %s402, 8
      %s404 = scalar_lea.vmem %s1, %s403
      %s405 = smul.u32 32, %s25
      %p406 = scmp.lt.s32.totalorder %s24, 1
      %s407 = scalar_select %p406, %s24, 1
      %p408 = scmp.lt.s32.totalorder %s405, 31
      %s409 = scalar_select %p408, %s405, 31
      %s410 = smul.addr %s407, 32
      %s411 = sadd.s32 %s409, %s410
      %s412 = smul.addr %s411, 8
      %s413 = scalar_lea.vmem %s8, %s412
      %s414 = smul.u32 32, %s25
      %s415 = smul.u32 32, %s25
      %p416 = scmp.lt.s32.totalorder %s24, 1
      %s417 = scalar_select %p416, %s24, 1
      %p418 = scmp.lt.s32.totalorder %s415, 31
      %s419 = scalar_select %p418, %s415, 31
      %s420 = smul.addr %s417, 32
      %s421 = sadd.s32 %s419, %s420
      %s422 = smul.addr %s421, 8
      %s423 = scalar_lea.vmem %s9, %s422
      %s424 = smul.u32 32, %s25
      %v425 = vld [vmem:[%s399] sm:$0xff]
      %v426 = vld [vmem:[%s399 + $0x8] sm:$0xff]
      %v427 = vld [vmem:[%s399 + $0x10] sm:$0xff]
      %v428 = vld [vmem:[%s399 + $0x18] sm:$0xff]
      %v429 = vld [vmem:[%s399 + $0x20] sm:$0xff]
      %v430 = vld [vmem:[%s399 + $0x28] sm:$0xff]
      %v431 = vld [vmem:[%s399 + $0x30] sm:$0xff]
      %v432 = vld [vmem:[%s399 + $0x38] sm:$0xff]
      %v433 = vld [vmem:[%s399 + $0x40] sm:$0xff]
      %v434 = vld [vmem:[%s399 + $0x48] sm:$0xff]
      %v435 = vld [vmem:[%s399 + $0x50] sm:$0xff]
      %v436 = vld [vmem:[%s399 + $0x58] sm:$0xff]
      %v437 = vld [vmem:[%s399 + $0x60] sm:$0xff]
      %v438 = vld [vmem:[%s399 + $0x68] sm:$0xff]
      %v439 = vld [vmem:[%s399 + $0x70] sm:$0xff]
      %v440 = vld [vmem:[%s399 + $0x78] sm:$0xff]
      %v441 = vld [vmem:[%s399 + $0x80] sm:$0xff]
      %v442 = vld [vmem:[%s399 + $0x88] sm:$0xff]
      %v443 = vld [vmem:[%s399 + $0x90] sm:$0xff]
      %v444 = vld [vmem:[%s399 + $0x98] sm:$0xff]
      %v445 = vld [vmem:[%s399 + $0xa0] sm:$0xff]
      %v446 = vld [vmem:[%s399 + $0xa8] sm:$0xff]
      %v447 = vld [vmem:[%s399 + $0xb0] sm:$0xff]
      %v448 = vld [vmem:[%s399 + $0xb8] sm:$0xff]
      %v449 = vld [vmem:[%s399 + $0xc0] sm:$0xff]
      %v450 = vld [vmem:[%s399 + $0xc8] sm:$0xff]
      %v451 = vld [vmem:[%s399 + $0xd0] sm:$0xff]
      %v452 = vld [vmem:[%s399 + $0xd8] sm:$0xff]
      %v453 = vld [vmem:[%s399 + $0xe0] sm:$0xff]
      %v454 = vld [vmem:[%s399 + $0xe8] sm:$0xff]
      %v455 = vld [vmem:[%s399 + $0xf0] sm:$0xff]
      %v456 = vld [vmem:[%s399 + $0xf8] sm:$0xff]
      %v457 = vld [vmem:[%s404] sm:$0xff]
      %v458 = vrot.slane %v457, 4
      %v459 = vadd.f32 %v457, %v458
      %v460 = vrot.slane %v459, 2
      %v461 = vadd.f32 %v459, %v460
      %v462 = vrot.slane %v461, 1
      %v463 = vadd.f32 %v461, %v462
      %v464 = vmul.f32 %v463, 0.00390625
      %v465 = vld [vmem:[%s2] sm:$0xff]
      %v466 = vld [vmem:[%s2 + $0x8] sm:$0xff]
      %v467 = vld [vmem:[%s2 + $0x10] sm:$0xff]
      %v468 = vld [vmem:[%s2 + $0x18] sm:$0xff]
      %v469 = vld [vmem:[%s2 + $0x20] sm:$0xff]
      %v470 = vld [vmem:[%s2 + $0x28] sm:$0xff]
      %v471 = vld [vmem:[%s2 + $0x30] sm:$0xff]
      %v472 = vld [vmem:[%s2 + $0x38] sm:$0xff]
      %v473 = vld [vmem:[%s2 + $0x40] sm:$0xff]
      %v474 = vld [vmem:[%s2 + $0x48] sm:$0xff]
      %v475 = vld [vmem:[%s2 + $0x50] sm:$0xff]
      %v476 = vld [vmem:[%s2 + $0x58] sm:$0xff]
      %v477 = vld [vmem:[%s2 + $0x60] sm:$0xff]
      %v478 = vld [vmem:[%s2 + $0x68] sm:$0xff]
      %v479 = vld [vmem:[%s2 + $0x70] sm:$0xff]
      %v480 = vld [vmem:[%s2 + $0x78] sm:$0xff]
      %v481 = vld [vmem:[%s3] sm:$0x1]
      %482 = vmatprep.subr.mxu0 0.0
      %483 = vmatpush1.msra.mxu0 %v465
      %484 = vmatprep.subr.mxu0 0.0
      %485 = vmatpush1.msra.mxu0 %v466
      %486 = vmatprep.subr.mxu0 0.0
      %487 = vmatpush1.msra.mxu0 %v467
      %488 = vmatprep.subr.mxu0 0.0
      %489 = vmatpush1.msra.mxu0 %v468
      %490 = vmatprep.subr.mxu0 0.0
      %491 = vmatpush1.msra.mxu0 %v469
      %492 = vmatprep.subr.mxu0 0.0
      %493 = vmatpush1.msra.mxu0 %v470
      %494 = vmatprep.subr.mxu0 0.0
      %495 = vmatpush1.msra.mxu0 %v471
      %496 = vmatprep.subr.mxu0 0.0
      %497 = vmatpush1.msra.mxu0 %v472
      %498 = vmatprep.subr.mxu0 0.0
      %499 = vmatpush1.msra.mxu0 %v473
      %500 = vmatprep.subr.mxu0 0.0
      %501 = vmatpush1.msra.mxu0 %v474
      %502 = vmatprep.subr.mxu0 0.0
      %503 = vmatpush1.msra.mxu0 %v475
      %504 = vmatprep.subr.mxu0 0.0
      %505 = vmatpush1.msra.mxu0 %v476
      %506 = vmatprep.subr.mxu0 0.0
      %507 = vmatpush1.msra.mxu0 %v477
      %508 = vmatprep.subr.mxu0 0.0
      %509 = vmatpush1.msra.mxu0 %v478
      %510 = vmatprep.subr.mxu0 0.0
      %511 = vmatpush1.msra.mxu0 %v479
      %512 = vmatprep.subr.mxu0 0.0
      %513 = vmatpush1.msra.mxu0 %v480
      %514 = vmatprep.subr.mxu0 0.0
      %515 = vmatpush1.msra.mxu0 0.0
      %516 = vmatprep.subr.mxu0 0.0
      %517 = vmatpush1.msra.mxu0 0.0
      %518 = vmatprep.subr.mxu0 0.0
      %519 = vmatpush1.msra.mxu0 0.0
      %520 = vmatprep.subr.mxu0 0.0
      %521 = vmatpush1.msra.mxu0 0.0
      %522 = vmatprep.subr.mxu0 0.0
      %523 = vmatpush1.msra.mxu0 0.0
      %524 = vmatprep.subr.mxu0 0.0
      %525 = vmatpush1.msra.mxu0 0.0
      %526 = vmatprep.subr.mxu0 0.0
      %527 = vmatpush1.msra.mxu0 0.0
      %528 = vmatprep.subr.mxu0 0.0
      %529 = vmatpush1.msra.mxu0 0.0
      %530 = vmatprep.subr.mxu0 0.0
      %531 = vmatpush1.msra.mxu0 0.0
      %532 = vmatprep.subr.mxu0 0.0
      %533 = vmatpush1.msra.mxu0 0.0
      %534 = vmatprep.subr.mxu0 0.0
      %535 = vmatpush1.msra.mxu0 0.0
      %536 = vmatprep.subr.mxu0 0.0
      %537 = vmatpush1.msra.mxu0 0.0
      %538 = vmatprep.subr.mxu0 0.0
      %539 = vmatpush1.msra.mxu0 0.0
      %540 = vmatprep.subr.mxu0 0.0
      %541 = vmatpush1.msra.mxu0 0.0
      %542 = vmatprep.subr.mxu0 0.0
      %543 = vmatpush1.msra.mxu0 0.0
      %544 = vmatprep.subr.mxu0 0.0
      %545 = vmatpush1.msra.mxu0 0.0
      %546 = vmatprep.mubr.f32.mxu0 0.0
      %547 = vmatmul.mubr.f32.gmra.mrb[0].mxu0 %v464
      %v548 = vpop.f32.mrb[0].mxu0
      %v549 = vadd.f32 %v481, %v548
      %v550 = vpop.f32.mrb[0].mxu0
      %551 = vdwg.mxu0
      %v552 = vxor.u32 %v549, 2147483648
      %v553 = vmul.f32 %v552, 1.442695
      %v554 = vpow.pop %v553
      %v555 = vadd.f32 %v554, 1.0
      %v556 = vrcp.pop %v555
      %v557 = vmul.f32 1.0, %v556
      %v558 = vmul.f32 %v549, %v557
      %v559 = vld [vmem:[%s4] sm:$0xff]
      %v560 = vld [vmem:[%s5] sm:$0x1]
      %vm561 = vcmask 64512
      %v563 = vsel %vm561, %v558, 0
      %565 = vmatprep.subr.mxu0 0.0
      %566 = vmatpush1.msra.mxu0 %v559
      %567 = vmatprep.subr.mxu0 0.0
      %568 = vmatpush1.msra.mxu0 0.0
      %569 = vmatprep.subr.mxu0 0.0
      %570 = vmatpush1.msra.mxu0 0.0
      %571 = vmatprep.subr.mxu0 0.0
      %572 = vmatpush1.msra.mxu0 0.0
      %573 = vmatprep.subr.mxu0 0.0
      %574 = vmatpush1.msra.mxu0 0.0
      %575 = vmatprep.subr.mxu0 0.0
      %576 = vmatpush1.msra.mxu0 0.0
      %577 = vmatprep.subr.mxu0 0.0
      %578 = vmatpush1.msra.mxu0 0.0
      %579 = vmatprep.subr.mxu0 0.0
      %580 = vmatpush1.msra.mxu0 0.0
      %581 = vmatprep.subr.mxu0 0.0
      %582 = vmatpush1.msra.mxu0 0.0
      %583 = vmatprep.subr.mxu0 0.0
      %584 = vmatpush1.msra.mxu0 0.0
      %585 = vmatprep.subr.mxu0 0.0
      %586 = vmatpush1.msra.mxu0 0.0
      %587 = vmatprep.subr.mxu0 0.0
      %588 = vmatpush1.msra.mxu0 0.0
      %589 = vmatprep.subr.mxu0 0.0
      %590 = vmatpush1.msra.mxu0 0.0
      %591 = vmatprep.subr.mxu0 0.0
      %592 = vmatpush1.msra.mxu0 0.0
      %593 = vmatprep.subr.mxu0 0.0
      %594 = vmatpush1.msra.mxu0 0.0
      %595 = vmatprep.subr.mxu0 0.0
      %596 = vmatpush1.msra.mxu0 0.0
      %597 = vmatprep.subr.mxu0 0.0
      %598 = vmatpush1.msra.mxu0 0.0
      %599 = vmatprep.subr.mxu0 0.0
      %600 = vmatpush1.msra.mxu0 0.0
      %601 = vmatprep.subr.mxu0 0.0
      %602 = vmatpush1.msra.mxu0 0.0
      %603 = vmatprep.subr.mxu0 0.0
      %604 = vmatpush1.msra.mxu0 0.0
      %605 = vmatprep.subr.mxu0 0.0
      %606 = vmatpush1.msra.mxu0 0.0
      %607 = vmatprep.subr.mxu0 0.0
      %608 = vmatpush1.msra.mxu0 0.0
      %609 = vmatprep.subr.mxu0 0.0
      %610 = vmatpush1.msra.mxu0 0.0
      %611 = vmatprep.subr.mxu0 0.0
      %612 = vmatpush1.msra.mxu0 0.0
      %613 = vmatprep.subr.mxu0 0.0
      %614 = vmatpush1.msra.mxu0 0.0
      %615 = vmatprep.subr.mxu0 0.0
      %616 = vmatpush1.msra.mxu0 0.0
      %617 = vmatprep.subr.mxu0 0.0
      %618 = vmatpush1.msra.mxu0 0.0
      %619 = vmatprep.subr.mxu0 0.0
      %620 = vmatpush1.msra.mxu0 0.0
      %621 = vmatprep.subr.mxu0 0.0
      %622 = vmatpush1.msra.mxu0 0.0
      %623 = vmatprep.subr.mxu0 0.0
      %624 = vmatpush1.msra.mxu0 0.0
      %625 = vmatprep.subr.mxu0 0.0
      %626 = vmatpush1.msra.mxu0 0.0
      %627 = vmatprep.subr.mxu0 0.0
      %628 = vmatpush1.msra.mxu0 0.0
      %629 = vmatprep.mubr.f32.mxu0 0.0
      %630 = vmatmul.mubr.f32.gmra.mrb[0].mxu0 %v563
      %v631 = vpop.f32.mrb[0].mxu0
      %v632 = vadd.f32 %v560, %v631
      %v633 = vpop.f32.mrb[0].mxu0
      %634 = vdwg.mxu0
      %v635 = vxor.u32 %v632, 2147483648
      %v636 = vmul.f32 %v635, 1.442695
      %v637 = vpow.pop %v636
      %v638 = vadd.f32 %v637, 1.0
      %v639 = vrcp.pop %v638
      %v640 = vmul.f32 1.0, %v639
      %v641 = vlaneseq
      %v642 = vshrl.u32 %v641, 7
      %v643 = vsub.s32 0, %v642
      %v644 = vrot.slane %v640, %v643
      %v645 = vmul.f32 %v425, %v644
      %v646 = vmul.f32 %v426, %v644
      %v647 = vmul.f32 %v427, %v644
      %v648 = vmul.f32 %v428, %v644
      %v649 = vmul.f32 %v429, %v644
      %v650 = vmul.f32 %v430, %v644
      %v651 = vmul.f32 %v431, %v644
      %v652 = vmul.f32 %v432, %v644
      %v653 = vmul.f32 %v433, %v644
      %v654 = vmul.f32 %v434, %v644
      %v655 = vmul.f32 %v435, %v644
      %v656 = vmul.f32 %v436, %v644
      %v657 = vmul.f32 %v437, %v644
      %v658 = vmul.f32 %v438, %v644
      %v659 = vmul.f32 %v439, %v644
      %v660 = vmul.f32 %v440, %v644
      %v661 = vmul.f32 %v441, %v644
      %v662 = vmul.f32 %v442, %v644
      %v663 = vmul.f32 %v443, %v644
      %v664 = vmul.f32 %v444, %v644
      %v665 = vmul.f32 %v445, %v644
      %v666 = vmul.f32 %v446, %v644
      %v667 = vmul.f32 %v447, %v644
      %v668 = vmul.f32 %v448, %v644
      %v669 = vmul.f32 %v449, %v644
      %v670 = vmul.f32 %v450, %v644
      %v671 = vmul.f32 %v451, %v644
      %v672 = vmul.f32 %v452, %v644
      %v673 = vmul.f32 %v453, %v644
      %v674 = vmul.f32 %v454, %v644
      %v675 = vmul.f32 %v455, %v644
      %v676 = vmul.f32 %v456, %v644
      %v677 = vld [vmem:[%s6] sm:$0xff]
      %v678 = vld [vmem:[%s6 + $0x8] sm:$0xff]
      %v679 = vld [vmem:[%s6 + $0x10] sm:$0xff]
      %v680 = vld [vmem:[%s6 + $0x18] sm:$0xff]
      %v681 = vld [vmem:[%s6 + $0x20] sm:$0xff]
      %v682 = vld [vmem:[%s6 + $0x28] sm:$0xff]
      %v683 = vld [vmem:[%s6 + $0x30] sm:$0xff]
      %v684 = vld [vmem:[%s6 + $0x38] sm:$0xff]
      %v685 = vld [vmem:[%s6 + $0x40] sm:$0xff]
      %v686 = vld [vmem:[%s6 + $0x48] sm:$0xff]
      %v687 = vld [vmem:[%s6 + $0x50] sm:$0xff]
      %v688 = vld [vmem:[%s6 + $0x58] sm:$0xff]
      %v689 = vld [vmem:[%s6 + $0x60] sm:$0xff]
      %v690 = vld [vmem:[%s6 + $0x68] sm:$0xff]
      %v691 = vld [vmem:[%s6 + $0x70] sm:$0xff]
      %v692 = vld [vmem:[%s6 + $0x78] sm:$0xff]
      %v693 = vld [vmem:[%s7] sm:$0x1]
      %v695 = vlaneseq
      %v696 = vshrl.u32 %v695, 7
      %v697 = vsub.s32 0, %v696
      %v698 = vrot.slane %v693, %v697
      %700 = vmatprep.subr.mxu0 0.0
      %701 = vmatpush1.msra.mxu0 %v677
      %702 = vmatprep.subr.mxu0 0.0
      %703 = vmatpush1.msra.mxu0 %v678
      %704 = vmatprep.subr.mxu0 0.0
      %705 = vmatpush1.msra.mxu0 %v679
      %706 = vmatprep.subr.mxu0 0.0
      %707 = vmatpush1.msra.mxu0 %v680
      %708 = vmatprep.subr.mxu0 0.0
      %709 = vmatpush1.msra.mxu0 %v681
      %710 = vmatprep.subr.mxu0 0.0
      %711 = vmatpush1.msra.mxu0 %v682
      %712 = vmatprep.subr.mxu0 0.0
      %713 = vmatpush1.msra.mxu0 %v683
      %714 = vmatprep.subr.mxu0 0.0
      %715 = vmatpush1.msra.mxu0 %v684
      %716 = vmatprep.subr.mxu0 0.0
      %717 = vmatpush1.msra.mxu0 %v685
      %718 = vmatprep.subr.mxu0 0.0
      %719 = vmatpush1.msra.mxu0 %v686
      %720 = vmatprep.subr.mxu0 0.0
      %721 = vmatpush1.msra.mxu0 %v687
      %722 = vmatprep.subr.mxu0 0.0
      %723 = vmatpush1.msra.mxu0 %v688
      %724 = vmatprep.subr.mxu0 0.0
      %725 = vmatpush1.msra.mxu0 %v689
      %726 = vmatprep.subr.mxu0 0.0
      %727 = vmatpush1.msra.mxu0 %v690
      %728 = vmatprep.subr.mxu0 0.0
      %729 = vmatpush1.msra.mxu0 %v691
      %730 = vmatprep.subr.mxu0 0.0
      %731 = vmatpush1.msra.mxu0 %v692
      %732 = vmatprep.subr.mxu0 0.0
      %733 = vmatpush1.msra.mxu0 0.0
      %734 = vmatprep.subr.mxu0 0.0
      %735 = vmatpush1.msra.mxu0 0.0
      %736 = vmatprep.subr.mxu0 0.0
      %737 = vmatpush1.msra.mxu0 0.0
      %738 = vmatprep.subr.mxu0 0.0
      %739 = vmatpush1.msra.mxu0 0.0
      %740 = vmatprep.subr.mxu0 0.0
      %741 = vmatpush1.msra.mxu0 0.0
      %742 = vmatprep.subr.mxu0 0.0
      %743 = vmatpush1.msra.mxu0 0.0
      %744 = vmatprep.subr.mxu0 0.0
      %745 = vmatpush1.msra.mxu0 0.0
      %746 = vmatprep.subr.mxu0 0.0
      %747 = vmatpush1.msra.mxu0 0.0
      %748 = vmatprep.subr.mxu0 0.0
      %749 = vmatpush1.msra.mxu0 0.0
      %750 = vmatprep.subr.mxu0 0.0
      %751 = vmatpush1.msra.mxu0 0.0
      %752 = vmatprep.subr.mxu0 0.0
      %753 = vmatpush1.msra.mxu0 0.0
      %754 = vmatprep.subr.mxu0 0.0
      %755 = vmatpush1.msra.mxu0 0.0
      %756 = vmatprep.subr.mxu0 0.0
      %757 = vmatpush1.msra.mxu0 0.0
      %758 = vmatprep.subr.mxu0 0.0
      %759 = vmatpush1.msra.mxu0 0.0
      %760 = vmatprep.subr.mxu0 0.0
      %761 = vmatpush1.msra.mxu0 0.0
      %762 = vmatprep.subr.mxu0 0.0
      %763 = vmatpush1.msra.mxu0 0.0
      %764 = vmatprep.mubr.f32.mxu0 0.0
      %765 = vmatmul.mubr.f32.gmra.mrb[0].mxu0 %v645
      %v766 = vpop.f32.mrb[0].mxu0
      %v767 = vadd.f32 %v698, %v766
      %v768 = vpop.f32.mrb[0].mxu0
      %769 = vmatprep.mubr.f32.mxu0 0.0
      %770 = vmatmul.mubr.f32.gmra.mrb[0].mxu0 %v646
      %v771 = vpop.f32.mrb[0].mxu0
      %v772 = vadd.f32 %v698, %v771
      %v773 = vpop.f32.mrb[0].mxu0
      %774 = vmatprep.mubr.f32.mxu0 0.0
      %775 = vmatmul.mubr.f32.gmra.mrb[0].mxu0 %v647
      %v776 = vpop.f32.mrb[0].mxu0
      %v777 = vadd.f32 %v698, %v776
      %v778 = vpop.f32.mrb[0].mxu0
      %779 = vmatprep.mubr.f32.mxu0 0.0
      %780 = vmatmul.mubr.f32.gmra.mrb[0].mxu0 %v648
      %v781 = vpop.f32.mrb[0].mxu0
      %v782 = vadd.f32 %v698, %v781
      %v783 = vpop.f32.mrb[0].mxu0
      %784 = vmatprep.mubr.f32.mxu0 0.0
      %785 = vmatmul.mubr.f32.gmra.mrb[0].mxu0 %v649
      %v786 = vpop.f32.mrb[0].mxu0
      %v787 = vadd.f32 %v698, %v786
      %v788 = vpop.f32.mrb[0].mxu0
      %789 = vmatprep.mubr.f32.mxu0 0.0
      %790 = vmatmul.mubr.f32.gmra.mrb[0].mxu0 %v650
      %v791 = vpop.f32.mrb[0].mxu0
      %v792 = vadd.f32 %v698, %v791
      %v793 = vpop.f32.mrb[0].mxu0
      %794 = vmatprep.mubr.f32.mxu0 0.0
      %795 = vmatmul.mubr.f32.gmra.mrb[0].mxu0 %v651
      %v796 = vpop.f32.mrb[0].mxu0
      %v797 = vadd.f32 %v698, %v796
      %v798 = vpop.f32.mrb[0].mxu0
      %799 = vmatprep.mubr.f32.mxu0 0.0
      %800 = vmatmul.mubr.f32.gmra.mrb[0].mxu0 %v652
      %v801 = vpop.f32.mrb[0].mxu0
      %v802 = vadd.f32 %v698, %v801
      %v803 = vpop.f32.mrb[0].mxu0
      %804 = vmatprep.mubr.f32.mxu0 0.0
      %805 = vmatmul.mubr.f32.gmra.mrb[0].mxu0 %v653
      %v806 = vpop.f32.mrb[0].mxu0
      %v807 = vadd.f32 %v698, %v806
      %v808 = vpop.f32.mrb[0].mxu0
      %809 = vmatprep.mubr.f32.mxu0 0.0
      %810 = vmatmul.mubr.f32.gmra.mrb[0].mxu0 %v654
      %v811 = vpop.f32.mrb[0].mxu0
      %v812 = vadd.f32 %v698, %v811
      %v813 = vpop.f32.mrb[0].mxu0
      %814 = vmatprep.mubr.f32.mxu0 0.0
      %815 = vmatmul.mubr.f32.gmra.mrb[0].mxu0 %v655
      %v816 = vpop.f32.mrb[0].mxu0
      %v817 = vadd.f32 %v698, %v816
      %v818 = vpop.f32.mrb[0].mxu0
      %819 = vmatprep.mubr.f32.mxu0 0.0
      %820 = vmatmul.mubr.f32.gmra.mrb[0].mxu0 %v656
      %v821 = vpop.f32.mrb[0].mxu0
      %v822 = vadd.f32 %v698, %v821
      %v823 = vpop.f32.mrb[0].mxu0
      %824 = vmatprep.mubr.f32.mxu0 0.0
      %825 = vmatmul.mubr.f32.gmra.mrb[0].mxu0 %v657
      %v826 = vpop.f32.mrb[0].mxu0
      %v827 = vadd.f32 %v698, %v826
      %v828 = vpop.f32.mrb[0].mxu0
      %829 = vmatprep.mubr.f32.mxu0 0.0
      %830 = vmatmul.mubr.f32.gmra.mrb[0].mxu0 %v658
      %v831 = vpop.f32.mrb[0].mxu0
      %v832 = vadd.f32 %v698, %v831
      %v833 = vpop.f32.mrb[0].mxu0
      %834 = vmatprep.mubr.f32.mxu0 0.0
      %835 = vmatmul.mubr.f32.gmra.mrb[0].mxu0 %v659
      %v836 = vpop.f32.mrb[0].mxu0
      %v837 = vadd.f32 %v698, %v836
      %v838 = vpop.f32.mrb[0].mxu0
      %839 = vmatprep.mubr.f32.mxu0 0.0
      %840 = vmatmul.mubr.f32.gmra.mrb[0].mxu0 %v660
      %v841 = vpop.f32.mrb[0].mxu0
      %v842 = vadd.f32 %v698, %v841
      %v843 = vpop.f32.mrb[0].mxu0
      %844 = vmatprep.mubr.f32.mxu0 0.0
      %845 = vmatmul.mubr.f32.gmra.mrb[0].mxu0 %v661
      %v846 = vpop.f32.mrb[0].mxu0
      %v847 = vadd.f32 %v698, %v846
      %v848 = vpop.f32.mrb[0].mxu0
      %849 = vmatprep.mubr.f32.mxu0 0.0
      %850 = vmatmul.mubr.f32.gmra.mrb[0].mxu0 %v662
      %v851 = vpop.f32.mrb[0].mxu0
      %v852 = vadd.f32 %v698, %v851
      %v853 = vpop.f32.mrb[0].mxu0
      %854 = vmatprep.mubr.f32.mxu0 0.0
      %855 = vmatmul.mubr.f32.gmra.mrb[0].mxu0 %v663
      %v856 = vpop.f32.mrb[0].mxu0
      %v857 = vadd.f32 %v698, %v856
      %v858 = vpop.f32.mrb[0].mxu0
      %859 = vmatprep.mubr.f32.mxu0 0.0
      %860 = vmatmul.mubr.f32.gmra.mrb[0].mxu0 %v664
      %v861 = vpop.f32.mrb[0].mxu0
      %v862 = vadd.f32 %v698, %v861
      %v863 = vpop.f32.mrb[0].mxu0
      %864 = vmatprep.mubr.f32.mxu0 0.0
      %865 = vmatmul.mubr.f32.gmra.mrb[0].mxu0 %v665
      %v866 = vpop.f32.mrb[0].mxu0
      %v867 = vadd.f32 %v698, %v866
      %v868 = vpop.f32.mrb[0].mxu0
      %869 = vmatprep.mubr.f32.mxu0 0.0
      %870 = vmatmul.mubr.f32.gmra.mrb[0].mxu0 %v666
      %v871 = vpop.f32.mrb[0].mxu0
      %v872 = vadd.f32 %v698, %v871
      %v873 = vpop.f32.mrb[0].mxu0
      %874 = vmatprep.mubr.f32.mxu0 0.0
      %875 = vmatmul.mubr.f32.gmra.mrb[0].mxu0 %v667
      %v876 = vpop.f32.mrb[0].mxu0
      %v877 = vadd.f32 %v698, %v876
      %v878 = vpop.f32.mrb[0].mxu0
      %879 = vmatprep.mubr.f32.mxu0 0.0
      %880 = vmatmul.mubr.f32.gmra.mrb[0].mxu0 %v668
      %v881 = vpop.f32.mrb[0].mxu0
      %v882 = vadd.f32 %v698, %v881
      %v883 = vpop.f32.mrb[0].mxu0
      %884 = vmatprep.mubr.f32.mxu0 0.0
      %885 = vmatmul.mubr.f32.gmra.mrb[0].mxu0 %v669
      %v886 = vpop.f32.mrb[0].mxu0
      %v887 = vadd.f32 %v698, %v886
      %v888 = vpop.f32.mrb[0].mxu0
      %889 = vmatprep.mubr.f32.mxu0 0.0
      %890 = vmatmul.mubr.f32.gmra.mrb[0].mxu0 %v670
      %v891 = vpop.f32.mrb[0].mxu0
      %v892 = vadd.f32 %v698, %v891
      %v893 = vpop.f32.mrb[0].mxu0
      %894 = vmatprep.mubr.f32.mxu0 0.0
      %895 = vmatmul.mubr.f32.gmra.mrb[0].mxu0 %v671
      %v896 = vpop.f32.mrb[0].mxu0
      %v897 = vadd.f32 %v698, %v896
      %v898 = vpop.f32.mrb[0].mxu0
      %899 = vmatprep.mubr.f32.mxu0 0.0
      %900 = vmatmul.mubr.f32.gmra.mrb[0].mxu0 %v672
      %v901 = vpop.f32.mrb[0].mxu0
      %v902 = vadd.f32 %v698, %v901
      %v903 = vpop.f32.mrb[0].mxu0
      %904 = vmatprep.mubr.f32.mxu0 0.0
      %905 = vmatmul.mubr.f32.gmra.mrb[0].mxu0 %v673
      %v906 = vpop.f32.mrb[0].mxu0
      %v907 = vadd.f32 %v698, %v906
      %v908 = vpop.f32.mrb[0].mxu0
      %909 = vmatprep.mubr.f32.mxu0 0.0
      %910 = vmatmul.mubr.f32.gmra.mrb[0].mxu0 %v674
      %v911 = vpop.f32.mrb[0].mxu0
      %v912 = vadd.f32 %v698, %v911
      %v913 = vpop.f32.mrb[0].mxu0
      %914 = vmatprep.mubr.f32.mxu0 0.0
      %915 = vmatmul.mubr.f32.gmra.mrb[0].mxu0 %v675
      %v916 = vpop.f32.mrb[0].mxu0
      %v917 = vadd.f32 %v698, %v916
      %v918 = vpop.f32.mrb[0].mxu0
      %919 = vmatprep.mubr.f32.mxu0 0.0
      %920 = vmatmul.mubr.f32.gmra.mrb[0].mxu0 %v676
      %v921 = vpop.f32.mrb[0].mxu0
      %v922 = vadd.f32 %v698, %v921
      %v923 = vpop.f32.mrb[0].mxu0
      %924 = vdwg.mxu0
      %v925 = vld [vmem:[%s413] sm:$0xff]
      %v926 = vld [vmem:[%s413 + $0x8] sm:$0xff]
      %v927 = vld [vmem:[%s413 + $0x10] sm:$0xff]
      %v928 = vld [vmem:[%s413 + $0x18] sm:$0xff]
      %v929 = vld [vmem:[%s413 + $0x20] sm:$0xff]
      %v930 = vld [vmem:[%s413 + $0x28] sm:$0xff]
      %v931 = vld [vmem:[%s413 + $0x30] sm:$0xff]
      %v932 = vld [vmem:[%s413 + $0x38] sm:$0xff]
      %v933 = vld [vmem:[%s413 + $0x40] sm:$0xff]
      %v934 = vld [vmem:[%s413 + $0x48] sm:$0xff]
      %v935 = vld [vmem:[%s413 + $0x50] sm:$0xff]
      %v936 = vld [vmem:[%s413 + $0x58] sm:$0xff]
      %v937 = vld [vmem:[%s413 + $0x60] sm:$0xff]
      %v938 = vld [vmem:[%s413 + $0x68] sm:$0xff]
      %v939 = vld [vmem:[%s413 + $0x70] sm:$0xff]
      %v940 = vld [vmem:[%s413 + $0x78] sm:$0xff]
      %v941 = vld [vmem:[%s413 + $0x80] sm:$0xff]
      %v942 = vld [vmem:[%s413 + $0x88] sm:$0xff]
      %v943 = vld [vmem:[%s413 + $0x90] sm:$0xff]
      %v944 = vld [vmem:[%s413 + $0x98] sm:$0xff]
      %v945 = vld [vmem:[%s413 + $0xa0] sm:$0xff]
      %v946 = vld [vmem:[%s413 + $0xa8] sm:$0xff]
      %v947 = vld [vmem:[%s413 + $0xb0] sm:$0xff]
      %v948 = vld [vmem:[%s413 + $0xb8] sm:$0xff]
      %v949 = vld [vmem:[%s413 + $0xc0] sm:$0xff]
      %v950 = vld [vmem:[%s413 + $0xc8] sm:$0xff]
      %v951 = vld [vmem:[%s413 + $0xd0] sm:$0xff]
      %v952 = vld [vmem:[%s413 + $0xd8] sm:$0xff]
      %v953 = vld [vmem:[%s413 + $0xe0] sm:$0xff]
      %v954 = vld [vmem:[%s413 + $0xe8] sm:$0xff]
      %v955 = vld [vmem:[%s413 + $0xf0] sm:$0xff]
      %v956 = vld [vmem:[%s413 + $0xf8] sm:$0xff]
      %v957 = vadd.f32 %v767, %v925
      %v958 = vadd.f32 %v772, %v926
      %v959 = vadd.f32 %v777, %v927
      %v960 = vadd.f32 %v782, %v928
      %v961 = vadd.f32 %v787, %v929
      %v962 = vadd.f32 %v792, %v930
      %v963 = vadd.f32 %v797, %v931
      %v964 = vadd.f32 %v802, %v932
      %v965 = vadd.f32 %v807, %v933
      %v966 = vadd.f32 %v812, %v934
      %v967 = vadd.f32 %v817, %v935
      %v968 = vadd.f32 %v822, %v936
      %v969 = vadd.f32 %v827, %v937
      %v970 = vadd.f32 %v832, %v938
      %v971 = vadd.f32 %v837, %v939
      %v972 = vadd.f32 %v842, %v940
      %v973 = vadd.f32 %v847, %v941
      %v974 = vadd.f32 %v852, %v942
      %v975 = vadd.f32 %v857, %v943
      %v976 = vadd.f32 %v862, %v944
      %v977 = vadd.f32 %v867, %v945
      %v978 = vadd.f32 %v872, %v946
      %v979 = vadd.f32 %v877, %v947
      %v980 = vadd.f32 %v882, %v948
      %v981 = vadd.f32 %v887, %v949
      %v982 = vadd.f32 %v892, %v950
      %v983 = vadd.f32 %v897, %v951
      %v984 = vadd.f32 %v902, %v952
      %v985 = vadd.f32 %v907, %v953
      %v986 = vadd.f32 %v912, %v954
      %v987 = vadd.f32 %v917, %v955
      %v988 = vadd.f32 %v922, %v956
      %vm989 = vcmask 31744
      %990 = vst.msk [vmem:[%s423] sm:$0xff] %vm989, %v957
      %991 = vst.msk [vmem:[%s423 + $0x8] sm:$0xff] %vm989, %v958
      %992 = vst.msk [vmem:[%s423 + $0x10] sm:$0xff] %vm989, %v959
      %993 = vst.msk [vmem:[%s423 + $0x18] sm:$0xff] %vm989, %v960
      %994 = vst.msk [vmem:[%s423 + $0x20] sm:$0xff] %vm989, %v961
      %995 = vst.msk [vmem:[%s423 + $0x28] sm:$0xff] %vm989, %v962
      %996 = vst.msk [vmem:[%s423 + $0x30] sm:$0xff] %vm989, %v963
      %997 = vst.msk [vmem:[%s423 + $0x38] sm:$0xff] %vm989, %v964
      %998 = vst.msk [vmem:[%s423 + $0x40] sm:$0xff] %vm989, %v965
      %999 = vst.msk [vmem:[%s423 + $0x48] sm:$0xff] %vm989, %v966
      %1000 = vst.msk [vmem:[%s423 + $0x50] sm:$0xff] %vm989, %v967
      %1001 = vst.msk [vmem:[%s423 + $0x58] sm:$0xff] %vm989, %v968
      %1002 = vst.msk [vmem:[%s423 + $0x60] sm:$0xff] %vm989, %v969
      %1003 = vst.msk [vmem:[%s423 + $0x68] sm:$0xff] %vm989, %v970
      %1004 = vst.msk [vmem:[%s423 + $0x70] sm:$0xff] %vm989, %v971
      %1005 = vst.msk [vmem:[%s423 + $0x78] sm:$0xff] %vm989, %v972
      %1006 = vst.msk [vmem:[%s423 + $0x80] sm:$0xff] %vm989, %v973
      %1007 = vst.msk [vmem:[%s423 + $0x88] sm:$0xff] %vm989, %v974
      %1008 = vst.msk [vmem:[%s423 + $0x90] sm:$0xff] %vm989, %v975
      %1009 = vst.msk [vmem:[%s423 + $0x98] sm:$0xff] %vm989, %v976
      %1010 = vst.msk [vmem:[%s423 + $0xa0] sm:$0xff] %vm989, %v977
      %1011 = vst.msk [vmem:[%s423 + $0xa8] sm:$0xff] %vm989, %v978
      %1012 = vst.msk [vmem:[%s423 + $0xb0] sm:$0xff] %vm989, %v979
      %1013 = vst.msk [vmem:[%s423 + $0xb8] sm:$0xff] %vm989, %v980
      %1014 = vst.msk [vmem:[%s423 + $0xc0] sm:$0xff] %vm989, %v981
      %1015 = vst.msk [vmem:[%s423 + $0xc8] sm:$0xff] %vm989, %v982
      %1016 = vst.msk [vmem:[%s423 + $0xd0] sm:$0xff] %vm989, %v983
      %1017 = vst.msk [vmem:[%s423 + $0xd8] sm:$0xff] %vm989, %v984
      %1018 = vst.msk [vmem:[%s423 + $0xe0] sm:$0xff] %vm989, %v985
      %1019 = vst.msk [vmem:[%s423 + $0xe8] sm:$0xff] %vm989, %v986
      %1020 = vst.msk [vmem:[%s423 + $0xf0] sm:$0xff] %vm989, %v987
      %1021 = vst.msk [vmem:[%s423 + $0xf8] sm:$0xff] %vm989, %v988
      %s1022 = smul.u32 32, %s25
      %p1023 = scmp.lt.s32.totalorder %s24, 1
      %s1024 = scalar_select %p1023, %s24, 1
      %p1025 = scmp.lt.s32.totalorder %s1022, 31
      %s1026 = scalar_select %p1025, %s1022, 31
      %s1027 = smul.addr %s1024, 32
      %s1028 = sadd.s32 %s1026, %s1027
      %s1029 = smul.addr %s1028, 8
      %s1030 = scalar_lea.vmem %s9, %s1029
      // Predicated region
      $region57: #{fused_mbconv_forward.3} parent=55 // pred_check
        %p1031 = pneg %p260
      $region58: #{fused_mbconv_forward.3} parent=55 // pred_check_branch
        %1033 = sbr.rel (%p1031) target = $region60
      $region59: #{fused_mbconv_forward.3} parent=55 // pred_region
        %s1034 = smul.u32 32, %s25
      $region60: #{fused_mbconv_forward.3} parent=55 // pred_fallthru
        _
    $region56: #{fused_mbconv_forward.3} parent=5 // pred_fallthru
      _
    %p1035 = scmp.le.s32.totalorder 2, %s15
    // Predicated region
    $region61: #{fused_mbconv_forward.3} parent=5 // pred_check
      %p1036 = pneg %p1035
    $region62: #{fused_mbconv_forward.3} parent=5 // pred_check_branch
      %1038 = sbr.rel (%p1036) target = $region64
    $region63: #{fused_mbconv_forward.3} parent=5 // pred_region
      %s1039 = ssub.s32 %s15, 2
      // Predicated region
      $region65: #{fused_mbconv_forward.3} parent=63 // pred_check
        %p1040 = pneg %p266
      $region66: #{fused_mbconv_forward.3} parent=63 // pred_check_branch
        %1042 = sbr.rel (%p1040) target = $region68
      $region67: #{fused_mbconv_forward.3} parent=63 // pred_region
        %s1043 = smul.u32 32, %s27
        %p1044 = scmp.lt.s32.totalorder %s26, 1
        %s1045 = scalar_select %p1044, %s26, 1
        %p1046 = scmp.lt.s32.totalorder %s1043, 31
        %s1047 = scalar_select %p1046, %s1043, 31
        %s1048 = smul.addr %s1045, 32
        %s1049 = sadd.s32 %s1047, %s1048
        %s1050 = smul.addr %s1049, 8
        %s1051 = scalar_lea.vmem %s9, %s1050
      $region68: #{fused_mbconv_forward.3} parent=63 // pred_fallthru
        _
    $region64: #{fused_mbconv_forward.3} parent=5 // pred_fallthru
      _
  $region6: #{fused_mbconv_forward.3} parent=0 // loop_footer
    %s19 = sadd.s32 1, %s15
  $region7: #{fused_mbconv_forward.3} parent=0 // loop_footer_branch
    %14 = sbr.rel target = $region3
  $region8: #{fused_mbconv_forward.3} parent=0 // loop_exit
    _

// kernel: fused_mbconv_forward.2
$region0: #{fused_mbconv_forward.2}
  #allocation0 [shape = 'u32[]', space=smem, size = 0x4, offset = 0x4, fixed_abs, tag = 'smem constant byte address 0x4 - core index']
  #allocation1 [shape = 'u32[144,128]{1,0:T(1,128)}', space=vmem, size = 0x12000, scoped, tag = 'internal scratch']
  #allocation2 [shape = 'f32[256,36]{1,0:T(8,128)}', space=vmem, size = 0x20000, scoped, tag = 'scratch operand']
  %s0 = inlined_call_operand.vmem [shape: f32[2,18,18,4], index: 0, kind: input, shape index: {}]
  %s1 = inlined_call_operand.vmem [shape: f32[36,128], index: 1, kind: input, shape index: {}]
  %s2 = inlined_call_operand.vmem [shape: f32[1,128], index: 2, kind: input, shape index: {}]
  %s3 = inlined_call_operand.vmem [shape: f32[2,16,16,128], index: 3, kind: output, shape index: {0}]
  %s4 = inlined_call_operand.vmem [shape: f32[2,1,8,128], index: 4, kind: output, shape index: {1}]
  %5 = xla_tuple %s3, %s4
  %s6 = sld [smem:[#allocation0]]
  $region53: #{fused_mbconv_forward.2} parent=0
    _
  %s8 = ssub.s32 1, %s6
  %s9 = scalar_select 0, %s8, %s6
  loop: start=0, step=1, limit=4
  $region2: #{fused_mbconv_forward.2} parent=0 // loop_pre_header
    _
  $region3: #{fused_mbconv_forward.2} parent=0 // loop_header
    %s11 = sphi 0, %s15
    %p12 = scmp.ge.s32.totalorder %s11, 4
    %s18 = sphi 0, %s30
    %s19 = sphi 0, %s26
    %s20 = sphi 0, %s18
    %s21 = sphi 0, %s19
    %s22 = sphi 0, %s20
    %s23 = sphi 0, %s21
    %s33 = sphi 0, %s35
    %s36 = sphi 0, %s33
    %s37 = sphi 0, %s36
    %s53 = sphi 0, %s37
    %s57 = sphi 0, %s57
    %s59 = sphi 0, %s57
    %s60 = sphi 0, %s59
    %s74 = sphi 0, %s60
    %s78 = sphi 0, %s78
    %s80 = sphi 0, %s78
    %s81 = sphi 0, %s80
    %s95 = sphi 0, %s81
    %s103 = sphi 0, %s105
    %s106 = sphi 0, %s103
    %s107 = sphi 0, %s106
    %s123 = sphi 0, %s107
    %s131 = sphi 0, %s133
    %s134 = sphi 0, %s131
    %s135 = sphi 0, %s134
    %s151 = sphi 0, %s135
  $region4: #{fused_mbconv_forward.2} parent=0 // loop_header_branch
    %14 = sbr.rel (%p12) target = $region8
  $region5: #{fused_mbconv_forward.2} parent=0 // loop_body
    %s16 = ssub.s32 %s11, 1
    %s17 = ssub.s32 %s11, 2
    %s24 = sadd.s32 1, %s19
    %p25 = scmp.ge.s32.totalorder %s24, 1
    %s26 = scalar_select %p25, 0, %s24
    %s27 = sadd.s32 1, %s18
    %s28 = scalar_select %p25, %s27, %s18
    %p29 = scmp.ge.s32.totalorder %s28, 2
    %s30 = scalar_select %p29, 0, %s28
    %s31 = ssub.s32 %s18, %s30
    %p32 = scmp.eq.s32.totalorder %s31, 0
    %s34 = sadd.s32 %s33, 1
    %s35 = scalar_select %p32, %s33, %s34
    %p38 = pneg %p32
    %p39 = scmp.eq.s32.totalorder %s11, 1
    %p40 = por %p38, %p39
    %p41 = scmp.ne.s32.totalorder %s33, %s36
    %p42 = scmp.eq.s32.totalorder %s11, 0
    %p43 = por %p41, %p42
    %p44 = scmp.ne.s32.totalorder %s33, %s36
    %p45 = scmp.eq.s32.totalorder %s16, 1
    %p46 = por %p44, %p45
    %p47 = scmp.ne.s32.totalorder %s36, %s37
    %p48 = scmp.eq.s32.totalorder %s16, 0
    %p49 = por %p47, %p48
    %p50 = scmp.ne.s32.totalorder %s36, %s37
    %p51 = scmp.eq.s32.totalorder %s17, 1
    %p52 = por %p50, %p51
    %p54 = scmp.ne.s32.totalorder %s37, %s53
    %p55 = scmp.eq.s32.totalorder %s17, 0
    %p56 = por %p54, %p55
    %s58 = sadd.s32 %s57, 1
    %p61 = scmp.eq.s32.totalorder %s11, 1
    %p62 = scmp.ne.s32.totalorder %s57, %s59
    %p63 = scmp.eq.s32.totalorder %s11, 0
    %p64 = por %p62, %p63
    %p65 = scmp.ne.s32.totalorder %s57, %s59
    %p66 = scmp.eq.s32.totalorder %s16, 1
    %p67 = por %p65, %p66
    %p68 = scmp.ne.s32.totalorder %s59, %s60
    %p69 = scmp.eq.s32.totalorder %s16, 0
    %p70 = por %p68, %p69
    %p71 = scmp.ne.s32.totalorder %s59, %s60
    %p72 = scmp.eq.s32.totalorder %s17, 1
    %p73 = por %p71, %p72
    %p75 = scmp.ne.s32.totalorder %s60, %s74
    %p76 = scmp.eq.s32.totalorder %s17, 0
    %p77 = por %p75, %p76
    %s79 = sadd.s32 %s78, 1
    %p82 = scmp.eq.s32.totalorder %s11, 1
    %p83 = scmp.ne.s32.totalorder %s78, %s80
    %p84 = scmp.eq.s32.totalorder %s11, 0
    %p85 = por %p83, %p84
    %p86 = scmp.ne.s32.totalorder %s78, %s80
    %p87 = scmp.eq.s32.totalorder %s16, 1
    %p88 = por %p86, %p87
    %p89 = scmp.ne.s32.totalorder %s80, %s81
    %p90 = scmp.eq.s32.totalorder %s16, 0
    %p91 = por %p89, %p90
    %p92 = scmp.ne.s32.totalorder %s80, %s81
    %p93 = scmp.eq.s32.totalorder %s17, 1
    %p94 = por %p92, %p93
    %p96 = scmp.ne.s32.totalorder %s81, %s95
    %p97 = scmp.eq.s32.totalorder %s17, 0
    %p98 = por %p96, %p97
    %s99 = ssub.s32 %s18, %s30
    %s100 = ssub.s32 %s19, %s26
    %s101 = sor.u32 %s99, %s100
    %p102 = scmp.eq.s32.totalorder %s101, 0
    %s104 = sadd.s32 %s103, 1
    %s105 = scalar_select %p102, %s103, %s104
    %p108 = pneg %p102
    %p109 = scmp.eq.s32.totalorder %s11, 1
    %p110 = por %p108, %p109
    %p111 = scmp.ne.s32.totalorder %s103, %s106
    %p112 = scmp.eq.s32.totalorder %s11, 0
    %p113 = por %p111, %p112
    %p114 = scmp.ne.s32.totalorder %s103, %s106
    %p115 = scmp.eq.s32.totalorder %s16, 1
    %p116 = por %p114, %p115
    %p117 = scmp.ne.s32.totalorder %s106, %s107
    %p118 = scmp.eq.s32.totalorder %s16, 0
    %p119 = por %p117, %p118
    %p120 = scmp.ne.s32.totalorder %s106, %s107
    %p121 = scmp.eq.s32.totalorder %s17, 1
    %p122 = por %p120, %p121
    %p124 = scmp.ne.s32.totalorder %s107, %s123
    %p125 = scmp.eq.s32.totalorder %s17, 0
    %p126 = por %p124, %p125
    %s127 = ssub.s32 %s18, %s30
    %s128 = ssub.s32 %s19, %s26
    %s129 = sor.u32 %s127, %s128
    %p130 = scmp.eq.s32.totalorder %s129, 0
    %s132 = sadd.s32 %s131, 1
    %s133 = scalar_select %p130, %s131, %s132
    %p136 = pneg %p130
    %p137 = scmp.eq.s32.totalorder %s11, 1
    %p138 = por %p136, %p137
    %p139 = scmp.ne.s32.totalorder %s131, %s134
    %p140 = scmp.eq.s32.totalorder %s11, 0
    %p141 = por %p139, %p140
    %p142 = scmp.ne.s32.totalorder %s131, %s134
    %p143 = scmp.eq.s32.totalorder %s16, 1
    %p144 = por %p142, %p143
    %p145 = scmp.ne.s32.totalorder %s134, %s135
    %p146 = scmp.eq.s32.totalorder %s16, 0
    %p147 = por %p145, %p146
    %p148 = scmp.ne.s32.totalorder %s134, %s135
    %p149 = scmp.eq.s32.totalorder %s17, 1
    %p150 = por %p148, %p149
    %p152 = scmp.ne.s32.totalorder %s135, %s151
    %p153 = scmp.eq.s32.totalorder %s17, 0
    %p154 = por %p152, %p153
    %p155 = scmp.le.s32.totalorder 1, %s11
    %p156 = scmp.lt.s32.totalorder %s11, 3
    %p157 = pnand %p155, %p156
    %p158 = pneg %p157
    // Predicated region
    $region9: #{fused_mbconv_forward.2} parent=5 // pred_check
      _
    $region10: #{fused_mbconv_forward.2} parent=5 // pred_check_branch
      %160 = sbr.rel (%p157) target = $region12
    $region11: #{fused_mbconv_forward.2} parent=5 // pred_region
      %s161 = ssub.s32 %s11, 1
      // Predicated region
      $region13: #{fused_mbconv_forward.2} parent=11 // pred_check
        %p162 = pneg %p70
      $region14: #{fused_mbconv_forward.2} parent=11 // pred_check_branch
        %164 = sbr.rel (%p162) target = $region16
      $region15: #{fused_mbconv_forward.2} parent=11 // pred_region
        _
      $region16: #{fused_mbconv_forward.2} parent=11 // pred_fallthru
        _
      // Predicated region
      $region17: #{fused_mbconv_forward.2} parent=11 // pred_check
        %p165 = pneg %p91
      $region18: #{fused_mbconv_forward.2} parent=11 // pred_check_branch
        %167 = sbr.rel (%p165) target = $region20
      $region19: #{fused_mbconv_forward.2} parent=11 // pred_region
        _
      $region20: #{fused_mbconv_forward.2} parent=11 // pred_fallthru
        _
    $region12: #{fused_mbconv_forward.2} parent=5 // pred_fallthru
      _
    %p168 = scmp.lt.s32.totalorder %s11, 2
    // Predicated region
    $region21: #{fused_mbconv_forward.2} parent=5 // pred_check
      %p169 = pneg %p168
    $region22: #{fused_mbconv_forward.2} parent=5 // pred_check_branch
      %171 = sbr.rel (%p169) target = $region24
    $region23: #{fused_mbconv_forward.2} parent=5 // pred_region
      // Predicated region
      $region25: #{fused_mbconv_forward.2} parent=23 // pred_check
        %p172 = pneg %p43
      $region26: #{fused_mbconv_forward.2} parent=23 // pred_check_branch
        %174 = sbr.rel (%p172) target = $region28
      $region27: #{fused_mbconv_forward.2} parent=23 // pred_region
        %p175 = scmp.lt.s32.totalorder %s18, 1
        %s176 = scalar_select %p175, %s18, 1
        %s177 = smul.addr %s176, 54
        %s178 = smul.addr %s177, 8
        %s179 = scalar_lea.vmem %s0, %s178
      $region28: #{fused_mbconv_forward.2} parent=23 // pred_fallthru
        _
    $region24: #{fused_mbconv_forward.2} parent=5 // pred_fallthru
      _
    %p180 = scmp.le.s32.totalorder 1, %s11
    %p181 = scmp.lt.s32.totalorder %s11, 3
    %p182 = pnand %p180, %p181
    %p183 = pneg %p182
    // Predicated region
    $region29: #{fused_mbconv_forward.2} parent=5 // pred_check
      _
    $region30: #{fused_mbconv_forward.2} parent=5 // pred_check_branch
      %185 = sbr.rel (%p182) target = $region32
    $region31: #{fused_mbconv_forward.2} parent=5 // pred_region
      %s186 = ssub.s32 %s11, 1
      %p187 = scmp.lt.s32.totalorder %s20, 1
      %s188 = scalar_select %p187, %s20, 1
      %s189 = smul.addr %s188, 54
      %s190 = smul.addr %s189, 8
      %s191 = scalar_lea.vmem %s0, %s190
      %p192 = pneg %p49
      %p193 = pneg %p46
      %p194 = pneg %p70
      %p195 = pneg %p67
      %p196 = pneg %p91
      %p197 = pneg %p88
      %p198 = pneg %p119
      %p199 = pneg %p116
      %s200 = smul.u32 16, %s21
      %p201 = scmp.lt.s32.totalorder %s20, 1
      %s202 = scalar_select %p201, %s20, 1
      %p203 = scmp.lt.s32.totalorder %s200, 15
      %s204 = scalar_select %p203, %s200, 15
      %s205 = smul.addr %s204, 2
      %s206 = smul.addr %s202, 32
      %s207 = sadd.s32 %s205, %s206
      %s208 = smul.addr %s207, 8
      %s209 = scalar_lea.vmem %s3, %s208
      %p210 = pneg %p147
      %p211 = pneg %p144
      %p212 = scmp.lt.s32.totalorder %s20, 1
      %s213 = scalar_select %p212, %s20, 1
      %p214 = scmp.lt.s32.totalorder %s21, 0
      %s215 = scalar_select %p214, %s21, 0
      %s216 = sadd.s32 %s215, %s213
      %s217 = smul.addr %s216, 8
      %s218 = scalar_lea.vmem %s4, %s217
      %p219 = scmp.lt.s32.totalorder %s20, 1
      %s220 = scalar_select %p219, %s20, 1
      %s221 = smul.addr %s220, 54
      %s222 = smul.addr %s221, 8
      %s223 = scalar_lea.vmem %s0, %s222
      %s224 = smul.u32 16, %s21
      %p225 = scmp.lt.s32.totalorder %s20, 1
      %s226 = scalar_select %p225, %s20, 1
      %p227 = scmp.lt.s32.totalorder %s224, 15
      %s228 = scalar_select %p227, %s224, 15
      %s229 = smul.addr %s228, 2
      %s230 = smul.addr %s226, 32
      %s231 = sadd.s32 %s229, %s230
      %s232 = smul.addr %s231, 8
      %s233 = scalar_lea.vmem %s3, %s232
      %s234 = smul.u32 16, %s21
      %p235 = scmp.lt.s32.totalorder %s20, 1
      %s236 = scalar_select %p235, %s20, 1
      %p237 = scmp.lt.s32.totalorder %s21, 0
      %s238 = scalar_select %p237, %s21, 0
      %s239 = sadd.s32 %s238, %s236
      %s240 = smul.addr %s239, 8
      %s241 = scalar_lea.vmem %s4, %s240
      %s242 = smul.u32 %s21, 16
      %s243 = smul.u32 %s242, 24
      %s244 = scalar_lea.vmem %s223, %s243
      %v245 = vld [vmem:[%s244] sm:$0xff]
      %v246 = vld [vmem:[%s244 + $0x8] sm:$0xff]
      %v247 = vld [vmem:[%s244 + $0x18] sm:$0xff]
      %v248 = vld [vmem:[%s244 + $0x20] sm:$0xff]
      %v249 = vld [vmem:[%s244 + $0x30] sm:$0xff]
      %v250 = vld [vmem:[%s244 + $0x38] sm:$0xff]
      %v251 = vld [vmem:[%s244 + $0x48] sm:$0xff]
      %v252 = vld [vmem:[%s244 + $0x50] sm:$0xff]
      %v253 = vld [vmem:[%s244 + $0x60] sm:$0xff]
      %v254 = vld [vmem:[%s244 + $0x68] sm:$0xff]
      %v255 = vld [vmem:[%s244 + $0x78] sm:$0xff]
      %v256 = vld [vmem:[%s244 + $0x80] sm:$0xff]
      %v257 = vld [vmem:[%s244 + $0x90] sm:$0xff]
      %v258 = vld [vmem:[%s244 + $0x98] sm:$0xff]
      %v259 = vld [vmem:[%s244 + $0xa8] sm:$0xff]
      %v260 = vld [vmem:[%s244 + $0xb0] sm:$0xff]
      %v261 = vld [vmem:[%s244 + $0xc0] sm:$0xff]
      %v262 = vld [vmem:[%s244 + $0xc8] sm:$0xff]
      %v263 = vld [vmem:[%s244 + $0xd8] sm:$0xff]
      %v264 = vld [vmem:[%s244 + $0xe0] sm:$0xff]
      %v265 = vld [vmem:[%s244 + $0xf0] sm:$0xff]
      %v266 = vld [vmem:[%s244 + $0xf8] sm:$0xff]
      %v267 = vld [vmem:[%s244 + $0x108] sm:$0xff]
      %v268 = vld [vmem:[%s244 + $0x110] sm:$0xff]
      %v269 = vld [vmem:[%s244 + $0x120] sm:$0xff]
      %v270 = vld [vmem:[%s244 + $0x128] sm:$0xff]
      %v271 = vld [vmem:[%s244 + $0x138] sm:$0xff]
      %v272 = vld [vmem:[%s244 + $0x140] sm:$0xff]
      %v273 = vld [vmem:[%s244 + $0x150] sm:$0xff]
      %v274 = vld [vmem:[%s244 + $0x158] sm:$0xff]
      %v275 = vld [vmem:[%s244 + $0x168] sm:$0xff]
      %v276 = vld [vmem:[%s244 + $0x170] sm:$0xff]
      %vm277 = vcmask 31744
      %278 = vst.msk [vmem:[#allocation2] sm:$0xff] %vm277, %v245
      %279 = vst.msk [vmem:[#allocation2 + $0x8] sm:$0xff] %vm277, %v246
      %280 = vst.msk [vmem:[#allocation2 + $0x10] sm:$0xff] %vm277, %v247
      %281 = vst.msk [vmem:[#allocation2 + $0x18] sm:$0xff] %vm277, %v248
      %282 = vst.msk [vmem:[#allocation2 + $0x20] sm:$0xff] %vm277, %v249
      %283 = vst.msk [vmem:[#allocation2 + $0x28] sm:$0xff] %vm277, %v250
      %284 = vst.msk [vmem:[#allocation2 + $0x30] sm:$0xff] %vm277, %v251
      %285 = vst.msk [vmem:[#allocation2 + $0x38] sm:$0xff] %vm277, %v252
      %286 = vst.msk [vmem:[#allocation2 + $0x40] sm:$0xff] %vm277, %v253
      %287 = vst.msk [vmem:[#allocation2 + $0x48] sm:$0xff] %vm277, %v254
      %288 = vst.msk [vmem:[#allocation2 + $0x50] sm:$0xff] %vm277, %v255
      %289 = vst.msk [vmem:[#allocation2 + $0x58] sm:$0xff] %vm277, %v256
      %290 = vst.msk [vmem:[#allocation2 + $0x60] sm:$0xff] %vm277, %v257
      %291 = vst.msk [vmem:[#allocation2 + $0x68] sm:$0xff] %vm277, %v258
      %292 = vst.msk [vmem:[#allocation2 + $0x70] sm:$0xff] %vm277, %v259
      %293 = vst.msk [vmem:[#allocation2 + $0x78] sm:$0xff] %vm277, %v260
      %294 = vst.msk [vmem:[#allocation2 + $0x80] sm:$0xff] %vm277, %v261
      %295 = vst.msk [vmem:[#allocation2 + $0x88] sm:$0xff] %vm277, %v262
      %296 = vst.msk [vmem:[#allocation2 + $0x90] sm:$0xff] %vm277, %v263
      %297 = vst.msk [vmem:[#allocation2 + $0x98] sm:$0xff] %vm277, %v264
      %298 = vst.msk [vmem:[#allocation2 + $0xa0] sm:$0xff] %vm277, %v265
      %299 = vst.msk [vmem:[#allocation2 + $0xa8] sm:$0xff] %vm277, %v266
      %300 = vst.msk [vmem:[#allocation2 + $0xb0] sm:$0xff] %vm277, %v267
      %301 = vst.msk [vmem:[#allocation2 + $0xb8] sm:$0xff] %vm277, %v268
      %302 = vst.msk [vmem:[#allocation2 + $0xc0] sm:$0xff] %vm277, %v269
      %303 = vst.msk [vmem:[#allocation2 + $0xc8] sm:$0xff] %vm277, %v270
      %304 = vst.msk [vmem:[#allocation2 + $0xd0] sm:$0xff] %vm277, %v271
      %305 = vst.msk [vmem:[#allocation2 + $0xd8] sm:$0xff] %vm277, %v272
      %306 = vst.msk [vmem:[#allocation2 + $0xe0] sm:$0xff] %vm277, %v273
      %307 = vst.msk [vmem:[#allocation2 + $0xe8] sm:$0xff] %vm277, %v274
      %308 = vst.msk [vmem:[#allocation2 + $0xf0] sm:$0xff] %vm277, %v275
      %309 = vst.msk [vmem:[#allocation2 + $0xf8] sm:$0xff] %vm277, %v276
      %v310 = vld [vmem:[%s244 + $0x1] sm:$0xff]
      %v311 = vld [vmem:[%s244 + $0x9] sm:$0xff]
      %v312 = vld [vmem:[%s244 + $0x19] sm:$0xff]
      %v313 = vld [vmem:[%s244 + $0x21] sm:$0xff]
      %v314 = vld [vmem:[%s244 + $0x31] sm:$0xff]
      %v315 = vld [vmem:[%s244 + $0x39] sm:$0xff]
      %v316 = vld [vmem:[%s244 + $0x49] sm:$0xff]
      %v317 = vld [vmem:[%s244 + $0x51] sm:$0xff]
      %v318 = vld [vmem:[%s244 + $0x61] sm:$0xff]
      %v319 = vld [vmem:[%s244 + $0x69] sm:$0xff]
      %v320 = vld [vmem:[%s244 + $0x79] sm:$0xff]
      %v321 = vld [vmem:[%s244 + $0x81] sm:$0xff]
      %v322 = vld [vmem:[%s244 + $0x91] sm:$0xff]
      %v323 = vld [vmem:[%s244 + $0x99] sm:$0xff]
      %v324 = vld [vmem:[%s244 + $0xa9] sm:$0xff]
      %v325 = vld [vmem:[%s244 + $0xb1] sm:$0xff]
      %v326 = vld [vmem:[%s244 + $0xc1] sm:$0xff]
      %v327 = vld [vmem:[%s244 + $0xc9] sm:$0xff]
      %v328 = vld [vmem:[%s244 + $0xd9] sm:$0xff]
      %v329 = vld [vmem:[%s244 + $0xe1] sm:$0xff]
      %v330 = vld [vmem:[%s244 + $0xf1] sm:$0xff]
      %v331 = vld [vmem:[%s244 + $0xf9] sm:$0xff]
      %v332 = vld [vmem:[%s244 + $0x109] sm:$0xff]
      %v333 = vld [vmem:[%s244 + $0x111] sm:$0xff]
      %v334 = vld [vmem:[%s244 + $0x121] sm:$0xff]
      %v335 = vld [vmem:[%s244 + $0x129] sm:$0xff]
      %v336 = vld [vmem:[%s244 + $0x139] sm:$0xff]
      %v337 = vld [vmem:[%s244 + $0x141] sm:$0xff]
      %v338 = vld [vmem:[%s244 + $0x151] sm:$0xff]
      %v339 = vld [vmem:[%s244 + $0x159] sm:$0xff]
      %v340 = vld [vmem:[%s244 + $0x169] sm:$0xff]
      %v341 = vld [vmem:[%s244 + $0x171] sm:$0xff]
      %374 = vrot.lane.b32.xlu0 %v310, 4
      %v375 = vpop.permute.xlu0 %374
      %376 = vrot.lane.b32.xlu0 %v311, 4
      %v377 = vpop.permute.xlu0 %376
      %378 = vrot.lane.b32.xlu0 %v312, 4
      %v379 = vpop.permute.xlu0 %378
      %380 = vrot.lane.b32.xlu0 %v313, 4
      %v381 = vpop.permute.xlu0 %380
      %382 = vrot.lane.b32.xlu0 %v314, 4
      %v383 = vpop.permute.xlu0 %382
      %384 = vrot.lane.b32.xlu0 %v315, 4
      %v385 = vpop.permute.xlu0 %384
      %386 = vrot.lane.b32.xlu0 %v316, 4
      %v387 = vpop.permute.xlu0 %386
      %388 = vrot.lane.b32.xlu0 %v317, 4
      %v389 = vpop.permute.xlu0 %388
      %390 = vrot.lane.b32.xlu0 %v318, 4
      %v391 = vpop.permute.xlu0 %390
      %392 = vrot.lane.b32.xlu0 %v319, 4
      %v393 = vpop.permute.xlu0 %392
      %394 = vrot.lane.b32.xlu0 %v320, 4
      %v395 = vpop.permute.xlu0 %394
      %396 = vrot.lane.b32.xlu0 %v321, 4
      %v397 = vpop.permute.xlu0 %396
      %398 = vrot.lane.b32.xlu0 %v322, 4
      %v399 = vpop.permute.xlu0 %398
      %400 = vrot.lane.b32.xlu0 %v323, 4
      %v401 = vpop.permute.xlu0 %400
      %402 = vrot.lane.b32.xlu0 %v324, 4
      %v403 = vpop.permute.xlu0 %402
      %404 = vrot.lane.b32.xlu0 %v325, 4
      %v405 = vpop.permute.xlu0 %404
      %406 = vrot.lane.b32.xlu0 %v326, 4
      %v407 = vpop.permute.xlu0 %406
      %408 = vrot.lane.b32.xlu0 %v327, 4
      %v409 = vpop.permute.xlu0 %408
      %410 = vrot.lane.b32.xlu0 %v328, 4
      %v411 = vpop.permute.xlu0 %410
      %412 = vrot.lane.b32.xlu0 %v329, 4
      %v413 = vpop.permute.xlu0 %412
      %414 = vrot.lane.b32.xlu0 %v330, 4
      %v415 = vpop.permute.xlu0 %414
      %416 = vrot.lane.b32.xlu0 %v331, 4
      %v417 = vpop.permute.xlu0 %416
      %418 = vrot.lane.b32.xlu0 %v332, 4
      %v419 = vpop.permute.xlu0 %418
      %420 = vrot.lane.b32.xlu0 %v333, 4
      %v421 = vpop.permute.xlu0 %420
      %422 = vrot.lane.b32.xlu0 %v334, 4
      %v423 = vpop.permute.xlu0 %422
      %424 = vrot.lane.b32.xlu0 %v335, 4
      %v425 = vpop.permute.xlu0 %424
      %426 = vrot.lane.b32.xlu0 %v336, 4
      %v427 = vpop.permute.xlu0 %426
      %428 = vrot.lane.b32.xlu0 %v337, 4
      %v429 = vpop.permute.xlu0 %428
      %430 = vrot.lane.b32.xlu0 %v338, 4
      %v431 = vpop.permute.xlu0 %430
      %432 = vrot.lane.b32.xlu0 %v339, 4
      %v433 = vpop.permute.xlu0 %432
      %434 = vrot.lane.b32.xlu0 %v340, 4
      %v435 = vpop.permute.xlu0 %434
      %436 = vrot.lane.b32.xlu0 %v341, 4
      %v437 = vpop.permute.xlu0 %436
      %vm470 = vcmask 64544
      %471 = vst.msk [vmem:[#allocation2] sm:$0xff] %vm470, %v375
      %472 = vst.msk [vmem:[#allocation2 + $0x8] sm:$0xff] %vm470, %v377
      %473 = vst.msk [vmem:[#allocation2 + $0x10] sm:$0xff] %vm470, %v379
      %474 = vst.msk [vmem:[#allocation2 + $0x18] sm:$0xff] %vm470, %v381
      %475 = vst.msk [vmem:[#allocation2 + $0x20] sm:$0xff] %vm470, %v383
      %476 = vst.msk [vmem:[#allocation2 + $0x28] sm:$0xff] %vm470, %v385
      %477 = vst.msk [vmem:[#allocation2 + $0x30] sm:$0xff] %vm470, %v387
      %478 = vst.msk [vmem:[#allocation2 + $0x38] sm:$0xff] %vm470, %v389
      %479 = vst.msk [vmem:[#allocation2 + $0x40] sm:$0xff] %vm470, %v391
      %480 = vst.msk [vmem:[#allocation2 + $0x48] sm:$0xff] %vm470, %v393
      %481 = vst.msk [vmem:[#allocation2 + $0x50] sm:$0xff] %vm470, %v395
      %482 = vst.msk [vmem:[#allocation2 + $0x58] sm:$0xff] %vm470, %v397
      %483 = vst.msk [vmem:[#allocation2 + $0x60] sm:$0xff] %vm470, %v399
      %484 = vst.msk [vmem:[#allocation2 + $0x68] sm:$0xff] %vm470, %v401
      %485 = vst.msk [vmem:[#allocation2 + $0x70] sm:$0xff] %vm470, %v403
      %486 = vst.msk [vmem:[#allocation2 + $0x78] sm:$0xff] %vm470, %v405
      %487 = vst.msk [vmem:[#allocation2 + $0x80] sm:$0xff] %vm470, %v407
      %488 = vst.msk [vmem:[#allocation2 + $0x88] sm:$0xff] %vm470, %v409
      %489 = vst.msk [vmem:[#allocation2 + $0x90] sm:$0xff] %vm470, %v411
      %490 = vst.msk [vmem:[#allocation2 + $0x98] sm:$0xff] %vm470, %v413
      %491 = vst.msk [vmem:[#allocation2 + $0xa0] sm:$0xff] %vm470, %v415
      %492 = vst.msk [vmem:[#allocation2 + $0xa8] sm:$0xff] %vm470, %v417
      %493 = vst.msk [vmem:[#allocation2 + $0xb0] sm:$0xff] %vm470, %v419
      %494 = vst.msk [vmem:[#allocation2 + $0xb8] sm:$0xff] %vm470, %v421
      %495 = vst.msk [vmem:[#allocation2 + $0xc0] sm:$0xff] %vm470, %v423
      %496 = vst.msk [vmem:[#allocation2 + $0xc8] sm:$0xff] %vm470, %v425
      %497 = vst.msk [vmem:[#allocation2 + $0xd0] sm:$0xff] %vm470, %v427
      %498 = vst.msk [vmem:[#allocation2 + $0xd8] sm:$0xff] %vm470, %v429
      %499 = vst.msk [vmem:[#allocation2 + $0xe0] sm:$0xff] %vm470, %v431
      %500 = vst.msk [vmem:[#allocation2 + $0xe8] sm:$0xff] %vm470, %v433
      %501 = vst.msk [vmem:[#allocation2 + $0xf0] sm:$0xff] %vm470, %v435
      %502 = vst.msk [vmem:[#allocation2 + $0xf8] sm:$0xff] %vm470, %v437
      %v503 = vld [vmem:[%s244 + $0x2] sm:$0xff]
      %v504 = vld [vmem:[%s244 + $0xa] sm:$0xff]
      %v505 = vld [vmem:[%s244 + $0x1a] sm:$0xff]
      %v506 = vld [vmem:[%s244 + $0x22] sm:$0xff]
      %v507 = vld [vmem:[%s244 + $0x32] sm:$0xff]
      %v508 = vld [vmem:[%s244 + $0x3a] sm:$0xff]
      %v509 = vld [vmem:[%s244 + $0x4a] sm:$0xff]
      %v510 = vld [vmem:[%s244 + $0x52] sm:$0xff]
      %v511 = vld [vmem:[%s244 + $0x62] sm:$0xff]
      %v512 = vld [vmem:[%s244 + $0x6a] sm:$0xff]
      %v513 = vld [vmem:[%s244 + $0x7a] sm:$0xff]
      %v514 = vld [vmem:[%s244 + $0x82] sm:$0xff]
      %v515 = vld [vmem:[%s244 + $0x92] sm:$0xff]
      %v516 = vld [vmem:[%s244 + $0x9a] sm:$0xff]
      %v517 = vld [vmem:[%s244 + $0xaa] sm:$0xff]
      %v518 = vld [vmem:[%s244 + $0xb2] sm:$0xff]
      %v519 = vld [vmem:[%s244 + $0xc2] sm:$0xff]
      %v520 = vld [vmem:[%s244 + $0xca] sm:$0xff]
      %v521 = vld [vmem:[%s244 + $0xda] sm:$0xff]
      %v522 = vld [vmem:[%s244 + $0xe2] sm:$0xff]
      %v523 = vld [vmem:[%s244 + $0xf2] sm:$0xff]
      %v524 = vld [vmem:[%s244 + $0xfa] sm:$0xff]
      %v525 = vld [vmem:[%s244 + $0x10a] sm:$0xff]
      %v526 = vld [vmem:[%s244 + $0x112] sm:$0xff]
      %v527 = vld [vmem:[%s244 + $0x122] sm:$0xff]
      %v528 = vld [vmem:[%s244 + $0x12a] sm:$0xff]
      %v529 = vld [vmem:[%s244 + $0x13a] sm:$0xff]
      %v530 = vld [vmem:[%s244 + $0x142] sm:$0xff]
      %v531 = vld [vmem:[%s244 + $0x152] sm:$0xff]
      %v532 = vld [vmem:[%s244 + $0x15a] sm:$0xff]
      %v533 = vld [vmem:[%s244 + $0x16a] sm:$0xff]
      %v534 = vld [vmem:[%s244 + $0x172] sm:$0xff]
      %567 = vrot.lane.b32.xlu0 %v503, 8
      %v568 = vpop.permute.xlu0 %567
      %569 = vrot.lane.b32.xlu0 %v504, 8
      %v570 = vpop.permute.xlu0 %569
      %571 = vrot.lane.b32.xlu0 %v505, 8
      %v572 = vpop.permute.xlu0 %571
      %573 = vrot.lane.b32.xlu0 %v506, 8
      %v574 = vpop.permute.xlu0 %573
      %575 = vrot.lane.b32.xlu0 %v507, 8
      %v576 = vpop.permute.xlu0 %575
      %577 = vrot.lane.b32.xlu0 %v508, 8
      %v578 = vpop.permute.xlu0 %577
      %579 = vrot.lane.b32.xlu0 %v509, 8
      %v580 = vpop.permute.xlu0 %579
      %581 = vrot.lane.b32.xlu0 %v510, 8
      %v582 = vpop.permute.xlu0 %581
      %583 = vrot.lane.b32.xlu0 %v511, 8
      %v584 = vpop.permute.xlu0 %583
      %585 = vrot.lane.b32.xlu0 %v512, 8
      %v586 = vpop.permute.xlu0 %585
      %587 = vrot.lane.b32.xlu0 %v513, 8
      %v588 = vpop.permute.xlu0 %587
      %589 = vrot.lane.b32.xlu0 %v514, 8
      %v590 = vpop.permute.xlu0 %589
      %591 = vrot.lane.b32.xlu0 %v515, 8
      %v592 = vpop.permute.xlu0 %591
      %593 = vrot.lane.b32.xlu0 %v516, 8
      %v594 = vpop.permute.xlu0 %593
      %595 = vrot.lane.b32.xlu0 %v517, 8
      %v596 = vpop.permute.xlu0 %595
      %597 = vrot.lane.b32.xlu0 %v518, 8
      %v598 = vpop.permute.xlu0 %597
      %599 = vrot.lane.b32.xlu0 %v519, 8
      %v600 = vpop.permute.xlu0 %599
      %601 = vrot.lane.b32.xlu0 %v520, 8
      %v602 = vpop.permute.xlu0 %601
      %603 = vrot.lane.b32.xlu0 %v521, 8
      %v604 = vpop.permute.xlu0 %603
      %605 = vrot.lane.b32.xlu0 %v522, 8
      %v606 = vpop.permute.xlu0 %605
      %607 = vrot.lane.b32.xlu0 %v523, 8
      %v608 = vpop.permute.xlu0 %607
      %609 = vrot.lane.b32.xlu0 %v524, 8
      %v610 = vpop.permute.xlu0 %609
      %611 = vrot.lane.b32.xlu0 %v525, 8
      %v612 = vpop.permute.xlu0 %611
      %613 = vrot.lane.b32.xlu0 %v526, 8
      %v614 = vpop.permute.xlu0 %613
      %615 = vrot.lane.b32.xlu0 %v527, 8
      %v616 = vpop.permute.xlu0 %615
      %617 = vrot.lane.b32.xlu0 %v528, 8
      %v618 = vpop.permute.xlu0 %617
      %619 = vrot.lane.b32.xlu0 %v529, 8
      %v620 = vpop.permute.xlu0 %619
      %621 = vrot.lane.b32.xlu0 %v530, 8
      %v622 = vpop.permute.xlu0 %621
      %623 = vrot.lane.b32.xlu0 %v531, 8
      %v624 = vpop.permute.xlu0 %623
      %625 = vrot.lane.b32.xlu0 %v532, 8
      %v626 = vpop.permute.xlu0 %625
      %627 = vrot.lane.b32.xlu0 %v533, 8
      %v628 = vpop.permute.xlu0 %627
      %629 = vrot.lane.b32.xlu0 %v534, 8
      %v630 = vpop.permute.xlu0 %629
      %vm663 = vcmask 97344
      %664 = vst.msk [vmem:[#allocation2] sm:$0xff] %vm663, %v568
      %665 = vst.msk [vmem:[#allocation2 + $0x8] sm:$0xff] %vm663, %v570
      %666 = vst.msk [vmem:[#allocation2 + $0x10] sm:$0xff] %vm663, %v572
      %667 = vst.msk [vmem:[#allocation2 + $0x18] sm:$0xff] %vm663, %v574
      %668 = vst.msk [vmem:[#allocation2 + $0x20] sm:$0xff] %vm663, %v576
      %669 = vst.msk [vmem:[#allocation2 + $0x28] sm:$0xff] %vm663, %v578
      %670 = vst.msk [vmem:[#allocation2 + $0x30] sm:$0xff] %vm663, %v580
      %671 = vst.msk [vmem:[#allocation2 + $0x38] sm:$0xff] %vm663, %v582
      %672 = vst.msk [vmem:[#allocation2 + $0x40] sm:$0xff] %vm663, %v584
      %673 = vst.msk [vmem:[#allocation2 + $0x48] sm:$0xff] %vm663, %v586
      %674 = vst.msk [vmem:[#allocation2 + $0x50] sm:$0xff] %vm663, %v588
      %675 = vst.msk [vmem:[#allocation2 + $0x58] sm:$0xff] %vm663, %v590
      %676 = vst.msk [vmem:[#allocation2 + $0x60] sm:$0xff] %vm663, %v592
      %677 = vst.msk [vmem:[#allocation2 + $0x68] sm:$0xff] %vm663, %v594
      %678 = vst.msk [vmem:[#allocation2 + $0x70] sm:$0xff] %vm663, %v596
      %679 = vst.msk [vmem:[#allocation2 + $0x78] sm:$0xff] %vm663, %v598
      %680 = vst.msk [vmem:[#allocation2 + $0x80] sm:$0xff] %vm663, %v600
      %681 = vst.msk [vmem:[#allocation2 + $0x88] sm:$0xff] %vm663, %v602
      %682 = vst.msk [vmem:[#allocation2 + $0x90] sm:$0xff] %vm663, %v604
      %683 = vst.msk [vmem:[#allocation2 + $0x98] sm:$0xff] %vm663, %v606
      %684 = vst.msk [vmem:[#allocation2 + $0xa0] sm:$0xff] %vm663, %v608
      %685 = vst.msk [vmem:[#allocation2 + $0xa8] sm:$0xff] %vm663, %v610
      %686 = vst.msk [vmem:[#allocation2 + $0xb0] sm:$0xff] %vm663, %v612
      %687 = vst.msk [vmem:[#allocation2 + $0xb8] sm:$0xff] %vm663, %v614
      %688 = vst.msk [vmem:[#allocation2 + $0xc0] sm:$0xff] %vm663, %v616
      %689 = vst.msk [vmem:[#allocation2 + $0xc8] sm:$0xff] %vm663, %v618
      %690 = vst.msk [vmem:[#allocation2 + $0xd0] sm:$0xff] %vm663, %v620
      %691 = vst.msk [vmem:[#allocation2 + $0xd8] sm:$0xff] %vm663, %v622
      %692 = vst.msk [vmem:[#allocation2 + $0xe0] sm:$0xff] %vm663, %v624
      %693 = vst.msk [vmem:[#allocation2 + $0xe8] sm:$0xff] %vm663, %v626
      %694 = vst.msk [vmem:[#allocation2 + $0xf0] sm:$0xff] %vm663, %v628
      %695 = vst.msk [vmem:[#allocation2 + $0xf8] sm:$0xff] %vm663, %v630
      %s696 = sadd.s32 %s242, 1
      %s697 = smul.u32 %s696, 24
      %s698 = scalar_lea.vmem %s223, %s697
      %v699 = vld [vmem:[%s698] sm:$0xff]
      %v700 = vld [vmem:[%s698 + $0x8] sm:$0xff]
      %v701 = vld [vmem:[%s698 + $0x18] sm:$0xff]
      %v702 = vld [vmem:[%s698 + $0x20] sm:$0xff]
      %v703 = vld [vmem:[%s698 + $0x30] sm:$0xff]
      %v704 = vld [vmem:[%s698 + $0x38] sm:$0xff]
      %v705 = vld [vmem:[%s698 + $0x48] sm:$0xff]
      %v706 = vld [vmem:[%s698 + $0x50] sm:$0xff]
      %v707 = vld [vmem:[%s698 + $0x60] sm:$0xff]
      %v708 = vld [vmem:[%s698 + $0x68] sm:$0xff]
      %v709 = vld [vmem:[%s698 + $0x78] sm:$0xff]
      %v710 = vld [vmem:[%s698 + $0x80] sm:$0xff]
      %v711 = vld [vmem:[%s698 + $0x90] sm:$0xff]
      %v712 = vld [vmem:[%s698 + $0x98] sm:$0xff]
      %v713 = vld [vmem:[%s698 + $0xa8] sm:$0xff]
      %v714 = vld [vmem:[%s698 + $0xb0] sm:$0xff]
      %v715 = vld [vmem:[%s698 + $0xc0] sm:$0xff]
      %v716 = vld [vmem:[%s698 + $0xc8] sm:$0xff]
      %v717 = vld [vmem:[%s698 + $0xd8] sm:$0xff]
      %v718 = vld [vmem:[%s698 + $0xe0] sm:$0xff]
      %v719 = vld [vmem:[%s698 + $0xf0] sm:$0xff]
      %v720 = vld [vmem:[%s698 + $0xf8] sm:$0xff]
      %v721 = vld [vmem:[%s698 + $0x108] sm:$0xff]
      %v722 = vld [vmem:[%s698 + $0x110] sm:$0xff]
      %v723 = vld [vmem:[%s698 + $0x120] sm:$0xff]
      %v724 = vld [vmem:[%s698 + $0x128] sm:$0xff]
      %v725 = vld [vmem:[%s698 + $0x138] sm:$0xff]
      %v726 = vld [vmem:[%s698 + $0x140] sm:$0xff]
      %v727 = vld [vmem:[%s698 + $0x150] sm:$0xff]
      %v728 = vld [vmem:[%s698 + $0x158] sm:$0xff]
      %v729 = vld [vmem:[%s698 + $0x168] sm:$0xff]
      %v730 = vld [vmem:[%s698 + $0x170] sm:$0xff]
      %763 = vrot.lane.b32.xlu0 %v699, 12
      %v764 = vpop.permute.xlu0 %763
      %765 = vrot.lane.b32.xlu0 %v700, 12
      %v766 = vpop.permute.xlu0 %765
      %767 = vrot.lane.b32.xlu0 %v701, 12
      %v768 = vpop.permute.xlu0 %767
      %769 = vrot.lane.b32.xlu0 %v702, 12
      %v770 = vpop.permute.xlu0 %769
      %771 = vrot.lane.b32.xlu0 %v703, 12
      %v772 = vpop.permute.xlu0 %771
      %773 = vrot.lane.b32.xlu0 %v704, 12
      %v774 = vpop.permute.xlu0 %773
      %775 = vrot.lane.b32.xlu0 %v705, 12
      %v776 = vpop.permute.xlu0 %775
      %777 = vrot.lane.b32.xlu0 %v706, 12
      %v778 = vpop.permute.xlu0 %777
      %779 = vrot.lane.b32.xlu0 %v707, 12
      %v780 = vpop.permute.xlu0 %779
      %781 = vrot.lane.b32.xlu0 %v708, 12
      %v782 = vpop.permute.xlu0 %781
      %783 = vrot.lane.b32.xlu0 %v709, 12
      %v784 = vpop.permute.xlu0 %783
      %785 = vrot.lane.b32.xlu0 %v710, 12
      %v786 = vpop.permute.xlu0 %785
      %787 = vrot.lane.b32.xlu0 %v711, 12
      %v788 = vpop.permute.xlu0 %787
      %789 = vrot.lane.b32.xlu0 %v712, 12
      %v790 = vpop.permute.xlu0 %789
      %791 = vrot.lane.b32.xlu0 %v713, 12
      %v792 = vpop.permute.xlu0 %791
      %793 = vrot.lane.b32.xlu0 %v714, 12
      %v794 = vpop.permute.xlu0 %793
      %795 = vrot.lane.b32.xlu0 %v715, 12
      %v796 = vpop.permute.xlu0 %795
      %797 = vrot.lane.b32.xlu0 %v716, 12
      %v798 = vpop.permute.xlu0 %797
      %799 = vrot.lane.b32.xlu0 %v717, 12
      %v800 = vpop.permute.xlu0 %799
      %801 = vrot.lane.b32.xlu0 %v718, 12
      %v802 = vpop.permute.xlu0 %801
      %803 = vrot.lane.b32.xlu0 %v719, 12
      %v804 = vpop.permute.xlu0 %803
      %805 = vrot.lane.b32.xlu0 %v720, 12
      %v806 = vpop.permute.xlu0 %805
      %807 = vrot.lane.b32.xlu0 %v721, 12
      %v808 = vpop.permute.xlu0 %807
      %809 = vrot.lane.b32.xlu0 %v722, 12
      %v810 = vpop.permute.xlu0 %809
      %811 = vrot.lane.b32.xlu0 %v723, 12
      %v812 = vpop.permute.xlu0 %811
      %813 = vrot.lane.b32.xlu0 %v724, 12
      %v814 = vpop.permute.xlu0 %813
      %815 = vrot.lane.b32.xlu0 %v725, 12
      %v816 = vpop.permute.xlu0 %815
      %817 = vrot.lane.b32.xlu0 %v726, 12
      %v818 = vpop.permute.xlu0 %817
      %819 = vrot.lane.b32.xlu0 %v727, 12
      %v820 = vpop.permute.xlu0 %819
      %821 = vrot.lane.b32.xlu0 %v728, 12
      %v822 = vpop.permute.xlu0 %821
      %823 = vrot.lane.b32.xlu0 %v729, 12
      %v824 = vpop.permute.xlu0 %823
      %825 = vrot.lane.b32.xlu0 %v730, 12
      %v826 = vpop.permute.xlu0 %825
      %vm859 = vcmask 130144
      %860 = vst.msk [vmem:[#allocation2] sm:$0xff] %vm859, %v764
      %861 = vst.msk [vmem:[#allocation2 + $0x8] sm:$0xff] %vm859, %v766
      %862 = vst.msk [vmem:[#allocation2 + $0x10] sm:$0xff] %vm859, %v768
      %863 = vst.msk [vmem:[#allocation2 + $0x18] sm:$0xff] %vm859, %v770
      %864 = vst.msk [vmem:[#allocation2 + $0x20] sm:$0xff] %vm859, %v772
      %865 = vst.msk [vmem:[#allocation2 + $0x28] sm:$0xff] %vm859, %v774
      %866 = vst.msk [vmem:[#allocation2 + $0x30] sm:$0xff] %vm859, %v776
      %867 = vst.msk [vmem:[#allocation2 + $0x38] sm:$0xff] %vm859, %v778
      %868 = vst.msk [vmem:[#allocation2 + $0x40] sm:$0xff] %vm859, %v780
      %869 = vst.msk [vmem:[#allocation2 + $0x48] sm:$0xff] %vm859, %v782
      %870 = vst.msk [vmem:[#allocation2 + $0x50] sm:$0xff] %vm859, %v784
      %871 = vst.msk [vmem:[#allocation2 + $0x58] sm:$0xff] %vm859, %v786
      %872 = vst.msk [vmem:[#allocation2 + $0x60] sm:$0xff] %vm859, %v788
      %873 = vst.msk [vmem:[#allocation2 + $0x68] sm:$0xff] %vm859, %v790
      %874 = vst.msk [vmem:[#allocation2 + $0x70] sm:$0xff] %vm859, %v792
      %875 = vst.msk [vmem:[#allocation2 + $0x78] sm:$0xff] %vm859, %v794
      %876 = vst.msk [vmem:[#allocation2 + $0x80] sm:$0xff] %vm859, %v796
      %877 = vst.msk [vmem:[#allocation2 + $0x88] sm:$0xff] %vm859, %v798
      %878 = vst.msk [vmem:[#allocation2 + $0x90] sm:$0xff] %vm859, %v800
      %879 = vst.msk [vmem:[#allocation2 + $0x98] sm:$0xff] %vm859, %v802
      %880 = vst.msk [vmem:[#allocation2 + $0xa0] sm:$0xff] %vm859, %v804
      %881 = vst.msk [vmem:[#allocation2 + $0xa8] sm:$0xff] %vm859, %v806
      %882 = vst.msk [vmem:[#allocation2 + $0xb0] sm:$0xff] %vm859, %v808
      %883 = vst.msk [vmem:[#allocation2 + $0xb8] sm:$0xff] %vm859, %v810
      %884 = vst.msk [vmem:[#allocation2 + $0xc0] sm:$0xff] %vm859, %v812
      %885 = vst.msk [vmem:[#allocation2 + $0xc8] sm:$0xff] %vm859, %v814
      %886 = vst.msk [vmem:[#allocation2 + $0xd0] sm:$0xff] %vm859, %v816
      %887 = vst.msk [vmem:[#allocation2 + $0xd8] sm:$0xff] %vm859, %v818
      %888 = vst.msk [vmem:[#allocation2 + $0xe0] sm:$0xff] %vm859, %v820
      %889 = vst.msk [vmem:[#allocation2 + $0xe8] sm:$0xff] %vm859, %v822
      %890 = vst.msk [vmem:[#allocation2 + $0xf0] sm:$0xff] %vm859, %v824
      %891 = vst.msk [vmem:[#allocation2 + $0xf8] sm:$0xff] %vm859, %v826
      %v892 = vld [vmem:[%s698 + $0x1] sm:$0xff]
      %v893 = vld [vmem:[%s698 + $0x9] sm:$0xff]
      %v894 = vld [vmem:[%s698 + $0x19] sm:$0xff]
      %v895 = vld [vmem:[%s698 + $0x21] sm:$0xff]
      %v896 = vld [vmem:[%s698 + $0x31] sm:$0xff]
      %v897 = vld [vmem:[%s698 + $0x39] sm:$0xff]
      %v898 = vld [vmem:[%s698 + $0x49] sm:$0xff]
      %v899 = vld [vmem:[%s698 + $0x51] sm:$0xff]
      %v900 = vld [vmem:[%s698 + $0x61] sm:$0xff]
      %v901 = vld [vmem:[%s698 + $0x69] sm:$0xff]
      %v902 = vld [vmem:[%s698 + $0x79] sm:$0xff]
      %v903 = vld [vmem:[%s698 + $0x81] sm:$0xff]
      %v904 = vld [vmem:[%s698 + $0x91] sm:$0xff]
      %v905 = vld [vmem:[%s698 + $0x99] sm:$0xff]
      %v906 = vld [vmem:[%s698 + $0xa9] sm:$0xff]
      %v907 = vld [vmem:[%s698 + $0xb1] sm:$0xff]
      %v908 = vld [vmem:[%s698 + $0xc1] sm:$0xff]
      %v909 = vld [vmem:[%s698 + $0xc9] sm:$0xff]
      %v910 = vld [vmem:[%s698 + $0xd9] sm:$0xff]
      %v911 = vld [vmem:[%s698 + $0xe1] sm:$0xff]
      %v912 = vld [vmem:[%s698 + $0xf1] sm:$0xff]
      %v913 = vld [vmem:[%s698 + $0xf9] sm:$0xff]
      %v914 = vld [vmem:[%s698 + $0x109] sm:$0xff]
      %v915 = vld [vmem:[%s698 + $0x111] sm:$0xff]
      %v916 = vld [vmem:[%s698 + $0x121] sm:$0xff]
      %v917 = vld [vmem:[%s698 + $0x129] sm:$0xff]
      %v918 = vld [vmem:[%s698 + $0x139] sm:$0xff]
      %v919 = vld [vmem:[%s698 + $0x141] sm:$0xff]
      %v920 = vld [vmem:[%s698 + $0x151] sm:$0xff]
      %v921 = vld [vmem:[%s698 + $0x159] sm:$0xff]
      %v922 = vld [vmem:[%s698 + $0x169] sm:$0xff]
      %v923 = vld [vmem:[%s698 + $0x171] sm:$0xff]
      %956 = vrot.lane.b32.xlu0 %v892, 16
      %v957 = vpop.permute.xlu0 %956
      %958 = vrot.lane.b32.xlu0 %v893, 16
      %v959 = vpop.permute.xlu0 %958
      %960 = vrot.lane.b32.xlu0 %v894, 16
      %v961 = vpop.permute.xlu0 %960
      %962 = vrot.lane.b32.xlu0 %v895, 16
      %v963 = vpop.permute.xlu0 %962
      %964 = vrot.lane.b32.xlu0 %v896, 16
      %v965 = vpop.permute.xlu0 %964
      %966 = vrot.lane.b32.xlu0 %v897, 16
      %v967 = vpop.permute.xlu0 %966
      %968 = vrot.lane.b32.xlu0 %v898, 16
      %v969 = vpop.permute.xlu0 %968
      %970 = vrot.lane.b32.xlu0 %v899, 16
      %v971 = vpop.permute.xlu0 %970
      %972 = vrot.lane.b32.xlu0 %v900, 16
      %v973 = vpop.permute.xlu0 %972
      %974 = vrot.lane.b32.xlu0 %v901, 16
      %v975 = vpop.permute.xlu0 %974
      %976 = vrot.lane.b32.xlu0 %v902, 16
      %v977 = vpop.permute.xlu0 %976
      %978 = vrot.lane.b32.xlu0 %v903, 16
      %v979 = vpop.permute.xlu0 %978
      %980 = vrot.lane.b32.xlu0 %v904, 16
      %v981 = vpop.permute.xlu0 %980
      %982 = vrot.lane.b32.xlu0 %v905, 16
      %v983 = vpop.permute.xlu0 %982
      %984 = vrot.lane.b32.xlu0 %v906, 16
      %v985 = vpop.permute.xlu0 %984
      %986 = vrot.lane.b32.xlu0 %v907, 16
      %v987 = vpop.permute.xlu0 %986
      %988 = vrot.lane.b32.xlu0 %v908, 16
      %v989 = vpop.permute.xlu0 %988
      %990 = vrot.lane.b32.xlu0 %v909, 16
      %v991 = vpop.permute.xlu0 %990
      %992 = vrot.lane.b32.xlu0 %v910, 16
      %v993 = vpop.permute.xlu0 %992
      %994 = vrot.lane.b32.xlu0 %v911, 16
      %v995 = vpop.permute.xlu0 %994
      %996 = vrot.lane.b32.xlu0 %v912, 16
      %v997 = vpop.permute.xlu0 %996
      %998 = vrot.lane.b32.xlu0 %v913, 16
      %v999 = vpop.permute.xlu0 %998
      %1000 = vrot.lane.b32.xlu0 %v914, 16
      %v1001 = vpop.permute.xlu0 %1000
      %1002 = vrot.lane.b32.xlu0 %v915, 16
      %v1003 = vpop.permute.xlu0 %1002
      %1004 = vrot.lane.b32.xlu0 %v916, 16
      %v1005 = vpop.permute.xlu0 %1004
      %1006 = vrot.lane.b32.xlu0 %v917, 16
      %v1007 = vpop.permute.xlu0 %1006
      %1008 = vrot.lane.b32.xlu0 %v918, 16
      %v1009 = vpop.permute.xlu0 %1008
      %1010 = vrot.lane.b32.xlu0 %v919, 16
      %v1011 = vpop.permute.xlu0 %1010
      %1012 = vrot.lane.b32.xlu0 %v920, 16
      %v1013 = vpop.permute.xlu0 %1012
      %1014 = vrot.lane.b32.xlu0 %v921, 16
      %v1015 = vpop.permute.xlu0 %1014
      %1016 = vrot.lane.b32.xlu0 %v922, 16
      %v1017 = vpop.permute.xlu0 %1016
      %1018 = vrot.lane.b32.xlu0 %v923, 16
      %v1019 = vpop.permute.xlu0 %1018
      %vm1052 = vcmask 162944
      %1053 = vst.msk [vmem:[#allocation2] sm:$0xff] %vm1052, %v957
      %1054 = vst.msk [vmem:[#allocation2 + $0x8] sm:$0xff] %vm1052, %v959
      %1055 = vst.msk [vmem:[#allocation2 + $0x10] sm:$0xff] %vm1052, %v961
      %1056 = vst.msk [vmem:[#allocation2 + $0x18] sm:$0xff] %vm1052, %v963
      %1057 = vst.msk [vmem:[#allocation2 + $0x20] sm:$0xff] %vm1052, %v965
      %1058 = vst.msk [vmem:[#allocation2 + $0x28] sm:$0xff] %vm1052, %v967
      %1059 = vst.msk [vmem:[#allocation2 + $0x30] sm:$0xff] %vm1052, %v969
      %1060 = vst.msk [vmem:[#allocation2 + $0x38] sm:$0xff] %vm1052, %v971
      %1061 = vst.msk [vmem:[#allocation2 + $0x40] sm:$0xff] %vm1052, %v973
      %1062 = vst.msk [vmem:[#allocation2 + $0x48] sm:$0xff] %vm1052, %v975
      %1063 = vst.msk [vmem:[#allocation2 + $0x50] sm:$0xff] %vm1052, %v977
      %1064 = vst.msk [vmem:[#allocation2 + $0x58] sm:$0xff] %vm1052, %v979
      %1065 = vst.msk [vmem:[#allocation2 + $0x60] sm:$0xff] %vm1052, %v981
      %1066 = vst.msk [vmem:[#allocation2 + $0x68] sm:$0xff] %vm1052, %v983
      %1067 = vst.msk [vmem:[#allocation2 + $0x70] sm:$0xff] %vm1052, %v985
      %1068 = vst.msk [vmem:[#allocation2 + $0x78] sm:$0xff] %vm1052, %v987
      %1069 = vst.msk [vmem:[#allocation2 + $0x80] sm:$0xff] %vm1052, %v989
      %1070 = vst.msk [vmem:[#allocation2 + $0x88] sm:$0xff] %vm1052, %v991
      %1071 = vst.msk [vmem:[#allocation2 + $0x90] sm:$0xff] %vm1052, %v993
      %1072 = vst.msk [vmem:[#allocation2 + $0x98] sm:$0xff] %vm1052, %v995
      %1073 = vst.msk [vmem:[#allocation2 + $0xa0] sm:$0xff] %vm1052, %v997
      %1074 = vst.msk [vmem:[#allocation2 + $0xa8] sm:$0xff] %vm1052, %v999
      %1075 = vst.msk [vmem:[#allocation2 + $0xb0] sm:$0xff] %vm1052, %v1001
      %1076 = vst.msk [vmem:[#allocation2 + $0xb8] sm:$0xff] %vm1052, %v1003
      %1077 = vst.msk [vmem:[#allocation2 + $0xc0] sm:$0xff] %vm1052, %v1005
      %1078 = vst.msk [vmem:[#allocation2 + $0xc8] sm:$0xff] %vm1052, %v1007
      %1079 = vst.msk [vmem:[#allocation2 + $0xd0] sm:$0xff] %vm1052, %v1009
      %1080 = vst.msk [vmem:[#allocation2 + $0xd8] sm:$0xff] %vm1052, %v1011
      %1081 = vst.msk [vmem:[#allocation2 + $0xe0] sm:$0xff] %vm1052, %v1013
      %1082 = vst.msk [vmem:[#allocation2 + $0xe8] sm:$0xff] %vm1052, %v1015
      %1083 = vst.msk [vmem:[#allocation2 + $0xf0] sm:$0xff] %vm1052, %v1017
      %1084 = vst.msk [vmem:[#allocation2 + $0xf8] sm:$0xff] %vm1052, %v1019
      %v1085 = vld [vmem:[%s698 + $0x2] sm:$0xff]
      %v1086 = vld [vmem:[%s698 + $0xa] sm:$0xff]
      %v1087 = vld [vmem:[%s698 + $0x1a] sm:$0xff]
      %v1088 = vld [vmem:[%s698 + $0x22] sm:$0xff]
      %v1089 = vld [vmem:[%s698 + $0x32] sm:$0xff]
      %v1090 = vld [vmem:[%s698 + $0x3a] sm:$0xff]
      %v1091 = vld [vmem:[%s698 + $0x4a] sm:$0xff]
      %v1092 = vld [vmem:[%s698 + $0x52] sm:$0xff]
      %v1093 = vld [vmem:[%s698 + $0x62] sm:$0xff]
      %v1094 = vld [vmem:[%s698 + $0x6a] sm:$0xff]
      %v1095 = vld [vmem:[%s698 + $0x7a] sm:$0xff]
      %v1096 = vld [vmem:[%s698 + $0x82] sm:$0xff]
      %v1097 = vld [vmem:[%s698 + $0x92] sm:$0xff]
      %v1098 = vld [vmem:[%s698 + $0x9a] sm:$0xff]
      %v1099 = vld [vmem:[%s698 + $0xaa] sm:$0xff]
      %v1100 = vld [vmem:[%s698 + $0xb2] sm:$0xff]
      %v1101 = vld [vmem:[%s698 + $0xc2] sm:$0xff]
      %v1102 = vld [vmem:[%s698 + $0xca] sm:$0xff]
      %v1103 = vld [vmem:[%s698 + $0xda] sm:$0xff]
      %v1104 = vld [vmem:[%s698 + $0xe2] sm:$0xff]
      %v1105 = vld [vmem:[%s698 + $0xf2] sm:$0xff]
      %v1106 = vld [vmem:[%s698 + $0xfa] sm:$0xff]
      %v1107 = vld [vmem:[%s698 + $0x10a] sm:$0xff]
      %v1108 = vld [vmem:[%s698 + $0x112] sm:$0xff]
      %v1109 = vld [vmem:[%s698 + $0x122] sm:$0xff]
      %v1110 = vld [vmem:[%s698 + $0x12a] sm:$0xff]
      %v1111 = vld [vmem:[%s698 + $0x13a] sm:$0xff]
      %v1112 = vld [vmem:[%s698 + $0x142] sm:$0xff]
      %v1113 = vld [vmem:[%s698 + $0x152] sm:$0xff]
      %v1114 = vld [vmem:[%s698 + $0x15a] sm:$0xff]
      %v1115 = vld [vmem:[%s698 + $0x16a] sm:$0xff]
      %v1116 = vld [vmem:[%s698 + $0x172] sm:$0xff]
      %1149 = vrot.lane.b32.xlu0 %v1085, 20
      %v1150 = vpop.permute.xlu0 %1149
      %1151 = vrot.lane.b32.xlu0 %v1086, 20
      %v1152 = vpop.permute.xlu0 %1151
      %1153 = vrot.lane.b32.xlu0 %v1087, 20
      %v1154 = vpop.permute.xlu0 %1153
      %1155 = vrot.lane.b32.xlu0 %v1088, 20
      %v1156 = vpop.permute.xlu0 %1155
      %1157 = vrot.lane.b32.xlu0 %v1089, 20
      %v1158 = vpop.permute.xlu0 %1157
      %1159 = vrot.lane.b32.xlu0 %v1090, 20
      %v1160 = vpop.permute.xlu0 %1159
      %1161 = vrot.lane.b32.xlu0 %v1091, 20
      %v1162 = vpop.permute.xlu0 %1161
      %1163 = vrot.lane.b32.xlu0 %v1092, 20
      %v1164 = vpop.permute.xlu0 %1163
      %1165 = vrot.lane.b32.xlu0 %v1093, 20
      %v1166 = vpop.permute.xlu0 %1165
      %1167 = vrot.lane.b32.xlu0 %v1094, 20
      %v1168 = vpop.permute.xlu0 %1167
      %1169 = vrot.lane.b32.xlu0 %v1095, 20
      %v1170 = vpop.permute.xlu0 %1169
      %1171 = vrot.lane.b32.xlu0 %v1096, 20
      %v1172 = vpop.permute.xlu0 %1171
      %1173 = vrot.lane.b32.xlu0 %v1097, 20
      %v1174 = vpop.permute.xlu0 %1173
      %1175 = vrot.lane.b32.xlu0 %v1098, 20
      %v1176 = vpop.permute.xlu0 %1175
      %1177 = vrot.lane.b32.xlu0 %v1099, 20
      %v1178 = vpop.permute.xlu0 %1177
      %1179 = vrot.lane.b32.xlu0 %v1100, 20
      %v1180 = vpop.permute.xlu0 %1179
      %1181 = vrot.lane.b32.xlu0 %v1101, 20
      %v1182 = vpop.permute.xlu0 %1181
      %1183 = vrot.lane.b32.xlu0 %v1102, 20
      %v1184 = vpop.permute.xlu0 %1183
      %1185 = vrot.lane.b32.xlu0 %v1103, 20
      %v1186 = vpop.permute.xlu0 %1185
      %1187 = vrot.lane.b32.xlu0 %v1104, 20
      %v1188 = vpop.permute.xlu0 %1187
      %1189 = vrot.lane.b32.xlu0 %v1105, 20
      %v1190 = vpop.permute.xlu0 %1189
      %1191 = vrot.lane.b32.xlu0 %v1106, 20
      %v1192 = vpop.permute.xlu0 %1191
      %1193 = vrot.lane.b32.xlu0 %v1107, 20
      %v1194 = vpop.permute.xlu0 %1193
      %1195 = vrot.lane.b32.xlu0 %v1108, 20
      %v1196 = vpop.permute.xlu0 %1195
      %1197 = vrot.lane.b32.xlu0 %v1109, 20
      %v1198 = vpop.permute.xlu0 %1197
      %1199 = vrot.lane.b32.xlu0 %v1110, 20
      %v1200 = vpop.permute.xlu0 %1199
      %1201 = vrot.lane.b32.xlu0 %v1111, 20
      %v1202 = vpop.permute.xlu0 %1201
      %1203 = vrot.lane.b32.xlu0 %v1112, 20
      %v1204 = vpop.permute.xlu0 %1203
      %1205 = vrot.lane.b32.xlu0 %v1113, 20
      %v1206 = vpop.permute.xlu0 %1205
      %1207 = vrot.lane.b32.xlu0 %v1114, 20
      %v1208 = vpop.permute.xlu0 %1207
      %1209 = vrot.lane.b32.xlu0 %v1115, 20
      %v1210 = vpop.permute.xlu0 %1209
      %1211 = vrot.lane.b32.xlu0 %v1116, 20
      %v1212 = vpop.permute.xlu0 %1211
      %vm1245 = vcmask 195744
      %1246 = vst.msk [vmem:[#allocation2] sm:$0xff] %vm1245, %v1150
      %1247 = vst.msk [vmem:[#allocation2 + $0x8] sm:$0xff] %vm1245, %v1152
      %1248 = vst.msk [vmem:[#allocation2 + $0x10] sm:$0xff] %vm1245, %v1154
      %1249 = vst.msk [vmem:[#allocation2 + $0x18] sm:$0xff] %vm1245, %v1156
      %1250 = vst.msk [vmem:[#allocation2 + $0x20] sm:$0xff] %vm1245, %v1158
      %1251 = vst.msk [vmem:[#allocation2 + $0x28] sm:$0xff] %vm1245, %v1160
      %1252 = vst.msk [vmem:[#allocation2 + $0x30] sm:$0xff] %vm1245, %v1162
      %1253 = vst.msk [vmem:[#allocation2 + $0x38] sm:$0xff] %vm1245, %v1164
      %1254 = vst.msk [vmem:[#allocation2 + $0x40] sm:$0xff] %vm1245, %v1166
      %1255 = vst.msk [vmem:[#allocation2 + $0x48] sm:$0xff] %vm1245, %v1168
      %1256 = vst.msk [vmem:[#allocation2 + $0x50] sm:$0xff] %vm1245, %v1170
      %1257 = vst.msk [vmem:[#allocation2 + $0x58] sm:$0xff] %vm1245, %v1172
      %1258 = vst.msk [vmem:[#allocation2 + $0x60] sm:$0xff] %vm1245, %v1174
      %1259 = vst.msk [vmem:[#allocation2 + $0x68] sm:$0xff] %vm1245, %v1176
      %1260 = vst.msk [vmem:[#allocation2 + $0x70] sm:$0xff] %vm1245, %v1178
      %1261 = vst.msk [vmem:[#allocation2 + $0x78] sm:$0xff] %vm1245, %v1180
      %1262 = vst.msk [vmem:[#allocation2 + $0x80] sm:$0xff] %vm1245, %v1182
      %1263 = vst.msk [vmem:[#allocation2 + $0x88] sm:$0xff] %vm1245, %v1184
      %1264 = vst.msk [vmem:[#allocation2 + $0x90] sm:$0xff] %vm1245, %v1186
      %1265 = vst.msk [vmem:[#allocation2 + $0x98] sm:$0xff] %vm1245, %v1188
      %1266 = vst.msk [vmem:[#allocation2 + $0xa0] sm:$0xff] %vm1245, %v1190
      %1267 = vst.msk [vmem:[#allocation2 + $0xa8] sm:$0xff] %vm1245, %v1192
      %1268 = vst.msk [vmem:[#allocation2 + $0xb0] sm:$0xff] %vm1245, %v1194
      %1269 = vst.msk [vmem:[#allocation2 + $0xb8] sm:$0xff] %vm1245, %v1196
      %1270 = vst.msk [vmem:[#allocation2 + $0xc0] sm:$0xff] %vm1245, %v1198
      %1271 = vst.msk [vmem:[#allocation2 + $0xc8] sm:$0xff] %vm1245, %v1200
      %1272 = vst.msk [vmem:[#allocation2 + $0xd0] sm:$0xff] %vm1245, %v1202
      %1273 = vst.msk [vmem:[#allocation2 + $0xd8] sm:$0xff] %vm1245, %v1204
      %1274 = vst.msk [vmem:[#allocation2 + $0xe0] sm:$0xff] %vm1245, %v1206
      %1275 = vst.msk [vmem:[#allocation2 + $0xe8] sm:$0xff] %vm1245, %v1208
      %1276 = vst.msk [vmem:[#allocation2 + $0xf0] sm:$0xff] %vm1245, %v1210
      %1277 = vst.msk [vmem:[#allocation2 + $0xf8] sm:$0xff] %vm1245, %v1212
      %s1278 = sadd.s32 %s242, 2
      %s1279 = smul.u32 %s1278, 24
      %s1280 = scalar_lea.vmem %s223, %s1279
      %v1281 = vld [vmem:[%s1280] sm:$0xff]
      %v1282 = vld [vmem:[%s1280 + $0x8] sm:$0xff]
      %v1283 = vld [vmem:[%s1280 + $0x18] sm:$0xff]
      %v1284 = vld [vmem:[%s1280 + $0x20] sm:$0xff]
      %v1285 = vld [vmem:[%s1280 + $0x30] sm:$0xff]
      %v1286 = vld [vmem:[%s1280 + $0x38] sm:$0xff]
      %v1287 = vld [vmem:[%s1280 + $0x48] sm:$0xff]
      %v1288 = vld [vmem:[%s1280 + $0x50] sm:$0xff]
      %v1289 = vld [vmem:[%s1280 + $0x60] sm:$0xff]
      %v1290 = vld [vmem:[%s1280 + $0x68] sm:$0xff]
      %v1291 = vld [vmem:[%s1280 + $0x78] sm:$0xff]
      %v1292 = vld [vmem:[%s1280 + $0x80] sm:$0xff]
      %v1293 = vld [vmem:[%s1280 + $0x90] sm:$0xff]
      %v1294 = vld [vmem:[%s1280 + $0x98] sm:$0xff]
      %v1295 = vld [vmem:[%s1280 + $0xa8] sm:$0xff]
      %v1296 = vld [vmem:[%s1280 + $0xb0] sm:$0xff]
      %v1297 = vld [vmem:[%s1280 + $0xc0] sm:$0xff]
      %v1298 = vld [vmem:[%s1280 + $0xc8] sm:$0xff]
      %v1299 = vld [vmem:[%s1280 + $0xd8] sm:$0xff]
      %v1300 = vld [vmem:[%s1280 + $0xe0] sm:$0xff]
      %v1301 = vld [vmem:[%s1280 + $0xf0] sm:$0xff]
      %v1302 = vld [vmem:[%s1280 + $0xf8] sm:$0xff]
      %v1303 = vld [vmem:[%s1280 + $0x108] sm:$0xff]
      %v1304 = vld [vmem:[%s1280 + $0x110] sm:$0xff]
      %v1305 = vld [vmem:[%s1280 + $0x120] sm:$0xff]
      %v1306 = vld [vmem:[%s1280 + $0x128] sm:$0xff]
      %v1307 = vld [vmem:[%s1280 + $0x138] sm:$0xff]
      %v1308 = vld [vmem:[%s1280 + $0x140] sm:$0xff]
      %v1309 = vld [vmem:[%s1280 + $0x150] sm:$0xff]
      %v1310 = vld [vmem:[%s1280 + $0x158] sm:$0xff]
      %v1311 = vld [vmem:[%s1280 + $0x168] sm:$0xff]
      %v1312 = vld [vmem:[%s1280 + $0x170] sm:$0xff]
      %1345 = vrot.lane.b32.xlu0 %v1281, 24
      %v1346 = vpop.permute.xlu0 %1345
      %1347 = vrot.lane.b32.xlu0 %v1282, 24
      %v1348 = vpop.permute.xlu0 %1347
      %1349 = vrot.lane.b32.xlu0 %v1283, 24
      %v1350 = vpop.permute.xlu0 %1349
      %1351 = vrot.lane.b32.xlu0 %v1284, 24
      %v1352 = vpop.permute.xlu0 %1351
      %1353 = vrot.lane.b32.xlu0 %v1285, 24
      %v1354 = vpop.permute.xlu0 %1353
      %1355 = vrot.lane.b32.xlu0 %v1286, 24
      %v1356 = vpop.permute.xlu0 %1355
      %1357 = vrot.lane.b32.xlu0 %v1287, 24
      %v1358 = vpop.permute.xlu0 %1357
      %1359 = vrot.lane.b32.xlu0 %v1288, 24
      %v1360 = vpop.permute.xlu0 %1359
      %1361 = vrot.lane.b32.xlu0 %v1289, 24
      %v1362 = vpop.permute.xlu0 %1361
      %1363 = vrot.lane.b32.xlu0 %v1290, 24
      %v1364 = vpop.permute.xlu0 %1363
      %1365 = vrot.lane.b32.xlu0 %v1291, 24
      %v1366 = vpop.permute.xlu0 %1365
      %1367 = vrot.lane.b32.xlu0 %v1292, 24
      %v1368 = vpop.permute.xlu0 %1367
      %1369 = vrot.lane.b32.xlu0 %v1293, 24
      %v1370 = vpop.permute.xlu0 %1369
      %1371 = vrot.lane.b32.xlu0 %v1294, 24
      %v1372 = vpop.permute.xlu0 %1371
      %1373 = vrot.lane.b32.xlu0 %v1295, 24
      %v1374 = vpop.permute.xlu0 %1373
      %1375 = vrot.lane.b32.xlu0 %v1296, 24
      %v1376 = vpop.permute.xlu0 %1375
      %1377 = vrot.lane.b32.xlu0 %v1297, 24
      %v1378 = vpop.permute.xlu0 %1377
      %1379 = vrot.lane.b32.xlu0 %v1298, 24
      %v1380 = vpop.permute.xlu0 %1379
      %1381 = vrot.lane.b32.xlu0 %v1299, 24
      %v1382 = vpop.permute.xlu0 %1381
      %1383 = vrot.lane.b32.xlu0 %v1300, 24
      %v1384 = vpop.permute.xlu0 %1383
      %1385 = vrot.lane.b32.xlu0 %v1301, 24
      %v1386 = vpop.permute.xlu0 %1385
      %1387 = vrot.lane.b32.xlu0 %v1302, 24
      %v1388 = vpop.permute.xlu0 %1387
      %1389 = vrot.lane.b32.xlu0 %v1303, 24
      %v1390 = vpop.permute.xlu0 %1389
      %1391 = vrot.lane.b32.xlu0 %v1304, 24
      %v1392 = vpop.permute.xlu0 %1391
      %1393 = vrot.lane.b32.xlu0 %v1305, 24
      %v1394 = vpop.permute.xlu0 %1393
      %1395 = vrot.lane.b32.xlu0 %v1306, 24
      %v1396 = vpop.permute.xlu0 %1395
      %1397 = vrot.lane.b32.xlu0 %v1307, 24
      %v1398 = vpop.permute.xlu0 %1397
      %1399 = vrot.lane.b32.xlu0 %v1308, 24
      %v1400 = vpop.permute.xlu0 %1399
      %1401 = vrot.lane.b32.xlu0 %v1309, 24
      %v1402 = vpop.permute.xlu0 %1401
      %1403 = vrot.lane.b32.xlu0 %v1310, 24
      %v1404 = vpop.permute.xlu0 %1403
      %1405 = vrot.lane.b32.xlu0 %v1311, 24
      %v1406 = vpop.permute.xlu0 %1405
      %1407 = vrot.lane.b32.xlu0 %v1312, 24
      %v1408 = vpop.permute.xlu0 %1407
      %vm1441 = vcmask 228544
      %1442 = vst.msk [vmem:[#allocation2] sm:$0xff] %vm1441, %v1346
      %1443 = vst.msk [vmem:[#allocation2 + $0x8] sm:$0xff] %vm1441, %v1348
      %1444 = vst.msk [vmem:[#allocation2 + $0x10] sm:$0xff] %vm1441, %v1350
      %1445 = vst.msk [vmem:[#allocation2 + $0x18] sm:$0xff] %vm1441, %v1352
      %1446 = vst.msk [vmem:[#allocation2 + $0x20] sm:$0xff] %vm1441, %v1354
      %1447 = vst.msk [vmem:[#allocation2 + $0x28] sm:$0xff] %vm1441, %v1356
      %1448 = vst.msk [vmem:[#allocation2 + $0x30] sm:$0xff] %vm1441, %v1358
      %1449 = vst.msk [vmem:[#allocation2 + $0x38] sm:$0xff] %vm1441, %v1360
      %1450 = vst.msk [vmem:[#allocation2 + $0x40] sm:$0xff] %vm1441, %v1362
      %1451 = vst.msk [vmem:[#allocation2 + $0x48] sm:$0xff] %vm1441, %v1364
      %1452 = vst.msk [vmem:[#allocation2 + $0x50] sm:$0xff] %vm1441, %v1366
      %1453 = vst.msk [vmem:[#allocation2 + $0x58] sm:$0xff] %vm1441, %v1368
      %1454 = vst.msk [vmem:[#allocation2 + $0x60] sm:$0xff] %vm1441, %v1370
      %1455 = vst.msk [vmem:[#allocation2 + $0x68] sm:$0xff] %vm1441, %v1372
      %1456 = vst.msk [vmem:[#allocation2 + $0x70] sm:$0xff] %vm1441, %v1374
      %1457 = vst.msk [vmem:[#allocation2 + $0x78] sm:$0xff] %vm1441, %v1376
      %1458 = vst.msk [vmem:[#allocation2 + $0x80] sm:$0xff] %vm1441, %v1378
      %1459 = vst.msk [vmem:[#allocation2 + $0x88] sm:$0xff] %vm1441, %v1380
      %1460 = vst.msk [vmem:[#allocation2 + $0x90] sm:$0xff] %vm1441, %v1382
      %1461 = vst.msk [vmem:[#allocation2 + $0x98] sm:$0xff] %vm1441, %v1384
      %1462 = vst.msk [vmem:[#allocation2 + $0xa0] sm:$0xff] %vm1441, %v1386
      %1463 = vst.msk [vmem:[#allocation2 + $0xa8] sm:$0xff] %vm1441, %v1388
      %1464 = vst.msk [vmem:[#allocation2 + $0xb0] sm:$0xff] %vm1441, %v1390
      %1465 = vst.msk [vmem:[#allocation2 + $0xb8] sm:$0xff] %vm1441, %v1392
      %1466 = vst.msk [vmem:[#allocation2 + $0xc0] sm:$0xff] %vm1441, %v1394
      %1467 = vst.msk [vmem:[#allocation2 + $0xc8] sm:$0xff] %vm1441, %v1396
      %1468 = vst.msk [vmem:[#allocation2 + $0xd0] sm:$0xff] %vm1441, %v1398
      %1469 = vst.msk [vmem:[#allocation2 + $0xd8] sm:$0xff] %vm1441, %v1400
      %1470 = vst.msk [vmem:[#allocation2 + $0xe0] sm:$0xff] %vm1441, %v1402
      %1471 = vst.msk [vmem:[#allocation2 + $0xe8] sm:$0xff] %vm1441, %v1404
      %1472 = vst.msk [vmem:[#allocation2 + $0xf0] sm:$0xff] %vm1441, %v1406
      %1473 = vst.msk [vmem:[#allocation2 + $0xf8] sm:$0xff] %vm1441, %v1408
      %v1474 = vld [vmem:[%s1280 + $0x1] sm:$0xff]
      %v1475 = vld [vmem:[%s1280 + $0x9] sm:$0xff]
      %v1476 = vld [vmem:[%s1280 + $0x19] sm:$0xff]
      %v1477 = vld [vmem:[%s1280 + $0x21] sm:$0xff]
      %v1478 = vld [vmem:[%s1280 + $0x31] sm:$0xff]
      %v1479 = vld [vmem:[%s1280 + $0x39] sm:$0xff]
      %v1480 = vld [vmem:[%s1280 + $0x49] sm:$0xff]
      %v1481 = vld [vmem:[%s1280 + $0x51] sm:$0xff]
      %v1482 = vld [vmem:[%s1280 + $0x61] sm:$0xff]
      %v1483 = vld [vmem:[%s1280 + $0x69] sm:$0xff]
      %v1484 = vld [vmem:[%s1280 + $0x79] sm:$0xff]
      %v1485 = vld [vmem:[%s1280 + $0x81] sm:$0xff]
      %v1486 = vld [vmem:[%s1280 + $0x91] sm:$0xff]
      %v1487 = vld [vmem:[%s1280 + $0x99] sm:$0xff]
      %v1488 = vld [vmem:[%s1280 + $0xa9] sm:$0xff]
      %v1489 = vld [vmem:[%s1280 + $0xb1] sm:$0xff]
      %v1490 = vld [vmem:[%s1280 + $0xc1] sm:$0xff]
      %v1491 = vld [vmem:[%s1280 + $0xc9] sm:$0xff]
      %v1492 = vld [vmem:[%s1280 + $0xd9] sm:$0xff]
      %v1493 = vld [vmem:[%s1280 + $0xe1] sm:$0xff]
      %v1494 = vld [vmem:[%s1280 + $0xf1] sm:$0xff]
      %v1495 = vld [vmem:[%s1280 + $0xf9] sm:$0xff]
      %v1496 = vld [vmem:[%s1280 + $0x109] sm:$0xff]
      %v1497 = vld [vmem:[%s1280 + $0x111] sm:$0xff]
      %v1498 = vld [vmem:[%s1280 + $0x121] sm:$0xff]
      %v1499 = vld [vmem:[%s1280 + $0x129] sm:$0xff]
      %v1500 = vld [vmem:[%s1280 + $0x139] sm:$0xff]
      %v1501 = vld [vmem:[%s1280 + $0x141] sm:$0xff]
      %v1502 = vld [vmem:[%s1280 + $0x151] sm:$0xff]
      %v1503 = vld [vmem:[%s1280 + $0x159] sm:$0xff]
      %v1504 = vld [vmem:[%s1280 + $0x169] sm:$0xff]
      %v1505 = vld [vmem:[%s1280 + $0x171] sm:$0xff]
      %1538 = vrot.lane.b32.xlu0 %v1474, 28
      %v1539 = vpop.permute.xlu0 %1538
      %1540 = vrot.lane.b32.xlu0 %v1475, 28
      %v1541 = vpop.permute.xlu0 %1540
      %1542 = vrot.lane.b32.xlu0 %v1476, 28
      %v1543 = vpop.permute.xlu0 %1542
      %1544 = vrot.lane.b32.xlu0 %v1477, 28
      %v1545 = vpop.permute.xlu0 %1544
      %1546 = vrot.lane.b32.xlu0 %v1478, 28
      %v1547 = vpop.permute.xlu0 %1546
      %1548 = vrot.lane.b32.xlu0 %v1479, 28
      %v1549 = vpop.permute.xlu0 %1548
      %1550 = vrot.lane.b32.xlu0 %v1480, 28
      %v1551 = vpop.permute.xlu0 %1550
      %1552 = vrot.lane.b32.xlu0 %v1481, 28
      %v1553 = vpop.permute.xlu0 %1552
      %1554 = vrot.lane.b32.xlu0 %v1482, 28
      %v1555 = vpop.permute.xlu0 %1554
      %1556 = vrot.lane.b32.xlu0 %v1483, 28
      %v1557 = vpop.permute.xlu0 %1556
      %1558 = vrot.lane.b32.xlu0 %v1484, 28
      %v1559 = vpop.permute.xlu0 %1558
      %1560 = vrot.lane.b32.xlu0 %v1485, 28
      %v1561 = vpop.permute.xlu0 %1560
      %1562 = vrot.lane.b32.xlu0 %v1486, 28
      %v1563 = vpop.permute.xlu0 %1562
      %1564 = vrot.lane.b32.xlu0 %v1487, 28
      %v1565 = vpop.permute.xlu0 %1564
      %1566 = vrot.lane.b32.xlu0 %v1488, 28
      %v1567 = vpop.permute.xlu0 %1566
      %1568 = vrot.lane.b32.xlu0 %v1489, 28
      %v1569 = vpop.permute.xlu0 %1568
      %1570 = vrot.lane.b32.xlu0 %v1490, 28
      %v1571 = vpop.permute.xlu0 %1570
      %1572 = vrot.lane.b32.xlu0 %v1491, 28
      %v1573 = vpop.permute.xlu0 %1572
      %1574 = vrot.lane.b32.xlu0 %v1492, 28
      %v1575 = vpop.permute.xlu0 %1574
      %1576 = vrot.lane.b32.xlu0 %v1493, 28
      %v1577 = vpop.permute.xlu0 %1576
      %1578 = vrot.lane.b32.xlu0 %v1494, 28
      %v1579 = vpop.permute.xlu0 %1578
      %1580 = vrot.lane.b32.xlu0 %v1495, 28
      %v1581 = vpop.permute.xlu0 %1580
      %1582 = vrot.lane.b32.xlu0 %v1496, 28
      %v1583 = vpop.permute.xlu0 %1582
      %1584 = vrot.lane.b32.xlu0 %v1497, 28
      %v1585 = vpop.permute.xlu0 %1584
      %1586 = vrot.lane.b32.xlu0 %v1498, 28
      %v1587 = vpop.permute.xlu0 %1586
      %1588 = vrot.lane.b32.xlu0 %v1499, 28
      %v1589 = vpop.permute.xlu0 %1588
      %1590 = vrot.lane.b32.xlu0 %v1500, 28
      %v1591 = vpop.permute.xlu0 %1590
      %1592 = vrot.lane.b32.xlu0 %v1501, 28
      %v1593 = vpop.permute.xlu0 %1592
      %1594 = vrot.lane.b32.xlu0 %v1502, 28
      %v1595 = vpop.permute.xlu0 %1594
      %1596 = vrot.lane.b32.xlu0 %v1503, 28
      %v1597 = vpop.permute.xlu0 %1596
      %1598 = vrot.lane.b32.xlu0 %v1504, 28
      %v1599 = vpop.permute.xlu0 %1598
      %1600 = vrot.lane.b32.xlu0 %v1505, 28
      %v1601 = vpop.permute.xlu0 %1600
      %vm1634 = vcmask 261344
      %1635 = vst.msk [vmem:[#allocation2] sm:$0xff] %vm1634, %v1539
      %1636 = vst.msk [vmem:[#allocation2 + $0x8] sm:$0xff] %vm1634, %v1541
      %1637 = vst.msk [vmem:[#allocation2 + $0x10] sm:$0xff] %vm1634, %v1543
      %1638 = vst.msk [vmem:[#allocation2 + $0x18] sm:$0xff] %vm1634, %v1545
      %1639 = vst.msk [vmem:[#allocation2 + $0x20] sm:$0xff] %vm1634, %v1547
      %1640 = vst.msk [vmem:[#allocation2 + $0x28] sm:$0xff] %vm1634, %v1549
      %1641 = vst.msk [vmem:[#allocation2 + $0x30] sm:$0xff] %vm1634, %v1551
      %1642 = vst.msk [vmem:[#allocation2 + $0x38] sm:$0xff] %vm1634, %v1553
      %1643 = vst.msk [vmem:[#allocation2 + $0x40] sm:$0xff] %vm1634, %v1555
      %1644 = vst.msk [vmem:[#allocation2 + $0x48] sm:$0xff] %vm1634, %v1557
      %1645 = vst.msk [vmem:[#allocation2 + $0x50] sm:$0xff] %vm1634, %v1559
      %1646 = vst.msk [vmem:[#allocation2 + $0x58] sm:$0xff] %vm1634, %v1561
      %1647 = vst.msk [vmem:[#allocation2 + $0x60] sm:$0xff] %vm1634, %v1563
      %1648 = vst.msk [vmem:[#allocation2 + $0x68] sm:$0xff] %vm1634, %v1565
      %1649 = vst.msk [vmem:[#allocation2 + $0x70] sm:$0xff] %vm1634, %v1567
      %1650 = vst.msk [vmem:[#allocation2 + $0x78] sm:$0xff] %vm1634, %v1569
      %1651 = vst.msk [vmem:[#allocation2 + $0x80] sm:$0xff] %vm1634, %v1571
      %1652 = vst.msk [vmem:[#allocation2 + $0x88] sm:$0xff] %vm1634, %v1573
      %1653 = vst.msk [vmem:[#allocation2 + $0x90] sm:$0xff] %vm1634, %v1575
      %1654 = vst.msk [vmem:[#allocation2 + $0x98] sm:$0xff] %vm1634, %v1577
      %1655 = vst.msk [vmem:[#allocation2 + $0xa0] sm:$0xff] %vm1634, %v1579
      %1656 = vst.msk [vmem:[#allocation2 + $0xa8] sm:$0xff] %vm1634, %v1581
      %1657 = vst.msk [vmem:[#allocation2 + $0xb0] sm:$0xff] %vm1634, %v1583
      %1658 = vst.msk [vmem:[#allocation2 + $0xb8] sm:$0xff] %vm1634, %v1585
      %1659 = vst.msk [vmem:[#allocation2 + $0xc0] sm:$0xff] %vm1634, %v1587
      %1660 = vst.msk [vmem:[#allocation2 + $0xc8] sm:$0xff] %vm1634, %v1589
      %1661 = vst.msk [vmem:[#allocation2 + $0xd0] sm:$0xff] %vm1634, %v1591
      %1662 = vst.msk [vmem:[#allocation2 + $0xd8] sm:$0xff] %vm1634, %v1593
      %1663 = vst.msk [vmem:[#allocation2 + $0xe0] sm:$0xff] %vm1634, %v1595
      %1664 = vst.msk [vmem:[#allocation2 + $0xe8] sm:$0xff] %vm1634, %v1597
      %1665 = vst.msk [vmem:[#allocation2 + $0xf0] sm:$0xff] %vm1634, %v1599
      %1666 = vst.msk [vmem:[#allocation2 + $0xf8] sm:$0xff] %vm1634, %v1601
      %v1667 = vld [vmem:[%s1280 + $0x2] sm:$0xff]
      %v1668 = vld [vmem:[%s1280 + $0xa] sm:$0xff]
      %v1669 = vld [vmem:[%s1280 + $0x1a] sm:$0xff]
      %v1670 = vld [vmem:[%s1280 + $0x22] sm:$0xff]
      %v1671 = vld [vmem:[%s1280 + $0x32] sm:$0xff]
      %v1672 = vld [vmem:[%s1280 + $0x3a] sm:$0xff]
      %v1673 = vld [vmem:[%s1280 + $0x4a] sm:$0xff]
      %v1674 = vld [vmem:[%s1280 + $0x52] sm:$0xff]
      %v1675 = vld [vmem:[%s1280 + $0x62] sm:$0xff]
      %v1676 = vld [vmem:[%s1280 + $0x6a] sm:$0xff]
      %v1677 = vld [vmem:[%s1280 + $0x7a] sm:$0xff]
      %v1678 = vld [vmem:[%s1280 + $0x82] sm:$0xff]
      %v1679 = vld [vmem:[%s1280 + $0x92] sm:$0xff]
      %v1680 = vld [vmem:[%s1280 + $0x9a] sm:$0xff]
      %v1681 = vld [vmem:[%s1280 + $0xaa] sm:$0xff]
      %v1682 = vld [vmem:[%s1280 + $0xb2] sm:$0xff]
      %v1683 = vld [vmem:[%s1280 + $0xc2] sm:$0xff]
      %v1684 = vld [vmem:[%s1280 + $0xca] sm:$0xff]
      %v1685 = vld [vmem:[%s1280 + $0xda] sm:$0xff]
      %v1686 = vld [vmem:[%s1280 + $0xe2] sm:$0xff]
      %v1687 = vld [vmem:[%s1280 + $0xf2] sm:$0xff]
      %v1688 = vld [vmem:[%s1280 + $0xfa] sm:$0xff]
      %v1689 = vld [vmem:[%s1280 + $0x10a] sm:$0xff]
      %v1690 = vld [vmem:[%s1280 + $0x112] sm:$0xff]
      %v1691 = vld [vmem:[%s1280 + $0x122] sm:$0xff]
      %v1692 = vld [vmem:[%s1280 + $0x12a] sm:$0xff]
      %v1693 = vld [vmem:[%s1280 + $0x13a] sm:$0xff]
      %v1694 = vld [vmem:[%s1280 + $0x142] sm:$0xff]
      %v1695 = vld [vmem:[%s1280 + $0x152] sm:$0xff]
      %v1696 = vld [vmem:[%s1280 + $0x15a] sm:$0xff]
      %v1697 = vld [vmem:[%s1280 + $0x16a] sm:$0xff]
      %v1698 = vld [vmem:[%s1280 + $0x172] sm:$0xff]
      %1731 = vrot.lane.b32.xlu0 %v1667, 32
      %v1732 = vpop.permute.xlu0 %1731
      %1733 = vrot.lane.b32.xlu0 %v1668, 32
      %v1734 = vpop.permute.xlu0 %1733
      %1735 = vrot.lane.b32.xlu0 %v1669, 32
      %v1736 = vpop.permute.xlu0 %1735
      %1737 = vrot.lane.b32.xlu0 %v1670, 32
      %v1738 = vpop.permute.xlu0 %1737
      %1739 = vrot.lane.b32.xlu0 %v1671, 32
      %v1740 = vpop.permute.xlu0 %1739
      %1741 = vrot.lane.b32.xlu0 %v1672, 32
      %v1742 = vpop.permute.xlu0 %1741
      %1743 = vrot.lane.b32.xlu0 %v1673, 32
      %v1744 = vpop.permute.xlu0 %1743
      %1745 = vrot.lane.b32.xlu0 %v1674, 32
      %v1746 = vpop.permute.xlu0 %1745
      %1747 = vrot.lane.b32.xlu0 %v1675, 32
      %v1748 = vpop.permute.xlu0 %1747
      %1749 = vrot.lane.b32.xlu0 %v1676, 32
      %v1750 = vpop.permute.xlu0 %1749
      %1751 = vrot.lane.b32.xlu0 %v1677, 32
      %v1752 = vpop.permute.xlu0 %1751
      %1753 = vrot.lane.b32.xlu0 %v1678, 32
      %v1754 = vpop.permute.xlu0 %1753
      %1755 = vrot.lane.b32.xlu0 %v1679, 32
      %v1756 = vpop.permute.xlu0 %1755
      %1757 = vrot.lane.b32.xlu0 %v1680, 32
      %v1758 = vpop.permute.xlu0 %1757
      %1759 = vrot.lane.b32.xlu0 %v1681, 32
      %v1760 = vpop.permute.xlu0 %1759
      %1761 = vrot.lane.b32.xlu0 %v1682, 32
      %v1762 = vpop.permute.xlu0 %1761
      %1763 = vrot.lane.b32.xlu0 %v1683, 32
      %v1764 = vpop.permute.xlu0 %1763
      %1765 = vrot.lane.b32.xlu0 %v1684, 32
      %v1766 = vpop.permute.xlu0 %1765
      %1767 = vrot.lane.b32.xlu0 %v1685, 32
      %v1768 = vpop.permute.xlu0 %1767
      %1769 = vrot.lane.b32.xlu0 %v1686, 32
      %v1770 = vpop.permute.xlu0 %1769
      %1771 = vrot.lane.b32.xlu0 %v1687, 32
      %v1772 = vpop.permute.xlu0 %1771
      %1773 = vrot.lane.b32.xlu0 %v1688, 32
      %v1774 = vpop.permute.xlu0 %1773
      %1775 = vrot.lane.b32.xlu0 %v1689, 32
      %v1776 = vpop.permute.xlu0 %1775
      %1777 = vrot.lane.b32.xlu0 %v1690, 32
      %v1778 = vpop.permute.xlu0 %1777
      %1779 = vrot.lane.b32.xlu0 %v1691, 32
      %v1780 = vpop.permute.xlu0 %1779
      %1781 = vrot.lane.b32.xlu0 %v1692, 32
      %v1782 = vpop.permute.xlu0 %1781
      %1783 = vrot.lane.b32.xlu0 %v1693, 32
      %v1784 = vpop.permute.xlu0 %1783
      %1785 = vrot.lane.b32.xlu0 %v1694, 32
      %v1786 = vpop.permute.xlu0 %1785
      %1787 = vrot.lane.b32.xlu0 %v1695, 32
      %v1788 = vpop.permute.xlu0 %1787
      %1789 = vrot.lane.b32.xlu0 %v1696, 32
      %v1790 = vpop.permute.xlu0 %1789
      %1791 = vrot.lane.b32.xlu0 %v1697, 32
      %v1792 = vpop.permute.xlu0 %1791
      %1793 = vrot.lane.b32.xlu0 %v1698, 32
      %v1794 = vpop.permute.xlu0 %1793
      %vm1827 = vcmask 294144
      %1828 = vst.msk [vmem:[#allocation2] sm:$0xff] %vm1827, %v1732
      %1829 = vst.msk [vmem:[#allocation2 + $0x8] sm:$0xff] %vm1827, %v1734
      %1830 = vst.msk [vmem:[#allocation2 + $0x10] sm:$0xff] %vm1827, %v1736
      %1831 = vst.msk [vmem:[#allocation2 + $0x18] sm:$0xff] %vm1827, %v1738
      %1832 = vst.msk [vmem:[#allocation2 + $0x20] sm:$0xff] %vm1827, %v1740
      %1833 = vst.msk [vmem:[#allocation2 + $0x28] sm:$0xff] %vm1827, %v1742
      %1834 = vst.msk [vmem:[#allocation2 + $0x30] sm:$0xff] %vm1827, %v1744
      %1835 = vst.msk [vmem:[#allocation2 + $0x38] sm:$0xff] %vm1827, %v1746
      %1836 = vst.msk [vmem:[#allocation2 + $0x40] sm:$0xff] %vm1827, %v1748
      %1837 = vst.msk [vmem:[#allocation2 + $0x48] sm:$0xff] %vm1827, %v1750
      %1838 = vst.msk [vmem:[#allocation2 + $0x50] sm:$0xff] %vm1827, %v1752
      %1839 = vst.msk [vmem:[#allocation2 + $0x58] sm:$0xff] %vm1827, %v1754
      %1840 = vst.msk [vmem:[#allocation2 + $0x60] sm:$0xff] %vm1827, %v1756
      %1841 = vst.msk [vmem:[#allocation2 + $0x68] sm:$0xff] %vm1827, %v1758
      %1842 = vst.msk [vmem:[#allocation2 + $0x70] sm:$0xff] %vm1827, %v1760
      %1843 = vst.msk [vmem:[#allocation2 + $0x78] sm:$0xff] %vm1827, %v1762
      %1844 = vst.msk [vmem:[#allocation2 + $0x80] sm:$0xff] %vm1827, %v1764
      %1845 = vst.msk [vmem:[#allocation2 + $0x88] sm:$0xff] %vm1827, %v1766
      %1846 = vst.msk [vmem:[#allocation2 + $0x90] sm:$0xff] %vm1827, %v1768
      %1847 = vst.msk [vmem:[#allocation2 + $0x98] sm:$0xff] %vm1827, %v1770
      %1848 = vst.msk [vmem:[#allocation2 + $0xa0] sm:$0xff] %vm1827, %v1772
      %1849 = vst.msk [vmem:[#allocation2 + $0xa8] sm:$0xff] %vm1827, %v1774
      %1850 = vst.msk [vmem:[#allocation2 + $0xb0] sm:$0xff] %vm1827, %v1776
      %1851 = vst.msk [vmem:[#allocation2 + $0xb8] sm:$0xff] %vm1827, %v1778
      %1852 = vst.msk [vmem:[#allocation2 + $0xc0] sm:$0xff] %vm1827, %v1780
      %1853 = vst.msk [vmem:[#allocation2 + $0xc8] sm:$0xff] %vm1827, %v1782
      %1854 = vst.msk [vmem:[#allocation2 + $0xd0] sm:$0xff] %vm1827, %v1784
      %1855 = vst.msk [vmem:[#allocation2 + $0xd8] sm:$0xff] %vm1827, %v1786
      %1856 = vst.msk [vmem:[#allocation2 + $0xe0] sm:$0xff] %vm1827, %v1788
      %1857 = vst.msk [vmem:[#allocation2 + $0xe8] sm:$0xff] %vm1827, %v1790
      %1858 = vst.msk [vmem:[#allocation2 + $0xf0] sm:$0xff] %vm1827, %v1792
      %1859 = vst.msk [vmem:[#allocation2 + $0xf8] sm:$0xff] %vm1827, %v1794
      %v1860 = vld [vmem:[#allocation2] sm:$0xff]
      %v1861 = vld [vmem:[#allocation2 + $0x8] sm:$0xff]
      %v1862 = vld [vmem:[#allocation2 + $0x10] sm:$0xff]
      %v1863 = vld [vmem:[#allocation2 + $0x18] sm:$0xff]
      %v1864 = vld [vmem:[#allocation2 + $0x20] sm:$0xff]
      %v1865 = vld [vmem:[#allocation2 + $0x28] sm:$0xff]
      %v1866 = vld [vmem:[#allocation2 + $0x30] sm:$0xff]
      %v1867 = vld [vmem:[#allocation2 + $0x38] sm:$0xff]
      %v1868 = vld [vmem:[#allocation2 + $0x40] sm:$0xff]
      %v1869 = vld [vmem:[#allocation2 + $0x48] sm:$0xff]
      %v1870 = vld [vmem:[#allocation2 + $0x50] sm:$0xff]
      %v1871 = vld [vmem:[#allocation2 + $0x58] sm:$0xff]
      %v1872 = vld [vmem:[#allocation2 + $0x60] sm:$0xff]
      %v1873 = vld [vmem:[#allocation2 + $0x68] sm:$0xff]
      %v1874 = vld [vmem:[#allocation2 + $0x70] sm:$0xff]
      %v1875 = vld [vmem:[#allocation2 + $0x78] sm:$0xff]
      %v1876 = vld [vmem:[#allocation2 + $0x80] sm:$0xff]
      %v1877 = vld [vmem:[#allocation2 + $0x88] sm:$0xff]
      %v1878 = vld [vmem:[#allocation2 + $0x90] sm:$0xff]
      %v1879 = vld [vmem:[#allocation2 + $0x98] sm:$0xff]
      %v1880 = vld [vmem:[#allocation2 + $0xa0] sm:$0xff]
      %v1881 = vld [vmem:[#allocation2 + $0xa8] sm:$0xff]
      %v1882 = vld [vmem:[#allocation2 + $0xb0] sm:$0xff]
      %v1883 = vld [vmem:[#allocation2 + $0xb8] sm:$0xff]
      %v1884 = vld [vmem:[#allocation2 + $0xc0] sm:$0xff]
      %v1885 = vld [vmem:[#allocation2 + $0xc8] sm:$0xff]
      %v1886 = vld [vmem:[#allocation2 + $0xd0] sm:$0xff]
      %v1887 = vld [vmem:[#allocation2 + $0xd8] sm:$0xff]
      %v1888 = vld [vmem:[#allocation2 + $0xe0] sm:$0xff]
      %v1889 = vld [vmem:[#allocation2 + $0xe8] sm:$0xff]
      %v1890 = vld [vmem:[#allocation2 + $0xf0] sm:$0xff]
      %v1891 = vld [vmem:[#allocation2 + $0xf8] sm:$0xff]
      %v1892 = vld [vmem:[%s1] sm:$0xff]
      %v1893 = vld [vmem:[%s1 + $0x8] sm:$0xff]
      %v1894 = vld [vmem:[%s1 + $0x10] sm:$0xff]
      %v1895 = vld [vmem:[%s1 + $0x18] sm:$0xff]
      %v1896 = vld [vmem:[%s1 + $0x20] sm:$0xf]
      %v1897 = vld [vmem:[%s2] sm:$0x1]
      %v1899 = vlaneseq
      %v1900 = vshrl.u32 %v1899, 7
      %v1901 = vsub.s32 0, %v1900
      %v1902 = vrot.slane %v1897, %v1901
      %vm1904 = vcmask 293888
      %v1906 = vsel %vm1904, %v1860, 0
      %v1909 = vsel %vm1904, %v1861, 0
      %v1912 = vsel %vm1904, %v1862, 0
      %v1915 = vsel %vm1904, %v1863, 0
      %v1918 = vsel %vm1904, %v1864, 0
      %v1921 = vsel %vm1904, %v1865, 0
      %v1924 = vsel %vm1904, %v1866, 0
      %v1927 = vsel %vm1904, %v1867, 0
      %v1930 = vsel %vm1904, %v1868, 0
      %v1933 = vsel %vm1904, %v1869, 0
      %v1936 = vsel %vm1904, %v1870, 0
      %v1939 = vsel %vm1904, %v1871, 0
      %v1942 = vsel %vm1904, %v1872, 0
      %v1945 = vsel %vm1904, %v1873, 0
      %v1948 = vsel %vm1904, %v1874, 0
      %v1951 = vsel %vm1904, %v1875, 0
      %v1954 = vsel %vm1904, %v1876, 0
      %v1957 = vsel %vm1904, %v1877, 0
      %v1960 = vsel %vm1904, %v1878, 0
      %v1963 = vsel %vm1904, %v1879, 0
      %v1966 = vsel %vm1904, %v1880, 0
      %v1969 = vsel %vm1904, %v1881, 0
      %v1972 = vsel %vm1904, %v1882, 0
      %v1975 = vsel %vm1904, %v1883, 0
      %v1978 = vsel %vm1904, %v1884, 0
      %v1981 = vsel %vm1904, %v1885, 0
      %v1984 = vsel %vm1904, %v1886, 0
      %v1987 = vsel %vm1904, %v1887, 0
      %v1990 = vsel %vm1904, %v1888, 0
      %v1993 = vsel %vm1904, %v1889, 0
      %v1996 = vsel %vm1904, %v1890, 0
      %v1999 = vsel %vm1904, %v1891, 0
      %vm2001 = vcmask 1043456
      %v2003 = vsel %vm2001, %v1896, 0
      %2005 = vmatprep.subr.mxu0 0.0
      %2006 = vmatpush1.msra.mxu0 %v1892
      %2007 = vmatprep.subr.mxu0 0.0
      %2008 = vmatpush1.msra.mxu0 %v1893
      %2009 = vmatprep.subr.mxu0 0.0
      %2010 = vmatpush1.msra.mxu0 %v1894
      %2011 = vmatprep.subr.mxu0 0.0
      %2012 = vmatpush1.msra.mxu0 %v1895
      %2013 = vmatprep.subr.mxu0 0.0
      %2014 = vmatpush1.msra.mxu0 %v2003
      %2015 = vmatprep.subr.mxu0 0.0
      %2016 = vmatpush1.msra.mxu0 0.0
      %2017 = vmatprep.subr.mxu0 0.0
      %2018 = vmatpush1.msra.mxu0 0.0
      %2019 = vmatprep.subr.mxu0 0.0
      %2020 = vmatpush1.msra.mxu0 0.0
      %2021 = vmatprep.subr.mxu0 0.0
      %2022 = vmatpush1.msra.mxu0 0.0
      %2023 = vmatprep.subr.mxu0 0.0
      %2024 = vmatpush1.msra.mxu0 0.0
      %2025 = vmatprep.subr.mxu0 0.0
      %2026 = vmatpush1.msra.mxu0 0.0
      %2027 = vmatprep.subr.mxu0 0.0
      %2028 = vmatpush1.msra.mxu0 0.0
      %2029 = vmatprep.subr.mxu0 0.0
      %2030 = vmatpush1.msra.mxu0 0.0
      %2031 = vmatprep.subr.mxu0 0.0
      %2032 = vmatpush1.msra.mxu0 0.0
      %2033 = vmatprep.subr.mxu0 0.0
      %2034 = vmatpush1.msra.mxu0 0.0
      %2035 = vmatprep.subr.mxu0 0.0
      %2036 = vmatpush1.msra.mxu0 0.0
      %2037 = vmatprep.subr.mxu0 0.0
      %2038 = vmatpush1.msra.mxu0 0.0
      %2039 = vmatprep.subr.mxu0 0.0
      %2040 = vmatpush1.msra.mxu0 0.0
      %2041 = vmatprep.subr.mxu0 0.0
      %2042 = vmatpush1.msra.mxu0 0.0
      %2043 = vmatprep.subr.mxu0 0.0
      %2044 = vmatpush1.msra.mxu0 0.0
      %2045 = vmatprep.subr.mxu0 0.0
      %2046 = vmatpush1.msra.mxu0 0.0
      %2047 = vmatprep.subr.mxu0 0.0
      %2048 = vmatpush1.msra.mxu0 0.0
      %2049 = vmatprep.subr.mxu0 0.0
      %2050 = vmatpush1.msra.mxu0 0.0
      %2051 = vmatprep.subr.mxu0 0.0
      %2052 = vmatpush1.msra.mxu0 0.0
      %2053 = vmatprep.subr.mxu0 0.0
      %2054 = vmatpush1.msra.mxu0 0.0
      %2055 = vmatprep.subr.mxu0 0.0
      %2056 = vmatpush1.msra.mxu0 0.0
      %2057 = vmatprep.subr.mxu0 0.0
      %2058 = vmatpush1.msra.mxu0 0.0
      %2059 = vmatprep.subr.mxu0 0.0
      %2060 = vmatpush1.msra.mxu0 0.0
      %2061 = vmatprep.subr.mxu0 0.0
      %2062 = vmatpush1.msra.mxu0 0.0
      %2063 = vmatprep.subr.mxu0 0.0
      %2064 = vmatpush1.msra.mxu0 0.0
      %2065 = vmatprep.subr.mxu0 0.0
      %2066 = vmatpush1.msra.mxu0 0.0
      %2067 = vmatprep.subr.mxu0 0.0
      %2068 = vmatpush1.msra.mxu0 0.0
      %2069 = vmatprep.mubr.f32.mxu0 0.0
      %2070 = vmatmul.mubr.f32.gmra.mrb[0].mxu0 %v1906
      %v2071 = vpop.f32.mrb[0].mxu0
      %v2072 = vadd.f32 %v1902, %v2071
      %v2073 = vpop.f32.mrb[0].mxu0
      %2074 = vmatprep.mubr.f32.mxu0 0.0
      %2075 = vmatmul.mubr.f32.gmra.mrb[0].mxu0 %v1909
      %v2076 = vpop.f32.mrb[0].mxu0
      %v2077 = vadd.f32 %v1902, %v2076
      %v2078 = vpop.f32.mrb[0].mxu0
      %2079 = vmatprep.mubr.f32.mxu0 0.0
      %2080 = vmatmul.mubr.f32.gmra.mrb[0].mxu0 %v1912
      %v2081 = vpop.f32.mrb[0].mxu0
      %v2082 = vadd.f32 %v1902, %v2081
      %v2083 = vpop.f32.mrb[0].mxu0
      %2084 = vmatprep.mubr.f32.mxu0 0.0
      %2085 = vmatmul.mubr.f32.gmra.mrb[0].mxu0 %v1915
      %v2086 = vpop.f32.mrb[0].mxu0
      %v2087 = vadd.f32 %v1902, %v2086
      %v2088 = vpop.f32.mrb[0].mxu0
      %2089 = vmatprep.mubr.f32.mxu0 0.0
      %2090 = vmatmul.mubr.f32.gmra.mrb[0].mxu0 %v1918
      %v2091 = vpop.f32.mrb[0].mxu0
      %v2092 = vadd.f32 %v1902, %v2091
      %v2093 = vpop.f32.mrb[0].mxu0
      %2094 = vmatprep.mubr.f32.mxu0 0.0
      %2095 = vmatmul.mubr.f32.gmra.mrb[0].mxu0 %v1921
      %v2096 = vpop.f32.mrb[0].mxu0
      %v2097 = vadd.f32 %v1902, %v2096
      %v2098 = vpop.f32.mrb[0].mxu0
      %2099 = vmatprep.mubr.f32.mxu0 0.0
      %2100 = vmatmul.mubr.f32.gmra.mrb[0].mxu0 %v1924
      %v2101 = vpop.f32.mrb[0].mxu0
      %v2102 = vadd.f32 %v1902, %v2101
      %v2103 = vpop.f32.mrb[0].mxu0
      %2104 = vmatprep.mubr.f32.mxu0 0.0
      %2105 = vmatmul.mubr.f32.gmra.mrb[0].mxu0 %v1927
      %v2106 = vpop.f32.mrb[0].mxu0
      %v2107 = vadd.f32 %v1902, %v2106
      %v2108 = vpop.f32.mrb[0].mxu0
      %2109 = vmatprep.mubr.f32.mxu0 0.0
      %2110 = vmatmul.mubr.f32.gmra.mrb[0].mxu0 %v1930
      %v2111 = vpop.f32.mrb[0].mxu0
      %v2112 = vadd.f32 %v1902, %v2111
      %v2113 = vpop.f32.mrb[0].mxu0
      %2114 = vmatprep.mubr.f32.mxu0 0.0
      %2115 = vmatmul.mubr.f32.gmra.mrb[0].mxu0 %v1933
      %v2116 = vpop.f32.mrb[0].mxu0
      %v2117 = vadd.f32 %v1902, %v2116
      %v2118 = vpop.f32.mrb[0].mxu0
      %2119 = vmatprep.mubr.f32.mxu0 0.0
      %2120 = vmatmul.mubr.f32.gmra.mrb[0].mxu0 %v1936
      %v2121 = vpop.f32.mrb[0].mxu0
      %v2122 = vadd.f32 %v1902, %v2121
      %v2123 = vpop.f32.mrb[0].mxu0
      %2124 = vmatprep.mubr.f32.mxu0 0.0
      %2125 = vmatmul.mubr.f32.gmra.mrb[0].mxu0 %v1939
      %v2126 = vpop.f32.mrb[0].mxu0
      %v2127 = vadd.f32 %v1902, %v2126
      %v2128 = vpop.f32.mrb[0].mxu0
      %2129 = vmatprep.mubr.f32.mxu0 0.0
      %2130 = vmatmul.mubr.f32.gmra.mrb[0].mxu0 %v1942
      %v2131 = vpop.f32.mrb[0].mxu0
      %v2132 = vadd.f32 %v1902, %v2131
      %v2133 = vpop.f32.mrb[0].mxu0
      %2134 = vmatprep.mubr.f32.mxu0 0.0
      %2135 = vmatmul.mubr.f32.gmra.mrb[0].mxu0 %v1945
      %v2136 = vpop.f32.mrb[0].mxu0
      %v2137 = vadd.f32 %v1902, %v2136
      %v2138 = vpop.f32.mrb[0].mxu0
      %2139 = vmatprep.mubr.f32.mxu0 0.0
      %2140 = vmatmul.mubr.f32.gmra.mrb[0].mxu0 %v1948
      %v2141 = vpop.f32.mrb[0].mxu0
      %v2142 = vadd.f32 %v1902, %v2141
      %v2143 = vpop.f32.mrb[0].mxu0
      %2144 = vmatprep.mubr.f32.mxu0 0.0
      %2145 = vmatmul.mubr.f32.gmra.mrb[0].mxu0 %v1951
      %v2146 = vpop.f32.mrb[0].mxu0
      %v2147 = vadd.f32 %v1902, %v2146
      %v2148 = vpop.f32.mrb[0].mxu0
      %2149 = vmatprep.mubr.f32.mxu0 0.0
      %2150 = vmatmul.mubr.f32.gmra.mrb[0].mxu0 %v1954
      %v2151 = vpop.f32.mrb[0].mxu0
      %v2152 = vadd.f32 %v1902, %v2151
      %v2153 = vpop.f32.mrb[0].mxu0
      %2154 = vmatprep.mubr.f32.mxu0 0.0
      %2155 = vmatmul.mubr.f32.gmra.mrb[0].mxu0 %v1957
      %v2156 = vpop.f32.mrb[0].mxu0
      %v2157 = vadd.f32 %v1902, %v2156
      %v2158 = vpop.f32.mrb[0].mxu0
      %2159 = vmatprep.mubr.f32.mxu0 0.0
      %2160 = vmatmul.mubr.f32.gmra.mrb[0].mxu0 %v1960
      %v2161 = vpop.f32.mrb[0].mxu0
      %v2162 = vadd.f32 %v1902, %v2161
      %v2163 = vpop.f32.mrb[0].mxu0
      %2164 = vmatprep.mubr.f32.mxu0 0.0
      %2165 = vmatmul.mubr.f32.gmra.mrb[0].mxu0 %v1963
      %v2166 = vpop.f32.mrb[0].mxu0
      %v2167 = vadd.f32 %v1902, %v2166
      %v2168 = vpop.f32.mrb[0].mxu0
      %2169 = vmatprep.mubr.f32.mxu0 0.0
      %2170 = vmatmul.mubr.f32.gmra.mrb[0].mxu0 %v1966
      %v2171 = vpop.f32.mrb[0].mxu0
      %v2172 = vadd.f32 %v1902, %v2171
      %v2173 = vpop.f32.mrb[0].mxu0
      %2174 = vmatprep.mubr.f32.mxu0 0.0
      %2175 = vmatmul.mubr.f32.gmra.mrb[0].mxu0 %v1969
      %v2176 = vpop.f32.mrb[0].mxu0
      %v2177 = vadd.f32 %v1902, %v2176
      %v2178 = vpop.f32.mrb[0].mxu0
      %2179 = vmatprep.mubr.f32.mxu0 0.0
      %2180 = vmatmul.mubr.f32.gmra.mrb[0].mxu0 %v1972
      %v2181 = vpop.f32.mrb[0].mxu0
      %v2182 = vadd.f32 %v1902, %v2181
      %v2183 = vpop.f32.mrb[0].mxu0
      %2184 = vmatprep.mubr.f32.mxu0 0.0
      %2185 = vmatmul.mubr.f32.gmra.mrb[0].mxu0 %v1975
      %v2186 = vpop.f32.mrb[0].mxu0
      %v2187 = vadd.f32 %v1902, %v2186
      %v2188 = vpop.f32.mrb[0].mxu0
      %2189 = vmatprep.mubr.f32.mxu0 0.0
      %2190 = vmatmul.mubr.f32.gmra.mrb[0].mxu0 %v1978
      %v2191 = vpop.f32.mrb[0].mxu0
      %v2192 = vadd.f32 %v1902, %v2191
      %v2193 = vpop.f32.mrb[0].mxu0
      %2194 = vmatprep.mubr.f32.mxu0 0.0
      %2195 = vmatmul.mubr.f32.gmra.mrb[0].mxu0 %v1981
      %v2196 = vpop.f32.mrb[0].mxu0
      %v2197 = vadd.f32 %v1902, %v2196
      %v2198 = vpop.f32.mrb[0].mxu0
      %2199 = vmatprep.mubr.f32.mxu0 0.0
      %2200 = vmatmul.mubr.f32.gmra.mrb[0].mxu0 %v1984
      %v2201 = vpop.f32.mrb[0].mxu0
      %v2202 = vadd.f32 %v1902, %v2201
      %v2203 = vpop.f32.mrb[0].mxu0
      %2204 = vmatprep.mubr.f32.mxu0 0.0
      %2205 = vmatmul.mubr.f32.gmra.mrb[0].mxu0 %v1987
      %v2206 = vpop.f32.mrb[0].mxu0
      %v2207 = vadd.f32 %v1902, %v2206
      %v2208 = vpop.f32.mrb[0].mxu0
      %2209 = vmatprep.mubr.f32.mxu0 0.0
      %2210 = vmatmul.mubr.f32.gmra.mrb[0].mxu0 %v1990
      %v2211 = vpop.f32.mrb[0].mxu0
      %v2212 = vadd.f32 %v1902, %v2211
      %v2213 = vpop.f32.mrb[0].mxu0
      %2214 = vmatprep.mubr.f32.mxu0 0.0
      %2215 = vmatmul.mubr.f32.gmra.mrb[0].mxu0 %v1993
      %v2216 = vpop.f32.mrb[0].mxu0
      %v2217 = vadd.f32 %v1902, %v2216
      %v2218 = vpop.f32.mrb[0].mxu0
      %2219 = vmatprep.mubr.f32.mxu0 0.0
      %2220 = vmatmul.mubr.f32.gmra.mrb[0].mxu0 %v1996
      %v2221 = vpop.f32.mrb[0].mxu0
      %v2222 = vadd.f32 %v1902, %v2221
      %v2223 = vpop.f32.mrb[0].mxu0
      %2224 = vmatprep.mubr.f32.mxu0 0.0
      %2225 = vmatmul.mubr.f32.gmra.mrb[0].mxu0 %v1999
      %v2226 = vpop.f32.mrb[0].mxu0
      %v2227 = vadd.f32 %v1902, %v2226
      %v2228 = vpop.f32.mrb[0].mxu0
      %2229 = vdwg.mxu0
      %v2230 = vxor.u32 %v2072, 2147483648
      %v2231 = vxor.u32 %v2077, 2147483648
      %v2232 = vxor.u32 %v2082, 2147483648
      %v2233 = vxor.u32 %v2087, 2147483648
      %v2234 = vxor.u32 %v2092, 2147483648
      %v2235 = vxor.u32 %v2097, 2147483648
      %v2236 = vxor.u32 %v2102, 2147483648
      %v2237 = vxor.u32 %v2107, 2147483648
      %v2238 = vxor.u32 %v2112, 2147483648
      %v2239 = vxor.u32 %v2117, 2147483648
      %v2240 = vxor.u32 %v2122, 2147483648
      %v2241 = vxor.u32 %v2127, 2147483648
      %v2242 = vxor.u32 %v2132, 2147483648
      %v2243 = vxor.u32 %v2137, 2147483648
      %v2244 = vxor.u32 %v2142, 2147483648
      %v2245 = vxor.u32 %v2147, 2147483648
      %v2246 = vxor.u32 %v2152, 2147483648
      %v2247 = vxor.u32 %v2157, 2147483648
      %v2248 = vxor.u32 %v2162, 2147483648
      %v2249 = vxor.u32 %v2167, 2147483648
      %v2250 = vxor.u32 %v2172, 2147483648
      %v2251 = vxor.u32 %v2177, 2147483648
      %v2252 = vxor.u32 %v2182, 2147483648
      %v2253 = vxor.u32 %v2187, 2147483648
      %v2254 = vxor.u32 %v2192, 2147483648
      %v2255 = vxor.u32 %v2197, 2147483648
      %v2256 = vxor.u32 %v2202, 2147483648
      %v2257 = vxor.u32 %v2207, 2147483648
      %v2258 = vxor.u32 %v2212, 2147483648
      %v2259 = vxor.u32 %v2217, 2147483648
      %v2260 = vxor.u32 %v2222, 2147483648
      %v2261 = vxor.u32 %v2227, 2147483648
      %v2262 = vmul.f32 %v2230, 1.442695
      %v2263 = vpow.pop %v2262
      %v2264 = vmul.f32 %v2231, 1.442695
      %v2265 = vpow.pop %v2264
      %v2266 = vmul.f32 %v2232, 1.442695
      %v2267 = vpow.pop %v2266
      %v2268 = vmul.f32 %v2233, 1.442695
      %v2269 = vpow.pop %v2268
      %v2270 = vmul.f32 %v2234, 1.442695
      %v2271 = vpow.pop %v2270
      %v2272 = vmul.f32 %v2235, 1.442695
      %v2273 = vpow.pop %v2272
      %v2274 = vmul.f32 %v2236, 1.442695
      %v2275 = vpow.pop %v2274
      %v2276 = vmul.f32 %v2237, 1.442695
      %v2277 = vpow.pop %v2276
      %v2278 = vmul.f32 %v2238, 1.442695
      %v2279 = vpow.pop %v2278
      %v2280 = vmul.f32 %v2239, 1.442695
      %v2281 = vpow.pop %v2280
      %v2282 = vmul.f32 %v2240, 1.442695
      %v2283 = vpow.pop %v2282
      %v2284 = vmul.f32 %v2241, 1.442695
      %v2285 = vpow.pop %v2284
      %v2286 = vmul.f32 %v2242, 1.442695
      %v2287 = vpow.pop %v2286
      %v2288 = vmul.f32 %v2243, 1.442695
      %v2289 = vpow.pop %v2288
      %v2290 = vmul.f32 %v2244, 1.442695
      %v2291 = vpow.pop %v2290
      %v2292 = vmul.f32 %v2245, 1.442695
      %v2293 = vpow.pop %v2292
      %v2294 = vmul.f32 %v2246, 1.442695
      %v2295 = vpow.pop %v2294
      %v2296 = vmul.f32 %v2247, 1.442695
      %v2297 = vpow.pop %v2296
      %v2298 = vmul.f32 %v2248, 1.442695
      %v2299 = vpow.pop %v2298
      %v2300 = vmul.f32 %v2249, 1.442695
      %v2301 = vpow.pop %v2300
      %v2302 = vmul.f32 %v2250, 1.442695
      %v2303 = vpow.pop %v2302
      %v2304 = vmul.f32 %v2251, 1.442695
      %v2305 = vpow.pop %v2304
      %v2306 = vmul.f32 %v2252, 1.442695
      %v2307 = vpow.pop %v2306
      %v2308 = vmul.f32 %v2253, 1.442695
      %v2309 = vpow.pop %v2308
      %v2310 = vmul.f32 %v2254, 1.442695
      %v2311 = vpow.pop %v2310
      %v2312 = vmul.f32 %v2255, 1.442695
      %v2313 = vpow.pop %v2312
      %v2314 = vmul.f32 %v2256, 1.442695
      %v2315 = vpow.pop %v2314
      %v2316 = vmul.f32 %v2257, 1.442695
      %v2317 = vpow.pop %v2316
      %v2318 = vmul.f32 %v2258, 1.442695
      %v2319 = vpow.pop %v2318
      %v2320 = vmul.f32 %v2259, 1.442695
      %v2321 = vpow.pop %v2320
      %v2322 = vmul.f32 %v2260, 1.442695
      %v2323 = vpow.pop %v2322
      %v2324 = vmul.f32 %v2261, 1.442695
      %v2325 = vpow.pop %v2324
      %v2326 = vadd.f32 %v2263, 1.0
      %v2327 = vadd.f32 %v2265, 1.0
      %v2328 = vadd.f32 %v2267, 1.0
      %v2329 = vadd.f32 %v2269, 1.0
      %v2330 = vadd.f32 %v2271, 1.0
      %v2331 = vadd.f32 %v2273, 1.0
      %v2332 = vadd.f32 %v2275, 1.0
      %v2333 = vadd.f32 %v2277, 1.0
      %v2334 = vadd.f32 %v2279, 1.0
      %v2335 = vadd.f32 %v2281, 1.0
      %v2336 = vadd.f32 %v2283, 1.0
      %v2337 = vadd.f32 %v2285, 1.0
      %v2338 = vadd.f32 %v2287, 1.0
      %v2339 = vadd.f32 %v2289, 1.0
      %v2340 = vadd.f32 %v2291, 1.0
      %v2341 = vadd.f32 %v2293, 1.0
      %v2342 = vadd.f32 %v2295, 1.0
      %v2343 = vadd.f32 %v2297, 1.0
      %v2344 = vadd.f32 %v2299, 1.0
      %v2345 = vadd.f32 %v2301, 1.0
      %v2346 = vadd.f32 %v2303, 1.0
      %v2347 = vadd.f32 %v2305, 1.0
      %v2348 = vadd.f32 %v2307, 1.0
      %v2349 = vadd.f32 %v2309, 1.0
      %v2350 = vadd.f32 %v2311, 1.0
      %v2351 = vadd.f32 %v2313, 1.0
      %v2352 = vadd.f32 %v2315, 1.0
      %v2353 = vadd.f32 %v2317, 1.0
      %v2354 = vadd.f32 %v2319, 1.0
      %v2355 = vadd.f32 %v2321, 1.0
      %v2356 = vadd.f32 %v2323, 1.0
      %v2357 = vadd.f32 %v2325, 1.0
      %v2358 = vrcp.pop %v2326
      %v2359 = vmul.f32 1.0, %v2358
      %v2360 = vrcp.pop %v2327
      %v2361 = vmul.f32 1.0, %v2360
      %v2362 = vrcp.pop %v2328
      %v2363 = vmul.f32 1.0, %v2362
      %v2364 = vrcp.pop %v2329
      %v2365 = vmul.f32 1.0, %v2364
      %v2366 = vrcp.pop %v2330
      %v2367 = vmul.f32 1.0, %v2366
      %v2368 = vrcp.pop %v2331
      %v2369 = vmul.f32 1.0, %v2368
      %v2370 = vrcp.pop %v2332
      %v2371 = vmul.f32 1.0, %v2370
      %v2372 = vrcp.pop %v2333
      %v2373 = vmul.f32 1.0, %v2372
      %v2374 = vrcp.pop %v2334
      %v2375 = vmul.f32 1.0, %v2374
      %v2376 = vrcp.pop %v2335
      %v2377 = vmul.f32 1.0, %v2376
      %v2378 = vrcp.pop %v2336
      %v2379 = vmul.f32 1.0, %v2378
      %v2380 = vrcp.pop %v2337
      %v2381 = vmul.f32 1.0, %v2380
      %v2382 = vrcp.pop %v2338
      %v2383 = vmul.f32 1.0, %v2382
      %v2384 = vrcp.pop %v2339
      %v2385 = vmul.f32 1.0, %v2384
      %v2386 = vrcp.pop %v2340
      %v2387 = vmul.f32 1.0, %v2386
      %v2388 = vrcp.pop %v2341
      %v2389 = vmul.f32 1.0, %v2388
      %v2390 = vrcp.pop %v2342
      %v2391 = vmul.f32 1.0, %v2390
      %v2392 = vrcp.pop %v2343
      %v2393 = vmul.f32 1.0, %v2392
      %v2394 = vrcp.pop %v2344
      %v2395 = vmul.f32 1.0, %v2394
      %v2396 = vrcp.pop %v2345
      %v2397 = vmul.f32 1.0, %v2396
      %v2398 = vrcp.pop %v2346
      %v2399 = vmul.f32 1.0, %v2398
      %v2400 = vrcp.pop %v2347
      %v2401 = vmul.f32 1.0, %v2400
      %v2402 = vrcp.pop %v2348
      %v2403 = vmul.f32 1.0, %v2402
      %v2404 = vrcp.pop %v2349
      %v2405 = vmul.f32 1.0, %v2404
      %v2406 = vrcp.pop %v2350
      %v2407 = vmul.f32 1.0, %v2406
      %v2408 = vrcp.pop %v2351
      %v2409 = vmul.f32 1.0, %v2408
      %v2410 = vrcp.pop %v2352
      %v2411 = vmul.f32 1.0, %v2410
      %v2412 = vrcp.pop %v2353
      %v2413 = vmul.f32 1.0, %v2412
      %v2414 = vrcp.pop %v2354
      %v2415 = vmul.f32 1.0, %v2414
      %v2416 = vrcp.pop %v2355
      %v2417 = vmul.f32 1.0, %v2416
      %v2418 = vrcp.pop %v2356
      %v2419 = vmul.f32 1.0, %v2418
      %v2420 = vrcp.pop %v2357
      %v2421 = vmul.f32 1.0, %v2420
      %v2422 = vmul.f32 %v2072, %v2359
      %v2423 = vmul.f32 %v2077, %v2361
      %v2424 = vmul.f32 %v2082, %v2363
      %v2425 = vmul.f32 %v2087, %v2365
      %v2426 = vmul.f32 %v2092, %v2367
      %v2427 = vmul.f32 %v2097, %v2369
      %v2428 = vmul.f32 %v2102, %v2371
      %v2429 = vmul.f32 %v2107, %v2373
      %v2430 = vmul.f32 %v2112, %v2375
      %v2431 = vmul.f32 %v2117, %v2377
      %v2432 = vmul.f32 %v2122, %v2379
      %v2433 = vmul.f32 %v2127, %v2381
      %v2434 = vmul.f32 %v2132, %v2383
      %v2435 = vmul.f32 %v2137, %v2385
      %v2436 = vmul.f32 %v2142, %v2387
      %v2437 = vmul.f32 %v2147, %v2389
      %v2438 = vmul.f32 %v2152, %v2391
      %v2439 = vmul.f32 %v2157, %v2393
      %v2440 = vmul.f32 %v2162, %v2395
      %v2441 = vmul.f32 %v2167, %v2397
      %v2442 = vmul.f32 %v2172, %v2399
      %v2443 = vmul.f32 %v2177, %v2401
      %v2444 = vmul.f32 %v2182, %v2403
      %v2445 = vmul.f32 %v2187, %v2405
      %v2446 = vmul.f32 %v2192, %v2407
      %v2447 = vmul.f32 %v2197, %v2409
      %v2448 = vmul.f32 %v2202, %v2411
      %v2449 = vmul.f32 %v2207, %v2413
      %v2450 = vmul.f32 %v2212, %v2415
      %v2451 = vmul.f32 %v2217, %v2417
      %v2452 = vmul.f32 %v2222, %v2419
      %v2453 = vmul.f32 %v2227, %v2421
      %2454 = vst [vmem:[%s233] sm:$0xff] %v2422
      %2455 = vst [vmem:[%s233 + $0x8] sm:$0xff] %v2423
      %2456 = vst [vmem:[%s233 + $0x10] sm:$0xff] %v2424
      %2457 = vst [vmem:[%s233 + $0x18] sm:$0xff] %v2425
      %2458 = vst [vmem:[%s233 + $0x20] sm:$0xff] %v2426
      %2459 = vst [vmem:[%s233 + $0x28] sm:$0xff] %v2427
      %2460 = vst [vmem:[%s233 + $0x30] sm:$0xff] %v2428
      %2461 = vst [vmem:[%s233 + $0x38] sm:$0xff] %v2429
      %2462 = vst [vmem:[%s233 + $0x40] sm:$0xff] %v2430
      %2463 = vst [vmem:[%s233 + $0x48] sm:$0xff] %v2431
      %2464 = vst [vmem:[%s233 + $0x50] sm:$0xff] %v2432
      %2465 = vst [vmem:[%s233 + $0x58] sm:$0xff] %v2433
      %2466 = vst [vmem:[%s233 + $0x60] sm:$0xff] %v2434
      %2467 = vst [vmem:[%s233 + $0x68] sm:$0xff] %v2435
      %2468 = vst [vmem:[%s233 + $0x70] sm:$0xff] %v2436
      %2469 = vst [vmem:[%s233 + $0x78] sm:$0xff] %v2437
      %2470 = vst [vmem:[%s233 + $0x80] sm:$0xff] %v2438
      %2471 = vst [vmem:[%s233 + $0x88] sm:$0xff] %v2439
      %2472 = vst [vmem:[%s233 + $0x90] sm:$0xff] %v2440
      %2473 = vst [vmem:[%s233 + $0x98] sm:$0xff] %v2441
      %2474 = vst [vmem:[%s233 + $0xa0] sm:$0xff] %v2442
      %2475 = vst [vmem:[%s233 + $0xa8] sm:$0xff] %v2443
      %2476 = vst [vmem:[%s233 + $0xb0] sm:$0xff] %v2444
      %2477 = vst [vmem:[%s233 + $0xb8] sm:$0xff] %v2445
      %2478 = vst [vmem:[%s233 + $0xc0] sm:$0xff] %v2446
      %2479 = vst [vmem:[%s233 + $0xc8] sm:$0xff] %v2447
      %2480 = vst [vmem:[%s233 + $0xd0] sm:$0xff] %v2448
      %2481 = vst [vmem:[%s233 + $0xd8] sm:$0xff] %v2449
      %2482 = vst [vmem:[%s233 + $0xe0] sm:$0xff] %v2450
      %2483 = vst [vmem:[%s233 + $0xe8] sm:$0xff] %v2451
      %2484 = vst [vmem:[%s233 + $0xf0] sm:$0xff] %v2452
      %2485 = vst [vmem:[%s233 + $0xf8] sm:$0xff] %v2453
      %v2486 = vadd.f32 %v2422, %v2423
      %v2487 = vadd.f32 %v2486, %v2424
      %v2488 = vadd.f32 %v2487, %v2425
      %v2489 = vadd.f32 %v2488, %v2426
      %v2490 = vadd.f32 %v2489, %v2427
      %v2491 = vadd.f32 %v2490, %v2428
      %v2492 = vadd.f32 %v2491, %v2429
      %v2493 = vadd.f32 %v2492, %v2430
      %v2494 = vadd.f32 %v2493, %v2431
      %v2495 = vadd.f32 %v2494, %v2432
      %v2496 = vadd.f32 %v2495, %v2433
      %v2497 = vadd.f32 %v2496, %v2434
      %v2498 = vadd.f32 %v2497, %v2435
      %v2499 = vadd.f32 %v2498, %v2436
      %v2500 = vadd.f32 %v2499, %v2437
      %v2501 = vadd.f32 %v2500, %v2438
      %v2502 = vadd.f32 %v2501, %v2439
      %v2503 = vadd.f32 %v2502, %v2440
      %v2504 = vadd.f32 %v2503, %v2441
      %v2505 = vadd.f32 %v2504, %v2442
      %v2506 = vadd.f32 %v2505, %v2443
      %v2507 = vadd.f32 %v2506, %v2444
      %v2508 = vadd.f32 %v2507, %v2445
      %v2509 = vadd.f32 %v2508, %v2446
      %v2510 = vadd.f32 %v2509, %v2447
      %v2511 = vadd.f32 %v2510, %v2448
      %v2512 = vadd.f32 %v2511, %v2449
      %v2513 = vadd.f32 %v2512, %v2450
      %v2514 = vadd.f32 %v2513, %v2451
      %v2515 = vadd.f32 %v2514, %v2452
      %v2516 = vadd.f32 %v2515, %v2453
      %v2517 = vrot.slane %v2516, 4
      %v2518 = vadd.f32 %v2516, %v2517
      %v2519 = vrot.slane %v2518, 2
      %v2520 = vadd.f32 %v2518, %v2519
      %v2521 = vrot.slane %v2520, 1
      %v2522 = vadd.f32 %v2520, %v2521
      %v2523 = vlaneseq
      %v2524 = vshrl.u32 %v2523, 7
      %vm2525 = vcmp.eq.s32.totalorder %v2524, 0
      %v2526 = vsel %vm2525, 1, 0
      %vm2527 = vcmp.eq.s32.totalorder %v2526, 1
      %v2528 = vsel %vm2527, %v2522, 0.0
      %2529 = vst [vmem:[%s241] sm:$0xff] %v2528
      %s2530 = smul.u32 16, %s21
      %p2531 = scmp.lt.s32.totalorder %s20, 1
      %s2532 = scalar_select %p2531, %s20, 1
      %p2533 = scmp.lt.s32.totalorder %s2530, 15
      %s2534 = scalar_select %p2533, %s2530, 15
      %s2535 = smul.addr %s2534, 2
      %s2536 = smul.addr %s2532, 32
      %s2537 = sadd.s32 %s2535, %s2536
      %s2538 = smul.addr %s2537, 8
      %s2539 = scalar_lea.vmem %s3, %s2538
      %p2540 = scmp.lt.s32.totalorder %s20, 1
      %s2541 = scalar_select %p2540, %s20, 1
      %p2542 = scmp.lt.s32.totalorder %s21, 0
      %s2543 = scalar_select %p2542, %s21, 0
      %s2544 = sadd.s32 %s2543, %s2541
      %s2545 = smul.addr %s2544, 8
      %s2546 = scalar_lea.vmem %s4, %s2545
      // Predicated region
      $region33: #{fused_mbconv_forward.2} parent=31 // pred_check
        %p2547 = pneg %p116
      $region34: #{fused_mbconv_forward.2} parent=31 // pred_check_branch
        %2549 = sbr.rel (%p2547) target = $region36
      $region35: #{fused_mbconv_forward.2} parent=31 // pred_region
        %s2550 = smul.u32 16, %s21
      $region36: #{fused_mbconv_forward.2} parent=31 // pred_fallthru
        _
      // Predicated region
      $region37: #{fused_mbconv_forward.2} parent=31 // pred_check
        %p2551 = pneg %p144
      $region38: #{fused_mbconv_forward.2} parent=31 // pred_check_branch
        %2553 = sbr.rel (%p2551) target = $region40
      $region39: #{fused_mbconv_forward.2} parent=31 // pred_region
        _
      $region40: #{fused_mbconv_forward.2} parent=31 // pred_fallthru
        _
    $region32: #{fused_mbconv_forward.2} parent=5 // pred_fallthru
      _
    %p2554 = scmp.le.s32.totalorder 2, %s11
    // Predicated region
    $region41: #{fused_mbconv_forward.2} parent=5 // pred_check
      %p2555 = pneg %p2554
    $region42: #{fused_mbconv_forward.2} parent=5 // pred_check_branch
      %2557 = sbr.rel (%p2555) target = $region44
    $region43: #{fused_mbconv_forward.2} parent=5 // pred_region
      %s2558 = ssub.s32 %s11, 2
      // Predicated region
      $region45: #{fused_mbconv_forward.2} parent=43 // pred_check
        %p2559 = pneg %p122
      $region46: #{fused_mbconv_forward.2} parent=43 // pred_check_branch
        %2561 = sbr.rel (%p2559) target = $region48
      $region47: #{fused_mbconv_forward.2} parent=43 // pred_region
        %s2562 = smul.u32 16, %s23
        %p2563 = scmp.lt.s32.totalorder %s22, 1
        %s2564 = scalar_select %p2563, %s22, 1
        %p2565 = scmp.lt.s32.totalorder %s2562, 15
        %s2566 = scalar_select %p2565, %s2562, 15
        %s2567 = smul.addr %s2566, 2
        %s2568 = smul.addr %s2564, 32
        %s2569 = sadd.s32 %s2567, %s2568
        %s2570 = smul.addr %s2569, 8
        %s2571 = scalar_lea.vmem %s3, %s2570
      $region48: #{fused_mbconv_forward.2} parent=43 // pred_fallthru
        _
      // Predicated region
      $region49: #{fused_mbconv_forward.2} parent=43 // pred_check
        %p2572 = pneg %p150
      $region50: #{fused_mbconv_forward.2} parent=43 // pred_check_branch
        %2574 = sbr.rel (%p2572) target = $region52
      $region51: #{fused_mbconv_forward.2} parent=43 // pred_region
        %p2575 = scmp.lt.s32.totalorder %s22, 1
        %s2576 = scalar_select %p2575, %s22, 1
        %p2577 = scmp.lt.s32.totalorder %s23, 0
        %s2578 = scalar_select %p2577, %s23, 0
        %s2579 = sadd.s32 %s2578, %s2576
        %s2580 = smul.addr %s2579, 8
        %s2581 = scalar_lea.vmem %s4, %s2580
      $region52: #{fused_mbconv_forward.2} parent=43 // pred_fallthru
        _
    $region44: #{fused_mbconv_forward.2} parent=5 // pred_fallthru
      _
  $region6: #{fused_mbconv_forward.2} parent=0 // loop_footer
    %s15 = sadd.s32 1, %s11
  $region7: #{fused_mbconv_forward.2} parent=0 // loop_footer_branch
    %10 = sbr.rel target = $region3
  $region8: #{fused_mbconv_forward.2} parent=0 // loop_exit
    _

</llo_original>
